<compile_context>
chip_gen: v6e
topology: v6e:2x2x1
jax: 0.10.0
libtpu: 0.0.40
codegen_flags: <defaults>
</compile_context>

<pallas_src>
import numpy as np
import jax
import jax.numpy as jnp
from jax.experimental import pallas as pl
from jax.experimental.pallas import tpu as pltpu


# ---------------------------------------------------------------------------
# Fused kernel: whole forward pass for one image per grid step
# ---------------------------------------------------------------------------
def convnet_kernel(x_ref, w1_ref, b1_ref, w2_ref, b2_ref,
                   hsel1_ref, wsel1_ref, hsel2_ref, wsel2_ref,
                   wf1_ref, bf1_ref, wf2_ref, bf2_ref,
                   o_ref, a1_scr, a2_scr, flat_scr):
    f32 = jnp.float32

    def mm(a, b):
        return jnp.dot(a, b, preferred_element_type=f32)

    # ---- conv1 (5x5 VALID, 1 -> 10):  y1[h, w*10 + c], h, w in 0..23 -------------
    # Five banded matmuls, one per kernel row kh, each on a [24, 28] input slab.
    y1 = mm(x_ref[pl.ds(0, 24), :], w1_ref[0])
    for kh in range(1, 5):
        y1 = y1 + mm(x_ref[pl.ds(kh, 24), :], w1_ref[kh])            # [24, 240]

    # ---- maxpool 2x2/2 + bias + relu (selection matmuls on the MXU) --------------
    u0 = mm(hsel1_ref[0], y1)                                        # rows 2*i   -> [12, 240]
    u1 = mm(hsel1_ref[1], y1)                                        # rows 2*i+1 -> [12, 240]
    p1 = jnp.maximum(jnp.maximum(mm(u0, wsel1_ref[0]), mm(u0, wsel1_ref[1])),
                     jnp.maximum(mm(u1, wsel1_ref[0]), mm(u1, wsel1_ref[1])))
    a1_scr[...] = jnp.maximum(p1 + b1_ref[...], 0.0)                 # [12, 120]

    # ---- conv2 (5x5 VALID, 10 -> 20):  y2[h, w*20 + c], h, w in 0..7 -------------
    y2 = mm(a1_scr[pl.ds(0, 8), :], w2_ref[0])
    for kh in range(1, 5):
        y2 = y2 + mm(a1_scr[pl.ds(kh, 8), :], w2_ref[kh])            # [8, 160]

    # ---- maxpool 2x2/2 + bias + relu ---------------------------------------------
    v0 = mm(hsel2_ref[0], y2)                                        # [4, 160]
    v1 = mm(hsel2_ref[1], y2)
    p2 = jnp.maximum(jnp.maximum(mm(v0, wsel2_ref[0]), mm(v0, wsel2_ref[1])),
                     jnp.maximum(mm(v1, wsel2_ref[0]), mm(v1, wsel2_ref[1])))
    a2_scr[...] = jnp.maximum(p2 + b2_ref[...], 0.0)                 # [4, 80]

    # ---- flatten to [1, 320] (PyTorch (C,H,W) view order folded into wf1) --------
    for r in range(4):
        flat_scr[:, pl.ds(80 * r, 80)] = a2_scr[pl.ds(r, 1), :]
    xf = flat_scr[...]                                               # [1, 320]

    # ---- fc1 + relu, fc2, log_softmax (padded to 128 lanes, stored lane-dense) ---
    h = jnp.maximum(mm(xf, wf1_ref[...]) + bf1_ref[...], 0.0)        # [1, 128]
    logits = mm(h, wf2_ref[...]) + bf2_ref[...]                      # [1, 128]
    m = jnp.max(logits, axis=1, keepdims=True)
    lse = jnp.log(jnp.sum(jnp.exp(logits - m), axis=1, keepdims=True))
    o_ref[...] = logits - m - lse


def _const_spec(shape):
    # Whole array resident in VMEM; same block every grid step (no re-copy).
    return pl.BlockSpec(shape, lambda *_: (0,) * len(shape))


def convnet_pallas(x2d, kp):
    B = x2d.shape[0]
    grid_spec = pltpu.PrefetchScalarGridSpec(
        num_scalar_prefetch=0,
        grid=(B,),
        in_specs=[
            pl.BlockSpec((None, 28, 28), lambda i: (i, 0, 0)),   # one image per step
            _const_spec((5, 28, 240)),    # conv1 banded weights
            _const_spec((1, 120)),        # conv1 bias (tiled over w)
            _const_spec((5, 120, 160)),   # conv2 banded weights
            _const_spec((1, 80)),         # conv2 bias (tiled over w)
            _const_spec((2, 12, 24)),     # pool1 row selectors
            _const_spec((2, 240, 120)),   # pool1 lane selectors
            _const_spec((2, 4, 8)),       # pool2 row selectors
            _const_spec((2, 160, 80)),    # pool2 lane selectors
            _const_spec((320, 128)),      # fc1 weight (row-permuted, padded)
            _const_spec((1, 128)),        # fc1 bias (padded)
            _const_spec((128, 128)),      # fc2 weight (padded)
            _const_spec((1, 128)),        # fc2 bias (-1e30 on padded logits)
        ],
        out_specs=pl.BlockSpec((None, 1, 128), lambda i: (i, 0, 0)),
        scratch_shapes=[pltpu.VMEM((12, 120), jnp.float32),
                        pltpu.VMEM((4, 80), jnp.float32),
                        pltpu.VMEM((1, 320), jnp.float32)],
    )
    return pl.pallas_call(
        convnet_kernel,
        out_shape=jax.ShapeDtypeStruct((B, 1, 128), jnp.float32),
        grid_spec=grid_spec,
        compiler_params=pltpu.CompilerParams(
            dimension_semantics=("parallel",)),
    )(x2d, kp["w1b"], kp["b1w"], kp["w2b"], kp["b2w"],
      kp["hsel1"], kp["wsel1"], kp["hsel2"], kp["wsel2"],
      kp["wf1"], kp["bf1"], kp["wf2"], kp["bf2"])


@jax.jit
def convnet_forward(x_nchw, kernel_params):
    x2d = x_nchw[:, 0, :, :].astype(jnp.float32)                     # [B, 28, 28]
    out = convnet_pallas(x2d, kernel_params)                         # [B, 1, 128]
    return out[:, 0, :10]                                            # [B, 10]


# ---------------------------------------------------------------------------
# Parameter packing: PyTorch-layout params -> constant matrices for the kernel
# ---------------------------------------------------------------------------
def pack_params(tp):
    w1 = np.asarray(tp["conv1_w"], np.float32)    # [10, 1, 5, 5]  (O, I, KH, KW)
    b1 = np.asarray(tp["conv1_b"], np.float32)    # [10]
    w2 = np.asarray(tp["conv2_w"], np.float32)    # [20, 10, 5, 5]
    b2 = np.asarray(tp["conv2_b"], np.float32)    # [20]
    f1w = np.asarray(tp["fc1_w"], np.float32)     # [50, 320]
    f1b = np.asarray(tp["fc1_b"], np.float32)     # [50]
    f2w = np.asarray(tp["fc2_w"], np.float32)     # [10, 50]
    f2b = np.asarray(tp["fc2_b"], np.float32)     # [10]

    # conv1 as 5 banded matrices:  y1[h, w*10+c] = sum_kh (x[h+kh, :] @ w1b[kh])
    w1b = np.zeros((5, 28, 240), np.float32)
    for kh in range(5):
        for kw in range(5):
            for w in range(24):
                w1b[kh, w + kw, w * 10:(w + 1) * 10] = w1[:, 0, kh, kw]
    b1w = np.tile(b1, 12).reshape(1, 120)

    # conv2 as 5 banded matrices over pooled conv1 activations (lanes = ow*10 + cin)
    w2b = np.zeros((5, 120, 160), np.float32)
    for kh in range(5):
        for kw in range(5):
            for w in range(8):
                w2b[kh, (w + kw) * 10:(w + kw + 1) * 10,
                    w * 20:(w + 1) * 20] = w2[:, :, kh, kw].T        # [cin, cout]
    b2w = np.tile(b2, 4).reshape(1, 80)

    # 2x2/2 max-pool as selection matmuls: hsel picks even/odd rows,
    # wsel picks even/odd per-channel column groups along the lane dim.
    hsel1 = np.zeros((2, 12, 24), np.float32)
    wsel1 = np.zeros((2, 240, 120), np.float32)
    for d in range(2):
        for i in range(12):
            hsel1[d, i, 2 * i + d] = 1.0
            wsel1[d, (2 * i + d) * 10:(2 * i + d) * 10 + 10,
                  i * 10:i * 10 + 10] = np.eye(10, dtype=np.float32)
    hsel2 = np.zeros((2, 4, 8), np.float32)
    wsel2 = np.zeros((2, 160, 80), np.float32)
    for d in range(2):
        for i in range(4):
            hsel2[d, i, 2 * i + d] = 1.0
            wsel2[d, (2 * i + d) * 20:(2 * i + d) * 20 + 20,
                  i * 20:i * 20 + 20] = np.eye(20, dtype=np.float32)

    # fc1: fold PyTorch's x.view(-1, 320) (C, H, W) order into a row permutation and
    # pad 50 -> 128 output lanes.  Kernel flatten order is g = oh2*80 + ow2*20 + c.
    g = np.arange(320)
    oh2, ow2, c = g // 80, (g % 80) // 20, g % 20
    torch_flat = c * 16 + oh2 * 4 + ow2
    wf1 = np.zeros((320, 128), np.float32)
    wf1[:, :50] = f1w[:, torch_flat].T
    bf1 = np.zeros((1, 128), np.float32)
    bf1[0, :50] = f1b

    # fc2 padded to 128x128; padded logits get -1e30 bias so log_softmax ignores them.
    wf2 = np.zeros((128, 128), np.float32)
    wf2[:50, :10] = f2w.T
    bf2 = np.full((1, 128), -1e30, np.float32)
    bf2[0, :10] = f2b

    arrs = dict(w1b=w1b, b1w=b1w, w2b=w2b, b2w=b2w,
                hsel1=hsel1, wsel1=wsel1, hsel2=hsel2, wsel2=wsel2,
                wf1=wf1, bf1=bf1, wf2=wf2, bf2=bf2)
    return {k: jnp.asarray(v) for k, v in arrs.items()}


# ---------------------------------------------------------------------------
# Deterministic PyTorch-shaped parameter init
# ---------------------------------------------------------------------------
def init_torch_params(key):
    ks = jax.random.split(key, 8)

    def u(k, shape, fan_in):
        bound = fan_in ** -0.5
        return jax.random.uniform(k, shape, jnp.float32, -bound, bound)

    return dict(
        conv1_w=u(ks[0], (10, 1, 5, 5), 25), conv1_b=u(ks[1], (10,), 25),
        conv2_w=u(ks[2], (20, 10, 5, 5), 250), conv2_b=u(ks[3], (20,), 250),
        fc1_w=u(ks[4], (50, 320), 320), fc1_b=u(ks[5], (50,), 320),
        fc2_w=u(ks[6], (10, 50), 50), fc2_b=u(ks[7], (10,), 50),
    )


# ---------------------------------------------------------------------------
# Pure-JAX reference (same math, XLA ops) for validation
# ---------------------------------------------------------------------------
def reference_forward(x_nchw, tp):
    x = x_nchw.astype(jnp.float32)

    def conv(z, w, b):
        y = jax.lax.conv_general_dilated(
            z, w, window_strides=(1, 1), padding="VALID",
            dimension_numbers=("NCHW", "OIHW", "NCHW"))
        return y + b.reshape(1, -1, 1, 1)

    def pool(z):
        return jax.lax.reduce_window(z, -jnp.inf, jax.lax.max,
                                     (1, 1, 2, 2), (1, 1, 2, 2), "VALID")

    x = jnp.maximum(pool(conv(x, tp["conv1_w"], tp["conv1_b"])), 0.0)
    x = jnp.maximum(pool(conv(x, tp["conv2_w"], tp["conv2_b"])), 0.0)
    x = x.reshape(x.shape[0], 320)                                   # PyTorch view order
    h = jnp.maximum(x @ tp["fc1_w"].T + tp["fc1_b"], 0.0)
    logits = h @ tp["fc2_w"].T + tp["fc2_b"]
    return jax.nn.log_softmax(logits, axis=1)


if __name__ == "__main__":
    key = jax.random.PRNGKey(0)
    pkey, xkey = jax.random.split(key)
    torch_params = init_torch_params(pkey)
    kernel_params = pack_params(torch_params)
    # conv1(5x5) -> pool2 -> conv2(5x5) -> pool2 must flatten to 320 => input is 28x28x1
    x = jax.random.normal(xkey, (2, 1, 28, 28), jnp.float32)

    out = jax.block_until_ready(convnet_forward(x, kernel_params))
    assert out.shape == (2, 10), out.shape

    ref = reference_forward(x, torch_params)
    if not bool(jnp.allclose(out, ref, atol=1e-4, rtol=1e-4)):
        err = float(jnp.max(jnp.abs(out - ref)))
        raise AssertionError(
            f"Pallas ConvNet output does not match JAX reference (max abs err {err})")

    print("KERNEL_OK")
</pallas_src>

<mosaic_0001>
module attributes {stable_mosaic.version = 11 : i64} {
  func.func @convnet_kernel(%arg0: i32, %arg1: memref<1x28x28xf32, #tpu.memory_space<vmem>>, %arg2: memref<5x28x240xf32, #tpu.memory_space<vmem>>, %arg3: memref<1x120xf32, #tpu.memory_space<vmem>>, %arg4: memref<5x120x160xf32, #tpu.memory_space<vmem>>, %arg5: memref<1x80xf32, #tpu.memory_space<vmem>>, %arg6: memref<2x12x24xf32, #tpu.memory_space<vmem>>, %arg7: memref<2x240x120xf32, #tpu.memory_space<vmem>>, %arg8: memref<2x4x8xf32, #tpu.memory_space<vmem>>, %arg9: memref<2x160x80xf32, #tpu.memory_space<vmem>>, %arg10: memref<320x128xf32, #tpu.memory_space<vmem>>, %arg11: memref<1x128xf32, #tpu.memory_space<vmem>>, %arg12: memref<128x128xf32, #tpu.memory_space<vmem>>, %arg13: memref<1x128xf32, #tpu.memory_space<vmem>>, %arg14: memref<1x1x128xf32, #tpu.memory_space<vmem>>, %arg15: memref<12x120xf32, #tpu.memory_space<vmem>>, %arg16: memref<4x80xf32, #tpu.memory_space<vmem>>, %arg17: memref<1x320xf32, #tpu.memory_space<vmem>>) attributes {dimension_semantics = [#tpu.dimension_semantics<parallel>], iteration_bounds = array<i64: 2>, scalar_prefetch = 0 : i64, scratch_operands = 3 : i64, tpu.core_type = #tpu.core_type<tc>, window_params = [{transform_indices = @transform_0, window_bounds = array<i64: 1, 28, 28>}, {pipeline_mode = #tpu.pipeline_mode<synchronous>, transform_indices = @transform_1, window_bounds = array<i64: 5, 28, 240>}, {pipeline_mode = #tpu.pipeline_mode<synchronous>, transform_indices = @transform_2, window_bounds = array<i64: 1, 120>}, {pipeline_mode = #tpu.pipeline_mode<synchronous>, transform_indices = @transform_3, window_bounds = array<i64: 5, 120, 160>}, {pipeline_mode = #tpu.pipeline_mode<synchronous>, transform_indices = @transform_4, window_bounds = array<i64: 1, 80>}, {pipeline_mode = #tpu.pipeline_mode<synchronous>, transform_indices = @transform_5, window_bounds = array<i64: 2, 12, 24>}, {pipeline_mode = #tpu.pipeline_mode<synchronous>, transform_indices = @transform_6, window_bounds = array<i64: 2, 240, 120>}, {pipeline_mode = #tpu.pipeline_mode<synchronous>, transform_indices = @transform_7, window_bounds = array<i64: 2, 4, 8>}, {pipeline_mode = #tpu.pipeline_mode<synchronous>, transform_indices = @transform_8, window_bounds = array<i64: 2, 160, 80>}, {pipeline_mode = #tpu.pipeline_mode<synchronous>, transform_indices = @transform_9, window_bounds = array<i64: 320, 128>}, {pipeline_mode = #tpu.pipeline_mode<synchronous>, transform_indices = @transform_10, window_bounds = array<i64: 1, 128>}, {pipeline_mode = #tpu.pipeline_mode<synchronous>, transform_indices = @transform_11, window_bounds = array<i64: 128, 128>}, {pipeline_mode = #tpu.pipeline_mode<synchronous>, transform_indices = @transform_12, window_bounds = array<i64: 1, 128>}, {transform_indices = @transform_13, window_bounds = array<i64: 1, 1, 128>}]} {
    %c0 = arith.constant 0 : index
    %c0_0 = arith.constant 0 : index
    %c0_1 = arith.constant 0 : index
    %0 = vector.load %arg1[%c0, %c0_0, %c0_1] : memref<1x28x28xf32, #tpu.memory_space<vmem>>, vector<1x24x28xf32>
    %1 = vector.shape_cast %0 : vector<1x24x28xf32> to vector<24x28xf32>
    %c0_2 = arith.constant 0 : index
    %c0_3 = arith.constant 0 : index
    %c0_4 = arith.constant 0 : index
    %2 = vector.load %arg2[%c0_2, %c0_3, %c0_4] : memref<5x28x240xf32, #tpu.memory_space<vmem>>, vector<1x28x240xf32>
    %3 = vector.shape_cast %2 : vector<1x28x240xf32> to vector<28x240xf32>
    %cst = arith.constant dense<0.000000e+00> : vector<24x240xf32>
    %4 = tpu.matmul %1, %3, %cst {dimension_numbers = #tpu.dot_dimension_numbers<[1], [0], [0], [1], [0, 0, 1, 1], [], []>} : vector<24x28xf32>, vector<28x240xf32>, vector<24x240xf32> -> vector<24x240xf32>
    %c0_5 = arith.constant 0 : index
    %c1 = arith.constant 1 : index
    %c0_6 = arith.constant 0 : index
    %5 = vector.load %arg1[%c0_5, %c1, %c0_6] : memref<1x28x28xf32, #tpu.memory_space<vmem>>, vector<1x24x28xf32>
    %6 = vector.shape_cast %5 : vector<1x24x28xf32> to vector<24x28xf32>
    %c1_7 = arith.constant 1 : index
    %c0_8 = arith.constant 0 : index
    %c0_9 = arith.constant 0 : index
    %7 = vector.load %arg2[%c1_7, %c0_8, %c0_9] : memref<5x28x240xf32, #tpu.memory_space<vmem>>, vector<1x28x240xf32>
    %8 = vector.shape_cast %7 : vector<1x28x240xf32> to vector<28x240xf32>
    %cst_10 = arith.constant dense<0.000000e+00> : vector<24x240xf32>
    %9 = tpu.matmul %6, %8, %cst_10 {dimension_numbers = #tpu.dot_dimension_numbers<[1], [0], [0], [1], [0, 0, 1, 1], [], []>} : vector<24x28xf32>, vector<28x240xf32>, vector<24x240xf32> -> vector<24x240xf32>
    %10 = arith.addf %4, %9 : vector<24x240xf32>
    %c0_11 = arith.constant 0 : index
    %c2 = arith.constant 2 : index
    %c0_12 = arith.constant 0 : index
    %11 = vector.load %arg1[%c0_11, %c2, %c0_12] : memref<1x28x28xf32, #tpu.memory_space<vmem>>, vector<1x24x28xf32>
    %12 = vector.shape_cast %11 : vector<1x24x28xf32> to vector<24x28xf32>
    %c2_13 = arith.constant 2 : index
    %c0_14 = arith.constant 0 : index
    %c0_15 = arith.constant 0 : index
    %13 = vector.load %arg2[%c2_13, %c0_14, %c0_15] : memref<5x28x240xf32, #tpu.memory_space<vmem>>, vector<1x28x240xf32>
    %14 = vector.shape_cast %13 : vector<1x28x240xf32> to vector<28x240xf32>
    %cst_16 = arith.constant dense<0.000000e+00> : vector<24x240xf32>
    %15 = tpu.matmul %12, %14, %cst_16 {dimension_numbers = #tpu.dot_dimension_numbers<[1], [0], [0], [1], [0, 0, 1, 1], [], []>} : vector<24x28xf32>, vector<28x240xf32>, vector<24x240xf32> -> vector<24x240xf32>
    %16 = arith.addf %10, %15 : vector<24x240xf32>
    %c0_17 = arith.constant 0 : index
    %c3 = arith.constant 3 : index
    %c0_18 = arith.constant 0 : index
    %17 = vector.load %arg1[%c0_17, %c3, %c0_18] : memref<1x28x28xf32, #tpu.memory_space<vmem>>, vector<1x24x28xf32>
    %18 = vector.shape_cast %17 : vector<1x24x28xf32> to vector<24x28xf32>
    %c3_19 = arith.constant 3 : index
    %c0_20 = arith.constant 0 : index
    %c0_21 = arith.constant 0 : index
    %19 = vector.load %arg2[%c3_19, %c0_20, %c0_21] : memref<5x28x240xf32, #tpu.memory_space<vmem>>, vector<1x28x240xf32>
    %20 = vector.shape_cast %19 : vector<1x28x240xf32> to vector<28x240xf32>
    %cst_22 = arith.constant dense<0.000000e+00> : vector<24x240xf32>
    %21 = tpu.matmul %18, %20, %cst_22 {dimension_numbers = #tpu.dot_dimension_numbers<[1], [0], [0], [1], [0, 0, 1, 1], [], []>} : vector<24x28xf32>, vector<28x240xf32>, vector<24x240xf32> -> vector<24x240xf32>
    %22 = arith.addf %16, %21 : vector<24x240xf32>
    %c0_23 = arith.constant 0 : index
    %c4 = arith.constant 4 : index
    %c0_24 = arith.constant 0 : index
    %23 = vector.load %arg1[%c0_23, %c4, %c0_24] : memref<1x28x28xf32, #tpu.memory_space<vmem>>, vector<1x24x28xf32>
    %24 = vector.shape_cast %23 : vector<1x24x28xf32> to vector<24x28xf32>
    %c4_25 = arith.constant 4 : index
    %c0_26 = arith.constant 0 : index
    %c0_27 = arith.constant 0 : index
    %25 = vector.load %arg2[%c4_25, %c0_26, %c0_27] : memref<5x28x240xf32, #tpu.memory_space<vmem>>, vector<1x28x240xf32>
    %26 = vector.shape_cast %25 : vector<1x28x240xf32> to vector<28x240xf32>
    %cst_28 = arith.constant dense<0.000000e+00> : vector<24x240xf32>
    %27 = tpu.matmul %24, %26, %cst_28 {dimension_numbers = #tpu.dot_dimension_numbers<[1], [0], [0], [1], [0, 0, 1, 1], [], []>} : vector<24x28xf32>, vector<28x240xf32>, vector<24x240xf32> -> vector<24x240xf32>
    %28 = arith.addf %22, %27 : vector<24x240xf32>
    %c0_29 = arith.constant 0 : index
    %c0_30 = arith.constant 0 : index
    %c0_31 = arith.constant 0 : index
    %29 = vector.load %arg6[%c0_29, %c0_30, %c0_31] : memref<2x12x24xf32, #tpu.memory_space<vmem>>, vector<1x12x24xf32>
    %30 = vector.shape_cast %29 : vector<1x12x24xf32> to vector<12x24xf32>
    %cst_32 = arith.constant dense<0.000000e+00> : vector<12x240xf32>
    %31 = tpu.matmul %30, %28, %cst_32 {dimension_numbers = #tpu.dot_dimension_numbers<[1], [0], [0], [1], [0, 0, 1, 1], [], []>} : vector<12x24xf32>, vector<24x240xf32>, vector<12x240xf32> -> vector<12x240xf32>
    %c1_33 = arith.constant 1 : index
    %c0_34 = arith.constant 0 : index
    %c0_35 = arith.constant 0 : index
    %32 = vector.load %arg6[%c1_33, %c0_34, %c0_35] : memref<2x12x24xf32, #tpu.memory_space<vmem>>, vector<1x12x24xf32>
    %33 = vector.shape_cast %32 : vector<1x12x24xf32> to vector<12x24xf32>
    %cst_36 = arith.constant dense<0.000000e+00> : vector<12x240xf32>
    %34 = tpu.matmul %33, %28, %cst_36 {dimension_numbers = #tpu.dot_dimension_numbers<[1], [0], [0], [1], [0, 0, 1, 1], [], []>} : vector<12x24xf32>, vector<24x240xf32>, vector<12x240xf32> -> vector<12x240xf32>
    %c0_37 = arith.constant 0 : index
    %c0_38 = arith.constant 0 : index
    %c0_39 = arith.constant 0 : index
    %35 = vector.load %arg7[%c0_37, %c0_38, %c0_39] : memref<2x240x120xf32, #tpu.memory_space<vmem>>, vector<1x240x120xf32>
    %36 = vector.shape_cast %35 : vector<1x240x120xf32> to vector<240x120xf32>
    %cst_40 = arith.constant dense<0.000000e+00> : vector<12x120xf32>
    %37 = tpu.matmul %31, %36, %cst_40 {dimension_numbers = #tpu.dot_dimension_numbers<[1], [0], [0], [1], [0, 0, 1, 1], [], []>} : vector<12x240xf32>, vector<240x120xf32>, vector<12x120xf32> -> vector<12x120xf32>
    %c1_41 = arith.constant 1 : index
    %c0_42 = arith.constant 0 : index
    %c0_43 = arith.constant 0 : index
    %38 = vector.load %arg7[%c1_41, %c0_42, %c0_43] : memref<2x240x120xf32, #tpu.memory_space<vmem>>, vector<1x240x120xf32>
    %39 = vector.shape_cast %38 : vector<1x240x120xf32> to vector<240x120xf32>
    %cst_44 = arith.constant dense<0.000000e+00> : vector<12x120xf32>
    %40 = tpu.matmul %31, %39, %cst_44 {dimension_numbers = #tpu.dot_dimension_numbers<[1], [0], [0], [1], [0, 0, 1, 1], [], []>} : vector<12x240xf32>, vector<240x120xf32>, vector<12x120xf32> -> vector<12x120xf32>
    %41 = arith.maximumf %37, %40 : vector<12x120xf32>
    %c0_45 = arith.constant 0 : index
    %c0_46 = arith.constant 0 : index
    %c0_47 = arith.constant 0 : index
    %42 = vector.load %arg7[%c0_45, %c0_46, %c0_47] : memref<2x240x120xf32, #tpu.memory_space<vmem>>, vector<1x240x120xf32>
    %43 = vector.shape_cast %42 : vector<1x240x120xf32> to vector<240x120xf32>
    %cst_48 = arith.constant dense<0.000000e+00> : vector<12x120xf32>
    %44 = tpu.matmul %34, %43, %cst_48 {dimension_numbers = #tpu.dot_dimension_numbers<[1], [0], [0], [1], [0, 0, 1, 1], [], []>} : vector<12x240xf32>, vector<240x120xf32>, vector<12x120xf32> -> vector<12x120xf32>
    %c1_49 = arith.constant 1 : index
    %c0_50 = arith.constant 0 : index
    %c0_51 = arith.constant 0 : index
    %45 = vector.load %arg7[%c1_49, %c0_50, %c0_51] : memref<2x240x120xf32, #tpu.memory_space<vmem>>, vector<1x240x120xf32>
    %46 = vector.shape_cast %45 : vector<1x240x120xf32> to vector<240x120xf32>
    %cst_52 = arith.constant dense<0.000000e+00> : vector<12x120xf32>
    %47 = tpu.matmul %34, %46, %cst_52 {dimension_numbers = #tpu.dot_dimension_numbers<[1], [0], [0], [1], [0, 0, 1, 1], [], []>} : vector<12x240xf32>, vector<240x120xf32>, vector<12x120xf32> -> vector<12x120xf32>
    %48 = arith.maximumf %44, %47 : vector<12x120xf32>
    %49 = arith.maximumf %41, %48 : vector<12x120xf32>
    %c0_53 = arith.constant 0 : index
    %c0_54 = arith.constant 0 : index
    %50 = vector.load %arg3[%c0_53, %c0_54] : memref<1x120xf32, #tpu.memory_space<vmem>>, vector<1x120xf32>
    %51 = vector.broadcast %50 : vector<1x120xf32> to vector<12x120xf32>
    %52 = arith.addf %49, %51 : vector<12x120xf32>
    %cst_55 = arith.constant 0.000000e+00 : f32
    %53 = vector.broadcast %cst_55 : f32 to vector<12x120xf32>
    %54 = arith.maximumf %52, %53 : vector<12x120xf32>
    %c0_56 = arith.constant 0 : index
    %c0_57 = arith.constant 0 : index
    %55 = vector.load %arg15[%c0_56, %c0_57] : memref<12x120xf32, #tpu.memory_space<vmem>>, vector<12x120xf32>
    tpu.vector_store %arg15[%c0_56, %c0_57], %54 {strides = array<i32>} : memref<12x120xf32, #tpu.memory_space<vmem>>, vector<12x120xf32>,
    %c0_58 = arith.constant 0 : index
    %c0_59 = arith.constant 0 : index
    %56 = vector.load %arg15[%c0_58, %c0_59] : memref<12x120xf32, #tpu.memory_space<vmem>>, vector<8x120xf32>
    %c0_60 = arith.constant 0 : index
    %c0_61 = arith.constant 0 : index
    %c0_62 = arith.constant 0 : index
    %57 = vector.load %arg4[%c0_60, %c0_61, %c0_62] : memref<5x120x160xf32, #tpu.memory_space<vmem>>, vector<1x120x160xf32>
    %58 = vector.shape_cast %57 : vector<1x120x160xf32> to vector<120x160xf32>
    %cst_63 = arith.constant dense<0.000000e+00> : vector<8x160xf32>
    %59 = tpu.matmul %56, %58, %cst_63 {dimension_numbers = #tpu.dot_dimension_numbers<[1], [0], [0], [1], [0, 0, 1, 1], [], []>} : vector<8x120xf32>, vector<120x160xf32>, vector<8x160xf32> -> vector<8x160xf32>
    %c1_64 = arith.constant 1 : index
    %c0_65 = arith.constant 0 : index
    %60 = vector.load %arg15[%c1_64, %c0_65] : memref<12x120xf32, #tpu.memory_space<vmem>>, vector<8x120xf32>
    %c1_66 = arith.constant 1 : index
    %c0_67 = arith.constant 0 : index
    %c0_68 = arith.constant 0 : index
    %61 = vector.load %arg4[%c1_66, %c0_67, %c0_68] : memref<5x120x160xf32, #tpu.memory_space<vmem>>, vector<1x120x160xf32>
    %62 = vector.shape_cast %61 : vector<1x120x160xf32> to vector<120x160xf32>
    %cst_69 = arith.constant dense<0.000000e+00> : vector<8x160xf32>
    %63 = tpu.matmul %60, %62, %cst_69 {dimension_numbers = #tpu.dot_dimension_numbers<[1], [0], [0], [1], [0, 0, 1, 1], [], []>} : vector<8x120xf32>, vector<120x160xf32>, vector<8x160xf32> -> vector<8x160xf32>
    %64 = arith.addf %59, %63 : vector<8x160xf32>
    %c2_70 = arith.constant 2 : index
    %c0_71 = arith.constant 0 : index
    %65 = vector.load %arg15[%c2_70, %c0_71] : memref<12x120xf32, #tpu.memory_space<vmem>>, vector<8x120xf32>
    %c2_72 = arith.constant 2 : index
    %c0_73 = arith.constant 0 : index
    %c0_74 = arith.constant 0 : index
    %66 = vector.load %arg4[%c2_72, %c0_73, %c0_74] : memref<5x120x160xf32, #tpu.memory_space<vmem>>, vector<1x120x160xf32>
    %67 = vector.shape_cast %66 : vector<1x120x160xf32> to vector<120x160xf32>
    %cst_75 = arith.constant dense<0.000000e+00> : vector<8x160xf32>
    %68 = tpu.matmul %65, %67, %cst_75 {dimension_numbers = #tpu.dot_dimension_numbers<[1], [0], [0], [1], [0, 0, 1, 1], [], []>} : vector<8x120xf32>, vector<120x160xf32>, vector<8x160xf32> -> vector<8x160xf32>
    %69 = arith.addf %64, %68 : vector<8x160xf32>
    %c3_76 = arith.constant 3 : index
    %c0_77 = arith.constant 0 : index
    %70 = vector.load %arg15[%c3_76, %c0_77] : memref<12x120xf32, #tpu.memory_space<vmem>>, vector<8x120xf32>
    %c3_78 = arith.constant 3 : index
    %c0_79 = arith.constant 0 : index
    %c0_80 = arith.constant 0 : index
    %71 = vector.load %arg4[%c3_78, %c0_79, %c0_80] : memref<5x120x160xf32, #tpu.memory_space<vmem>>, vector<1x120x160xf32>
    %72 = vector.shape_cast %71 : vector<1x120x160xf32> to vector<120x160xf32>
    %cst_81 = arith.constant dense<0.000000e+00> : vector<8x160xf32>
    %73 = tpu.matmul %70, %72, %cst_81 {dimension_numbers = #tpu.dot_dimension_numbers<[1], [0], [0], [1], [0, 0, 1, 1], [], []>} : vector<8x120xf32>, vector<120x160xf32>, vector<8x160xf32> -> vector<8x160xf32>
    %74 = arith.addf %69, %73 : vector<8x160xf32>
    %c4_82 = arith.constant 4 : index
    %c0_83 = arith.constant 0 : index
    %75 = vector.load %arg15[%c4_82, %c0_83] : memref<12x120xf32, #tpu.memory_space<vmem>>, vector<8x120xf32>
    %c4_84 = arith.constant 4 : index
    %c0_85 = arith.constant 0 : index
    %c0_86 = arith.constant 0 : index
    %76 = vector.load %arg4[%c4_84, %c0_85, %c0_86] : memref<5x120x160xf32, #tpu.memory_space<vmem>>, vector<1x120x160xf32>
    %77 = vector.shape_cast %76 : vector<1x120x160xf32> to vector<120x160xf32>
    %cst_87 = arith.constant dense<0.000000e+00> : vector<8x160xf32>
    %78 = tpu.matmul %75, %77, %cst_87 {dimension_numbers = #tpu.dot_dimension_numbers<[1], [0], [0], [1], [0, 0, 1, 1], [], []>} : vector<8x120xf32>, vector<120x160xf32>, vector<8x160xf32> -> vector<8x160xf32>
    %79 = arith.addf %74, %78 : vector<8x160xf32>
    %c0_88 = arith.constant 0 : index
    %c0_89 = arith.constant 0 : index
    %c0_90 = arith.constant 0 : index
    %80 = vector.load %arg8[%c0_88, %c0_89, %c0_90] : memref<2x4x8xf32, #tpu.memory_space<vmem>>, vector<1x4x8xf32>
    %81 = vector.shape_cast %80 : vector<1x4x8xf32> to vector<4x8xf32>
    %cst_91 = arith.constant dense<0.000000e+00> : vector<4x160xf32>
    %82 = tpu.matmul %81, %79, %cst_91 {dimension_numbers = #tpu.dot_dimension_numbers<[1], [0], [0], [1], [0, 0, 1, 1], [], []>} : vector<4x8xf32>, vector<8x160xf32>, vector<4x160xf32> -> vector<4x160xf32>
    %c1_92 = arith.constant 1 : index
    %c0_93 = arith.constant 0 : index
    %c0_94 = arith.constant 0 : index
    %83 = vector.load %arg8[%c1_92, %c0_93, %c0_94] : memref<2x4x8xf32, #tpu.memory_space<vmem>>, vector<1x4x8xf32>
    %84 = vector.shape_cast %83 : vector<1x4x8xf32> to vector<4x8xf32>
    %cst_95 = arith.constant dense<0.000000e+00> : vector<4x160xf32>
    %85 = tpu.matmul %84, %79, %cst_95 {dimension_numbers = #tpu.dot_dimension_numbers<[1], [0], [0], [1], [0, 0, 1, 1], [], []>} : vector<4x8xf32>, vector<8x160xf32>, vector<4x160xf32> -> vector<4x160xf32>
    %c0_96 = arith.constant 0 : index
    %c0_97 = arith.constant 0 : index
    %c0_98 = arith.constant 0 : index
    %86 = vector.load %arg9[%c0_96, %c0_97, %c0_98] : memref<2x160x80xf32, #tpu.memory_space<vmem>>, vector<1x160x80xf32>
    %87 = vector.shape_cast %86 : vector<1x160x80xf32> to vector<160x80xf32>
    %cst_99 = arith.constant dense<0.000000e+00> : vector<4x80xf32>
    %88 = tpu.matmul %82, %87, %cst_99 {dimension_numbers = #tpu.dot_dimension_numbers<[1], [0], [0], [1], [0, 0, 1, 1], [], []>} : vector<4x160xf32>, vector<160x80xf32>, vector<4x80xf32> -> vector<4x80xf32>
    %c1_100 = arith.constant 1 : index
    %c0_101 = arith.constant 0 : index
    %c0_102 = arith.constant 0 : index
    %89 = vector.load %arg9[%c1_100, %c0_101, %c0_102] : memref<2x160x80xf32, #tpu.memory_space<vmem>>, vector<1x160x80xf32>
    %90 = vector.shape_cast %89 : vector<1x160x80xf32> to vector<160x80xf32>
    %cst_103 = arith.constant dense<0.000000e+00> : vector<4x80xf32>
    %91 = tpu.matmul %82, %90, %cst_103 {dimension_numbers = #tpu.dot_dimension_numbers<[1], [0], [0], [1], [0, 0, 1, 1], [], []>} : vector<4x160xf32>, vector<160x80xf32>, vector<4x80xf32> -> vector<4x80xf32>
    %92 = arith.maximumf %88, %91 : vector<4x80xf32>
    %c0_104 = arith.constant 0 : index
    %c0_105 = arith.constant 0 : index
    %c0_106 = arith.constant 0 : index
    %93 = vector.load %arg9[%c0_104, %c0_105, %c0_106] : memref<2x160x80xf32, #tpu.memory_space<vmem>>, vector<1x160x80xf32>
    %94 = vector.shape_cast %93 : vector<1x160x80xf32> to vector<160x80xf32>
    %cst_107 = arith.constant dense<0.000000e+00> : vector<4x80xf32>
    %95 = tpu.matmul %85, %94, %cst_107 {dimension_numbers = #tpu.dot_dimension_numbers<[1], [0], [0], [1], [0, 0, 1, 1], [], []>} : vector<4x160xf32>, vector<160x80xf32>, vector<4x80xf32> -> vector<4x80xf32>
    %c1_108 = arith.constant 1 : index
    %c0_109 = arith.constant 0 : index
    %c0_110 = arith.constant 0 : index
    %96 = vector.load %arg9[%c1_108, %c0_109, %c0_110] : memref<2x160x80xf32, #tpu.memory_space<vmem>>, vector<1x160x80xf32>
    %97 = vector.shape_cast %96 : vector<1x160x80xf32> to vector<160x80xf32>
    %cst_111 = arith.constant dense<0.000000e+00> : vector<4x80xf32>
    %98 = tpu.matmul %85, %97, %cst_111 {dimension_numbers = #tpu.dot_dimension_numbers<[1], [0], [0], [1], [0, 0, 1, 1], [], []>} : vector<4x160xf32>, vector<160x80xf32>, vector<4x80xf32> -> vector<4x80xf32>
    %99 = arith.maximumf %95, %98 : vector<4x80xf32>
    %100 = arith.maximumf %92, %99 : vector<4x80xf32>
    %c0_112 = arith.constant 0 : index
    %c0_113 = arith.constant 0 : index
    %101 = vector.load %arg5[%c0_112, %c0_113] : memref<1x80xf32, #tpu.memory_space<vmem>>, vector<1x80xf32>
    %102 = vector.broadcast %101 : vector<1x80xf32> to vector<4x80xf32>
    %103 = arith.addf %100, %102 : vector<4x80xf32>
    %cst_114 = arith.constant 0.000000e+00 : f32
    %104 = vector.broadcast %cst_114 : f32 to vector<4x80xf32>
    %105 = arith.maximumf %103, %104 : vector<4x80xf32>
    %c0_115 = arith.constant 0 : index
    %c0_116 = arith.constant 0 : index
    %106 = vector.load %arg16[%c0_115, %c0_116] : memref<4x80xf32, #tpu.memory_space<vmem>>, vector<4x80xf32>
    tpu.vector_store %arg16[%c0_115, %c0_116], %105 {strides = array<i32>} : memref<4x80xf32, #tpu.memory_space<vmem>>, vector<4x80xf32>,
    %c0_117 = arith.constant 0 : index
    %c0_118 = arith.constant 0 : index
    %107 = vector.load %arg16[%c0_117, %c0_118] : memref<4x80xf32, #tpu.memory_space<vmem>>, vector<1x80xf32>
    %c0_119 = arith.constant 0 : index
    %c0_120 = arith.constant 0 : index
    %108 = vector.load %arg17[%c0_119, %c0_120] : memref<1x320xf32, #tpu.memory_space<vmem>>, vector<1x80xf32>
    tpu.vector_store %arg17[%c0_119, %c0_120], %107 {strides = array<i32>} : memref<1x320xf32, #tpu.memory_space<vmem>>, vector<1x80xf32>,
    %c1_121 = arith.constant 1 : index
    %c0_122 = arith.constant 0 : index
    %109 = vector.load %arg16[%c1_121, %c0_122] : memref<4x80xf32, #tpu.memory_space<vmem>>, vector<1x80xf32>
    %c0_123 = arith.constant 0 : index
    %c80 = arith.constant 80 : index
    %110 = vector.load %arg17[%c0_123, %c80] : memref<1x320xf32, #tpu.memory_space<vmem>>, vector<1x80xf32>
    tpu.vector_store %arg17[%c0_123, %c80], %109 {strides = array<i32>} : memref<1x320xf32, #tpu.memory_space<vmem>>, vector<1x80xf32>,
    %c2_124 = arith.constant 2 : index
    %c0_125 = arith.constant 0 : index
    %111 = vector.load %arg16[%c2_124, %c0_125] : memref<4x80xf32, #tpu.memory_space<vmem>>, vector<1x80xf32>
    %c0_126 = arith.constant 0 : index
    %c160 = arith.constant 160 : index
    %112 = vector.load %arg17[%c0_126, %c160] : memref<1x320xf32, #tpu.memory_space<vmem>>, vector<1x80xf32>
    tpu.vector_store %arg17[%c0_126, %c160], %111 {strides = array<i32>} : memref<1x320xf32, #tpu.memory_space<vmem>>, vector<1x80xf32>,
    %c3_127 = arith.constant 3 : index
    %c0_128 = arith.constant 0 : index
    %113 = vector.load %arg16[%c3_127, %c0_128] : memref<4x80xf32, #tpu.memory_space<vmem>>, vector<1x80xf32>
    %c0_129 = arith.constant 0 : index
    %c240 = arith.constant 240 : index
    %114 = vector.load %arg17[%c0_129, %c240] : memref<1x320xf32, #tpu.memory_space<vmem>>, vector<1x80xf32>
    tpu.vector_store %arg17[%c0_129, %c240], %113 {strides = array<i32>} : memref<1x320xf32, #tpu.memory_space<vmem>>, vector<1x80xf32>,
    %c0_130 = arith.constant 0 : index
    %c0_131 = arith.constant 0 : index
    %115 = vector.load %arg17[%c0_130, %c0_131] : memref<1x320xf32, #tpu.memory_space<vmem>>, vector<1x320xf32>
    %c0_132 = arith.constant 0 : index
    %c0_133 = arith.constant 0 : index
    %116 = vector.load %arg10[%c0_132, %c0_133] : memref<320x128xf32, #tpu.memory_space<vmem>>, vector<320x128xf32>
    %cst_134 = arith.constant dense<0.000000e+00> : vector<1x128xf32>
    %117 = tpu.matmul %115, %116, %cst_134 {dimension_numbers = #tpu.dot_dimension_numbers<[1], [0], [0], [1], [0, 0, 1, 1], [], []>} : vector<1x320xf32>, vector<320x128xf32>, vector<1x128xf32> -> vector<1x128xf32>
    %c0_135 = arith.constant 0 : index
    %c0_136 = arith.constant 0 : index
    %118 = vector.load %arg11[%c0_135, %c0_136] : memref<1x128xf32, #tpu.memory_space<vmem>>, vector<1x128xf32>
    %119 = arith.addf %117, %118 : vector<1x128xf32>
    %cst_137 = arith.constant 0.000000e+00 : f32
    %120 = vector.broadcast %cst_137 : f32 to vector<1x128xf32>
    %121 = arith.maximumf %119, %120 : vector<1x128xf32>
    %c0_138 = arith.constant 0 : index
    %c0_139 = arith.constant 0 : index
    %122 = vector.load %arg12[%c0_138, %c0_139] : memref<128x128xf32, #tpu.memory_space<vmem>>, vector<128x128xf32>
    %cst_140 = arith.constant dense<0.000000e+00> : vector<1x128xf32>
    %123 = tpu.matmul %121, %122, %cst_140 {dimension_numbers = #tpu.dot_dimension_numbers<[1], [0], [0], [1], [0, 0, 1, 1], [], []>} : vector<1x128xf32>, vector<128x128xf32>, vector<1x128xf32> -> vector<1x128xf32>
    %c0_141 = arith.constant 0 : index
    %c0_142 = arith.constant 0 : index
    %124 = vector.load %arg13[%c0_141, %c0_142] : memref<1x128xf32, #tpu.memory_space<vmem>>, vector<1x128xf32>
    %125 = arith.addf %123, %124 : vector<1x128xf32>
    %cst_143 = arith.constant dense<0xFF800000> : vector<1xf32>
    %126 = vector.multi_reduction <maximumf>, %125, %cst_143 [1] : vector<1x128xf32> to vector<1xf32>
    %127 = vector.shape_cast %126 : vector<1xf32> to vector<1x1xf32>
    %128 = vector.broadcast %127 : vector<1x1xf32> to vector<1x128xf32>
    %129 = arith.subf %125, %128 : vector<1x128xf32>
    %130 = math.exp %129 : vector<1x128xf32>
    %cst_144 = arith.constant dense<0.000000e+00> : vector<1xf32>
    %131 = vector.multi_reduction <add>, %130, %cst_144 [1] : vector<1x128xf32> to vector<1xf32>
    %132 = vector.shape_cast %131 : vector<1xf32> to vector<1x1xf32>
    %133 = math.log %132 : vector<1x1xf32>
    %134 = vector.broadcast %127 : vector<1x1xf32> to vector<1x128xf32>
    %135 = arith.subf %125, %134 : vector<1x128xf32>
    %136 = vector.broadcast %133 : vector<1x1xf32> to vector<1x128xf32>
    %137 = arith.subf %135, %136 : vector<1x128xf32>
    %c0_145 = arith.constant 0 : index
    %c0_146 = arith.constant 0 : index
    %c0_147 = arith.constant 0 : index
    %138 = vector.load %arg14[%c0_145, %c0_146, %c0_147] : memref<1x1x128xf32, #tpu.memory_space<vmem>>, vector<1x1x128xf32>
    %139 = vector.shape_cast %138 : vector<1x1x128xf32> to vector<1x128xf32>
    %140 = vector.shape_cast %137 : vector<1x128xf32> to vector<1x1x128xf32>
    tpu.vector_store %arg14[%c0_145, %c0_146, %c0_147], %140 {strides = array<i32>} : memref<1x1x128xf32, #tpu.memory_space<vmem>>, vector<1x1x128xf32>,
    return
  }
  func.func @transform_0(%arg0: i32) -> (i32, i32, i32) {
    %c0_i32 = arith.constant 0 : i32
    %c0_i32_0 = arith.constant 0 : i32
    %c0_i32_1 = arith.constant 0 : i32
    return %arg0, %c0_i32, %c0_i32_0 : i32, i32, i32
  }
  func.func @transform_1(%arg0: i32) -> (i32, i32, i32) {
    %c0_i32 = arith.constant 0 : i32
    %c0_i32_0 = arith.constant 0 : i32
    %c0_i32_1 = arith.constant 0 : i32
    %c0_i32_2 = arith.constant 0 : i32
    return %c0_i32, %c0_i32_0, %c0_i32_1 : i32, i32, i32
  }
  func.func @transform_2(%arg0: i32) -> (i32, i32) {
    %c0_i32 = arith.constant 0 : i32
    %c0_i32_0 = arith.constant 0 : i32
    %c0_i32_1 = arith.constant 0 : i32
    return %c0_i32, %c0_i32_0 : i32, i32
  }
  func.func @transform_3(%arg0: i32) -> (i32, i32, i32) {
    %c0_i32 = arith.constant 0 : i32
    %c0_i32_0 = arith.constant 0 : i32
    %c0_i32_1 = arith.constant 0 : i32
    %c0_i32_2 = arith.constant 0 : i32
    return %c0_i32, %c0_i32_0, %c0_i32_1 : i32, i32, i32
  }
  func.func @transform_4(%arg0: i32) -> (i32, i32) {
    %c0_i32 = arith.constant 0 : i32
    %c0_i32_0 = arith.constant 0 : i32
    %c0_i32_1 = arith.constant 0 : i32
    return %c0_i32, %c0_i32_0 : i32, i32
  }
  func.func @transform_5(%arg0: i32) -> (i32, i32, i32) {
    %c0_i32 = arith.constant 0 : i32
    %c0_i32_0 = arith.constant 0 : i32
    %c0_i32_1 = arith.constant 0 : i32
    %c0_i32_2 = arith.constant 0 : i32
    return %c0_i32, %c0_i32_0, %c0_i32_1 : i32, i32, i32
  }
  func.func @transform_6(%arg0: i32) -> (i32, i32, i32) {
    %c0_i32 = arith.constant 0 : i32
    %c0_i32_0 = arith.constant 0 : i32
    %c0_i32_1 = arith.constant 0 : i32
    %c0_i32_2 = arith.constant 0 : i32
    return %c0_i32, %c0_i32_0, %c0_i32_1 : i32, i32, i32
  }
  func.func @transform_7(%arg0: i32) -> (i32, i32, i32) {
    %c0_i32 = arith.constant 0 : i32
    %c0_i32_0 = arith.constant 0 : i32
    %c0_i32_1 = arith.constant 0 : i32
    %c0_i32_2 = arith.constant 0 : i32
    return %c0_i32, %c0_i32_0, %c0_i32_1 : i32, i32, i32
  }
  func.func @transform_8(%arg0: i32) -> (i32, i32, i32) {
    %c0_i32 = arith.constant 0 : i32
    %c0_i32_0 = arith.constant 0 : i32
    %c0_i32_1 = arith.constant 0 : i32
    %c0_i32_2 = arith.constant 0 : i32
    return %c0_i32, %c0_i32_0, %c0_i32_1 : i32, i32, i32
  }
  func.func @transform_9(%arg0: i32) -> (i32, i32) {
    %c0_i32 = arith.constant 0 : i32
    %c0_i32_0 = arith.constant 0 : i32
    %c0_i32_1 = arith.constant 0 : i32
    return %c0_i32, %c0_i32_0 : i32, i32
  }
  func.func @transform_10(%arg0: i32) -> (i32, i32) {
    %c0_i32 = arith.constant 0 : i32
    %c0_i32_0 = arith.constant 0 : i32
    %c0_i32_1 = arith.constant 0 : i32
    return %c0_i32, %c0_i32_0 : i32, i32
  }
  func.func @transform_11(%arg0: i32) -> (i32, i32) {
    %c0_i32 = arith.constant 0 : i32
    %c0_i32_0 = arith.constant 0 : i32
    %c0_i32_1 = arith.constant 0 : i32
    return %c0_i32, %c0_i32_0 : i32, i32
  }
  func.func @transform_12(%arg0: i32) -> (i32, i32) {
    %c0_i32 = arith.constant 0 : i32
    %c0_i32_0 = arith.constant 0 : i32
    %c0_i32_1 = arith.constant 0 : i32
    return %c0_i32, %c0_i32_0 : i32, i32
  }
  func.func @transform_13(%arg0: i32) -> (i32, i32, i32) {
    %c0_i32 = arith.constant 0 : i32
    %c0_i32_0 = arith.constant 0 : i32
    %c0_i32_1 = arith.constant 0 : i32
    return %arg0, %c0_i32, %c0_i32_0 : i32, i32, i32
  }
}

</mosaic_0001>

<llo_original>
// kernel: convnet_forward.1
$region0: #{convnet_forward.1}
  #allocation0 [shape = 'u32[]', space=smem, size = 0x4, offset = 0x4, fixed_abs, tag = 'smem constant byte address 0x4 - core index']
  #allocation1 [shape = 'u32[144,128]{1,0:T(1,128)}', space=vmem, size = 0x12000, scoped, tag = 'internal scratch']
  #allocation2 [shape = 'f32[12,120]{1,0:T(8,128)}', space=vmem, size = 0x2000, scoped, tag = 'scratch operand']
  #allocation3 [shape = 'f32[4,80]{1,0:T(4,128)}', space=vmem, size = 0x800, scoped, tag = 'scratch operand']
  #allocation4 [shape = 'f32[1,320]{1,0:T(1,128)}', space=vmem, size = 0x600, scoped, tag = 'scratch operand']
  %s0 = inlined_call_operand.vmem [shape: f32[2,28,28], index: 0, kind: input, shape index: {}]
  %s1 = inlined_call_operand.vmem [shape: f32[5,28,240], index: 1, kind: input, shape index: {}]
  %s2 = inlined_call_operand.vmem [shape: f32[1,120], index: 2, kind: input, shape index: {}]
  %s3 = inlined_call_operand.vmem [shape: f32[5,120,160], index: 3, kind: input, shape index: {}]
  %s4 = inlined_call_operand.vmem [shape: f32[1,80], index: 4, kind: input, shape index: {}]
  %s5 = inlined_call_operand.vmem [shape: f32[2,12,24], index: 5, kind: input, shape index: {}]
  %s6 = inlined_call_operand.vmem [shape: f32[2,240,120], index: 6, kind: input, shape index: {}]
  %s7 = inlined_call_operand.vmem [shape: f32[2,4,8], index: 7, kind: input, shape index: {}]
  %s8 = inlined_call_operand.vmem [shape: f32[2,160,80], index: 8, kind: input, shape index: {}]
  %s9 = inlined_call_operand.vmem [shape: f32[320,128], index: 9, kind: input, shape index: {}]
  %s10 = inlined_call_operand.vmem [shape: f32[1,128], index: 10, kind: input, shape index: {}]
  %s11 = inlined_call_operand.vmem [shape: f32[128,128], index: 11, kind: input, shape index: {}]
  %s12 = inlined_call_operand.vmem [shape: f32[1,128], index: 12, kind: input, shape index: {}]
  %s13 = inlined_call_operand.hbm [shape: f32[2,1,128], index: 13, kind: output, shape index: {}]
  %s14 = sld [smem:[#allocation0]]
  $region85: #{convnet_forward.1} parent=0
    _
  %s16 = ssub.s32 1, %s14
  %s17 = scalar_select 0, %s16, %s14
  $region1: #{convnet_forward.1} parent=0
    #allocation5 [shape = 'u8[1024]{0}', space=vmem, size = 0x400, scoped, tag = 'output window, operand 0']
    #allocation6 [shape = 's32[2]{0}', space=sflag, size = 0x8, scoped, tag = 'scoped memory for convnet_forward.1']
    %18 = vsyncpa [#allocation6], 0
    %s19 = scalar_lea.sflag [#allocation6], 1
    %20 = vsyncpa %s19, 0
    loop: start=0, step=1, limit=4
    $region2: #{convnet_forward.1} parent=1 // loop_pre_header
      _
    $region3: #{convnet_forward.1} parent=1 // loop_header
      %s22 = sphi 0, %s26
      %p23 = scmp.ge.s32.totalorder %s22, 4
      %s32 = sphi 0, %s34
      %s35 = sphi 0, %s32
      %s36 = sphi 0, %s35
      %s52 = sphi 0, %s36
      %s56 = sphi 0, %s56
      %s58 = sphi 0, %s56
      %s59 = sphi 0, %s58
      %s73 = sphi 0, %s59
      %s77 = sphi 0, %s77
      %s79 = sphi 0, %s77
      %s80 = sphi 0, %s79
      %s94 = sphi 0, %s80
      %s98 = sphi 0, %s98
      %s100 = sphi 0, %s98
      %s101 = sphi 0, %s100
      %s115 = sphi 0, %s101
      %s119 = sphi 0, %s119
      %s121 = sphi 0, %s119
      %s122 = sphi 0, %s121
      %s136 = sphi 0, %s122
      %s140 = sphi 0, %s140
      %s142 = sphi 0, %s140
      %s143 = sphi 0, %s142
      %s157 = sphi 0, %s143
      %s161 = sphi 0, %s161
      %s163 = sphi 0, %s161
      %s164 = sphi 0, %s163
      %s178 = sphi 0, %s164
      %s182 = sphi 0, %s182
      %s184 = sphi 0, %s182
      %s185 = sphi 0, %s184
      %s199 = sphi 0, %s185
      %s203 = sphi 0, %s203
      %s205 = sphi 0, %s203
      %s206 = sphi 0, %s205
      %s220 = sphi 0, %s206
      %s224 = sphi 0, %s224
      %s226 = sphi 0, %s224
      %s227 = sphi 0, %s226
      %s241 = sphi 0, %s227
      %s245 = sphi 0, %s245
      %s247 = sphi 0, %s245
      %s248 = sphi 0, %s247
      %s262 = sphi 0, %s248
      %s266 = sphi 0, %s266
      %s268 = sphi 0, %s266
      %s269 = sphi 0, %s268
      %s283 = sphi 0, %s269
      %s287 = sphi 0, %s287
      %s289 = sphi 0, %s287
      %s290 = sphi 0, %s289
      %s304 = sphi 0, %s290
      %s310 = sphi 0, %s312
      %s313 = sphi 0, %s310
      %s314 = sphi 0, %s313
      %s330 = sphi 0, %s314
    $region4: #{convnet_forward.1} parent=1 // loop_header_branch
      %25 = sbr.rel (%p23) target = $region8
    $region5: #{convnet_forward.1} parent=1 // loop_body
      %s27 = ssub.s32 %s22, 1
      %s28 = ssub.s32 %s22, 2
      %s29 = sadd.s32 %s22, 1
      %s30 = ssub.s32 %s22, %s29
      %p31 = scmp.eq.s32.totalorder %s30, 0
      %s33 = sadd.s32 %s32, 1
      %s34 = scalar_select %p31, %s32, %s33
      %p37 = pneg %p31
      %p38 = scmp.eq.s32.totalorder %s22, 1
      %p39 = por %p37, %p38
      %p40 = scmp.ne.s32.totalorder %s32, %s35
      %p41 = scmp.eq.s32.totalorder %s22, 0
      %p42 = por %p40, %p41
      %p43 = scmp.ne.s32.totalorder %s32, %s35
      %p44 = scmp.eq.s32.totalorder %s27, 1
      %p45 = por %p43, %p44
      %p46 = scmp.ne.s32.totalorder %s35, %s36
      %p47 = scmp.eq.s32.totalorder %s27, 0
      %p48 = por %p46, %p47
      %p49 = scmp.ne.s32.totalorder %s35, %s36
      %p50 = scmp.eq.s32.totalorder %s28, 1
      %p51 = por %p49, %p50
      %p53 = scmp.ne.s32.totalorder %s36, %s52
      %p54 = scmp.eq.s32.totalorder %s28, 0
      %p55 = por %p53, %p54
      %s57 = sadd.s32 %s56, 1
      %p60 = scmp.eq.s32.totalorder %s22, 1
      %p61 = scmp.ne.s32.totalorder %s56, %s58
      %p62 = scmp.eq.s32.totalorder %s22, 0
      %p63 = por %p61, %p62
      %p64 = scmp.ne.s32.totalorder %s56, %s58
      %p65 = scmp.eq.s32.totalorder %s27, 1
      %p66 = por %p64, %p65
      %p67 = scmp.ne.s32.totalorder %s58, %s59
      %p68 = scmp.eq.s32.totalorder %s27, 0
      %p69 = por %p67, %p68
      %p70 = scmp.ne.s32.totalorder %s58, %s59
      %p71 = scmp.eq.s32.totalorder %s28, 1
      %p72 = por %p70, %p71
      %p74 = scmp.ne.s32.totalorder %s59, %s73
      %p75 = scmp.eq.s32.totalorder %s28, 0
      %p76 = por %p74, %p75
      %s78 = sadd.s32 %s77, 1
      %p81 = scmp.eq.s32.totalorder %s22, 1
      %p82 = scmp.ne.s32.totalorder %s77, %s79
      %p83 = scmp.eq.s32.totalorder %s22, 0
      %p84 = por %p82, %p83
      %p85 = scmp.ne.s32.totalorder %s77, %s79
      %p86 = scmp.eq.s32.totalorder %s27, 1
      %p87 = por %p85, %p86
      %p88 = scmp.ne.s32.totalorder %s79, %s80
      %p89 = scmp.eq.s32.totalorder %s27, 0
      %p90 = por %p88, %p89
      %p91 = scmp.ne.s32.totalorder %s79, %s80
      %p92 = scmp.eq.s32.totalorder %s28, 1
      %p93 = por %p91, %p92
      %p95 = scmp.ne.s32.totalorder %s80, %s94
      %p96 = scmp.eq.s32.totalorder %s28, 0
      %p97 = por %p95, %p96
      %s99 = sadd.s32 %s98, 1
      %p102 = scmp.eq.s32.totalorder %s22, 1
      %p103 = scmp.ne.s32.totalorder %s98, %s100
      %p104 = scmp.eq.s32.totalorder %s22, 0
      %p105 = por %p103, %p104
      %p106 = scmp.ne.s32.totalorder %s98, %s100
      %p107 = scmp.eq.s32.totalorder %s27, 1
      %p108 = por %p106, %p107
      %p109 = scmp.ne.s32.totalorder %s100, %s101
      %p110 = scmp.eq.s32.totalorder %s27, 0
      %p111 = por %p109, %p110
      %p112 = scmp.ne.s32.totalorder %s100, %s101
      %p113 = scmp.eq.s32.totalorder %s28, 1
      %p114 = por %p112, %p113
      %p116 = scmp.ne.s32.totalorder %s101, %s115
      %p117 = scmp.eq.s32.totalorder %s28, 0
      %p118 = por %p116, %p117
      %s120 = sadd.s32 %s119, 1
      %p123 = scmp.eq.s32.totalorder %s22, 1
      %p124 = scmp.ne.s32.totalorder %s119, %s121
      %p125 = scmp.eq.s32.totalorder %s22, 0
      %p126 = por %p124, %p125
      %p127 = scmp.ne.s32.totalorder %s119, %s121
      %p128 = scmp.eq.s32.totalorder %s27, 1
      %p129 = por %p127, %p128
      %p130 = scmp.ne.s32.totalorder %s121, %s122
      %p131 = scmp.eq.s32.totalorder %s27, 0
      %p132 = por %p130, %p131
      %p133 = scmp.ne.s32.totalorder %s121, %s122
      %p134 = scmp.eq.s32.totalorder %s28, 1
      %p135 = por %p133, %p134
      %p137 = scmp.ne.s32.totalorder %s122, %s136
      %p138 = scmp.eq.s32.totalorder %s28, 0
      %p139 = por %p137, %p138
      %s141 = sadd.s32 %s140, 1
      %p144 = scmp.eq.s32.totalorder %s22, 1
      %p145 = scmp.ne.s32.totalorder %s140, %s142
      %p146 = scmp.eq.s32.totalorder %s22, 0
      %p147 = por %p145, %p146
      %p148 = scmp.ne.s32.totalorder %s140, %s142
      %p149 = scmp.eq.s32.totalorder %s27, 1
      %p150 = por %p148, %p149
      %p151 = scmp.ne.s32.totalorder %s142, %s143
      %p152 = scmp.eq.s32.totalorder %s27, 0
      %p153 = por %p151, %p152
      %p154 = scmp.ne.s32.totalorder %s142, %s143
      %p155 = scmp.eq.s32.totalorder %s28, 1
      %p156 = por %p154, %p155
      %p158 = scmp.ne.s32.totalorder %s143, %s157
      %p159 = scmp.eq.s32.totalorder %s28, 0
      %p160 = por %p158, %p159
      %s162 = sadd.s32 %s161, 1
      %p165 = scmp.eq.s32.totalorder %s22, 1
      %p166 = scmp.ne.s32.totalorder %s161, %s163
      %p167 = scmp.eq.s32.totalorder %s22, 0
      %p168 = por %p166, %p167
      %p169 = scmp.ne.s32.totalorder %s161, %s163
      %p170 = scmp.eq.s32.totalorder %s27, 1
      %p171 = por %p169, %p170
      %p172 = scmp.ne.s32.totalorder %s163, %s164
      %p173 = scmp.eq.s32.totalorder %s27, 0
      %p174 = por %p172, %p173
      %p175 = scmp.ne.s32.totalorder %s163, %s164
      %p176 = scmp.eq.s32.totalorder %s28, 1
      %p177 = por %p175, %p176
      %p179 = scmp.ne.s32.totalorder %s164, %s178
      %p180 = scmp.eq.s32.totalorder %s28, 0
      %p181 = por %p179, %p180
      %s183 = sadd.s32 %s182, 1
      %p186 = scmp.eq.s32.totalorder %s22, 1
      %p187 = scmp.ne.s32.totalorder %s182, %s184
      %p188 = scmp.eq.s32.totalorder %s22, 0
      %p189 = por %p187, %p188
      %p190 = scmp.ne.s32.totalorder %s182, %s184
      %p191 = scmp.eq.s32.totalorder %s27, 1
      %p192 = por %p190, %p191
      %p193 = scmp.ne.s32.totalorder %s184, %s185
      %p194 = scmp.eq.s32.totalorder %s27, 0
      %p195 = por %p193, %p194
      %p196 = scmp.ne.s32.totalorder %s184, %s185
      %p197 = scmp.eq.s32.totalorder %s28, 1
      %p198 = por %p196, %p197
      %p200 = scmp.ne.s32.totalorder %s185, %s199
      %p201 = scmp.eq.s32.totalorder %s28, 0
      %p202 = por %p200, %p201
      %s204 = sadd.s32 %s203, 1
      %p207 = scmp.eq.s32.totalorder %s22, 1
      %p208 = scmp.ne.s32.totalorder %s203, %s205
      %p209 = scmp.eq.s32.totalorder %s22, 0
      %p210 = por %p208, %p209
      %p211 = scmp.ne.s32.totalorder %s203, %s205
      %p212 = scmp.eq.s32.totalorder %s27, 1
      %p213 = por %p211, %p212
      %p214 = scmp.ne.s32.totalorder %s205, %s206
      %p215 = scmp.eq.s32.totalorder %s27, 0
      %p216 = por %p214, %p215
      %p217 = scmp.ne.s32.totalorder %s205, %s206
      %p218 = scmp.eq.s32.totalorder %s28, 1
      %p219 = por %p217, %p218
      %p221 = scmp.ne.s32.totalorder %s206, %s220
      %p222 = scmp.eq.s32.totalorder %s28, 0
      %p223 = por %p221, %p222
      %s225 = sadd.s32 %s224, 1
      %p228 = scmp.eq.s32.totalorder %s22, 1
      %p229 = scmp.ne.s32.totalorder %s224, %s226
      %p230 = scmp.eq.s32.totalorder %s22, 0
      %p231 = por %p229, %p230
      %p232 = scmp.ne.s32.totalorder %s224, %s226
      %p233 = scmp.eq.s32.totalorder %s27, 1
      %p234 = por %p232, %p233
      %p235 = scmp.ne.s32.totalorder %s226, %s227
      %p236 = scmp.eq.s32.totalorder %s27, 0
      %p237 = por %p235, %p236
      %p238 = scmp.ne.s32.totalorder %s226, %s227
      %p239 = scmp.eq.s32.totalorder %s28, 1
      %p240 = por %p238, %p239
      %p242 = scmp.ne.s32.totalorder %s227, %s241
      %p243 = scmp.eq.s32.totalorder %s28, 0
      %p244 = por %p242, %p243
      %s246 = sadd.s32 %s245, 1
      %p249 = scmp.eq.s32.totalorder %s22, 1
      %p250 = scmp.ne.s32.totalorder %s245, %s247
      %p251 = scmp.eq.s32.totalorder %s22, 0
      %p252 = por %p250, %p251
      %p253 = scmp.ne.s32.totalorder %s245, %s247
      %p254 = scmp.eq.s32.totalorder %s27, 1
      %p255 = por %p253, %p254
      %p256 = scmp.ne.s32.totalorder %s247, %s248
      %p257 = scmp.eq.s32.totalorder %s27, 0
      %p258 = por %p256, %p257
      %p259 = scmp.ne.s32.totalorder %s247, %s248
      %p260 = scmp.eq.s32.totalorder %s28, 1
      %p261 = por %p259, %p260
      %p263 = scmp.ne.s32.totalorder %s248, %s262
      %p264 = scmp.eq.s32.totalorder %s28, 0
      %p265 = por %p263, %p264
      %s267 = sadd.s32 %s266, 1
      %p270 = scmp.eq.s32.totalorder %s22, 1
      %p271 = scmp.ne.s32.totalorder %s266, %s268
      %p272 = scmp.eq.s32.totalorder %s22, 0
      %p273 = por %p271, %p272
      %p274 = scmp.ne.s32.totalorder %s266, %s268
      %p275 = scmp.eq.s32.totalorder %s27, 1
      %p276 = por %p274, %p275
      %p277 = scmp.ne.s32.totalorder %s268, %s269
      %p278 = scmp.eq.s32.totalorder %s27, 0
      %p279 = por %p277, %p278
      %p280 = scmp.ne.s32.totalorder %s268, %s269
      %p281 = scmp.eq.s32.totalorder %s28, 1
      %p282 = por %p280, %p281
      %p284 = scmp.ne.s32.totalorder %s269, %s283
      %p285 = scmp.eq.s32.totalorder %s28, 0
      %p286 = por %p284, %p285
      %s288 = sadd.s32 %s287, 1
      %p291 = scmp.eq.s32.totalorder %s22, 1
      %p292 = scmp.ne.s32.totalorder %s287, %s289
      %p293 = scmp.eq.s32.totalorder %s22, 0
      %p294 = por %p292, %p293
      %p295 = scmp.ne.s32.totalorder %s287, %s289
      %p296 = scmp.eq.s32.totalorder %s27, 1
      %p297 = por %p295, %p296
      %p298 = scmp.ne.s32.totalorder %s289, %s290
      %p299 = scmp.eq.s32.totalorder %s27, 0
      %p300 = por %p298, %p299
      %p301 = scmp.ne.s32.totalorder %s289, %s290
      %p302 = scmp.eq.s32.totalorder %s28, 1
      %p303 = por %p301, %p302
      %p305 = scmp.ne.s32.totalorder %s290, %s304
      %p306 = scmp.eq.s32.totalorder %s28, 0
      %p307 = por %p305, %p306
      %s308 = ssub.s32 %s22, %s29
      %p309 = scmp.eq.s32.totalorder %s308, 0
      %s311 = sadd.s32 %s310, 1
      %s312 = scalar_select %p309, %s310, %s311
      %p315 = pneg %p309
      %p316 = scmp.eq.s32.totalorder %s22, 1
      %p317 = por %p315, %p316
      %p318 = scmp.ne.s32.totalorder %s310, %s313
      %p319 = scmp.eq.s32.totalorder %s22, 0
      %p320 = por %p318, %p319
      %p321 = scmp.ne.s32.totalorder %s310, %s313
      %p322 = scmp.eq.s32.totalorder %s27, 1
      %p323 = por %p321, %p322
      %p324 = scmp.ne.s32.totalorder %s313, %s314
      %p325 = scmp.eq.s32.totalorder %s27, 0
      %p326 = por %p324, %p325
      %p327 = scmp.ne.s32.totalorder %s313, %s314
      %p328 = scmp.eq.s32.totalorder %s28, 1
      %p329 = por %p327, %p328
      %p331 = scmp.ne.s32.totalorder %s314, %s330
      %p332 = scmp.eq.s32.totalorder %s28, 0
      %p333 = por %p331, %p332
      %p334 = scmp.le.s32.totalorder 1, %s22
      %p335 = scmp.lt.s32.totalorder %s22, 3
      %p336 = pnand %p334, %p335
      %p337 = pneg %p336
      // Predicated region
      $region9: #{convnet_forward.1} parent=5 // pred_check
        _
      $region10: #{convnet_forward.1} parent=5 // pred_check_branch
        %339 = sbr.rel (%p336) target = $region12
      $region11: #{convnet_forward.1} parent=5 // pred_region
        %s340 = ssub.s32 %s22, 1
        // Predicated region
        $region13: #{convnet_forward.1} parent=11 // pred_check
          %p341 = pneg %p69
        $region14: #{convnet_forward.1} parent=11 // pred_check_branch
          %343 = sbr.rel (%p341) target = $region16
        $region15: #{convnet_forward.1} parent=11 // pred_region
          _
        $region16: #{convnet_forward.1} parent=11 // pred_fallthru
          _
        // Predicated region
        $region17: #{convnet_forward.1} parent=11 // pred_check
          %p344 = pneg %p90
        $region18: #{convnet_forward.1} parent=11 // pred_check_branch
          %346 = sbr.rel (%p344) target = $region20
        $region19: #{convnet_forward.1} parent=11 // pred_region
          _
        $region20: #{convnet_forward.1} parent=11 // pred_fallthru
          _
        // Predicated region
        $region21: #{convnet_forward.1} parent=11 // pred_check
          %p347 = pneg %p111
        $region22: #{convnet_forward.1} parent=11 // pred_check_branch
          %349 = sbr.rel (%p347) target = $region24
        $region23: #{convnet_forward.1} parent=11 // pred_region
          _
        $region24: #{convnet_forward.1} parent=11 // pred_fallthru
          _
        // Predicated region
        $region25: #{convnet_forward.1} parent=11 // pred_check
          %p350 = pneg %p132
        $region26: #{convnet_forward.1} parent=11 // pred_check_branch
          %352 = sbr.rel (%p350) target = $region28
        $region27: #{convnet_forward.1} parent=11 // pred_region
          _
        $region28: #{convnet_forward.1} parent=11 // pred_fallthru
          _
        // Predicated region
        $region29: #{convnet_forward.1} parent=11 // pred_check
          %p353 = pneg %p153
        $region30: #{convnet_forward.1} parent=11 // pred_check_branch
          %355 = sbr.rel (%p353) target = $region32
        $region31: #{convnet_forward.1} parent=11 // pred_region
          _
        $region32: #{convnet_forward.1} parent=11 // pred_fallthru
          _
        // Predicated region
        $region33: #{convnet_forward.1} parent=11 // pred_check
          %p356 = pneg %p174
        $region34: #{convnet_forward.1} parent=11 // pred_check_branch
          %358 = sbr.rel (%p356) target = $region36
        $region35: #{convnet_forward.1} parent=11 // pred_region
          _
        $region36: #{convnet_forward.1} parent=11 // pred_fallthru
          _
        // Predicated region
        $region37: #{convnet_forward.1} parent=11 // pred_check
          %p359 = pneg %p195
        $region38: #{convnet_forward.1} parent=11 // pred_check_branch
          %361 = sbr.rel (%p359) target = $region40
        $region39: #{convnet_forward.1} parent=11 // pred_region
          _
        $region40: #{convnet_forward.1} parent=11 // pred_fallthru
          _
        // Predicated region
        $region41: #{convnet_forward.1} parent=11 // pred_check
          %p362 = pneg %p216
        $region42: #{convnet_forward.1} parent=11 // pred_check_branch
          %364 = sbr.rel (%p362) target = $region44
        $region43: #{convnet_forward.1} parent=11 // pred_region
          _
        $region44: #{convnet_forward.1} parent=11 // pred_fallthru
          _
        // Predicated region
        $region45: #{convnet_forward.1} parent=11 // pred_check
          %p365 = pneg %p237
        $region46: #{convnet_forward.1} parent=11 // pred_check_branch
          %367 = sbr.rel (%p365) target = $region48
        $region47: #{convnet_forward.1} parent=11 // pred_region
          _
        $region48: #{convnet_forward.1} parent=11 // pred_fallthru
          _
        // Predicated region
        $region49: #{convnet_forward.1} parent=11 // pred_check
          %p368 = pneg %p258
        $region50: #{convnet_forward.1} parent=11 // pred_check_branch
          %370 = sbr.rel (%p368) target = $region52
        $region51: #{convnet_forward.1} parent=11 // pred_region
          _
        $region52: #{convnet_forward.1} parent=11 // pred_fallthru
          _
        // Predicated region
        $region53: #{convnet_forward.1} parent=11 // pred_check
          %p371 = pneg %p279
        $region54: #{convnet_forward.1} parent=11 // pred_check_branch
          %373 = sbr.rel (%p371) target = $region56
        $region55: #{convnet_forward.1} parent=11 // pred_region
          _
        $region56: #{convnet_forward.1} parent=11 // pred_fallthru
          _
        // Predicated region
        $region57: #{convnet_forward.1} parent=11 // pred_check
          %p374 = pneg %p300
        $region58: #{convnet_forward.1} parent=11 // pred_check_branch
          %376 = sbr.rel (%p374) target = $region60
        $region59: #{convnet_forward.1} parent=11 // pred_region
          _
        $region60: #{convnet_forward.1} parent=11 // pred_fallthru
          _
      $region12: #{convnet_forward.1} parent=5 // pred_fallthru
        _
      %p377 = scmp.lt.s32.totalorder %s22, 2
      // Predicated region
      $region61: #{convnet_forward.1} parent=5 // pred_check
        %p378 = pneg %p377
      $region62: #{convnet_forward.1} parent=5 // pred_check_branch
        %380 = sbr.rel (%p378) target = $region64
      $region63: #{convnet_forward.1} parent=5 // pred_region
        // Predicated region
        $region65: #{convnet_forward.1} parent=63 // pred_check
          %p381 = pneg %p42
        $region66: #{convnet_forward.1} parent=63 // pred_check_branch
          %383 = sbr.rel (%p381) target = $region68
        $region67: #{convnet_forward.1} parent=63 // pred_region
          %p384 = scmp.lt.s32.totalorder %s22, 1
          %s385 = scalar_select %p384, %s22, 1
          %s386 = smul.addr %s385, 4
          %s387 = smul.addr %s386, 8
          %s388 = scalar_lea.vmem %s0, %s387
        $region68: #{convnet_forward.1} parent=63 // pred_fallthru
          _
      $region64: #{convnet_forward.1} parent=5 // pred_fallthru
        _
      %p389 = scmp.le.s32.totalorder 1, %s22
      %p390 = scmp.lt.s32.totalorder %s22, 3
      %p391 = pnand %p389, %p390
      %p392 = pneg %p391
      // Predicated region
      $region69: #{convnet_forward.1} parent=5 // pred_check
        _
      $region70: #{convnet_forward.1} parent=5 // pred_check_branch
        %394 = sbr.rel (%p391) target = $region72
      $region71: #{convnet_forward.1} parent=5 // pred_region
        %s395 = ssub.s32 %s22, 1
        %p396 = scmp.lt.s32.totalorder %s27, 1
        %s397 = scalar_select %p396, %s27, 1
        %s398 = smul.addr %s397, 4
        %s399 = smul.addr %s398, 8
        %s400 = scalar_lea.vmem %s0, %s399
        %p401 = pneg %p48
        %p402 = pneg %p45
        %p403 = pneg %p69
        %p404 = pneg %p66
        %p405 = pneg %p90
        %p406 = pneg %p87
        %p407 = pneg %p111
        %p408 = pneg %p108
        %p409 = pneg %p132
        %p410 = pneg %p129
        %p411 = pneg %p153
        %p412 = pneg %p150
        %p413 = pneg %p174
        %p414 = pneg %p171
        %p415 = pneg %p195
        %p416 = pneg %p192
        %p417 = pneg %p216
        %p418 = pneg %p213
        %p419 = pneg %p237
        %p420 = pneg %p234
        %p421 = pneg %p258
        %p422 = pneg %p255
        %p423 = pneg %p279
        %p424 = pneg %p276
        %p425 = pneg %p300
        %p426 = pneg %p297
        %p427 = pneg %p326
        %p428 = pneg %p323
        %s429 = sand.u32 %s313, 1
        %s430 = scalar_lea.sflag [#allocation6], %s429
        %s431 = sand.u32 %s313, 1
        %s432 = scalar_lea.vmem [#allocation5], %s431
        %p433 = scmp.lt.s32.totalorder %s27, 1
        %s434 = scalar_select %p433, %s27, 1
        %s435 = smul.addr %s434, 4
        %s436 = smul.addr %s435, 8
        %s437 = scalar_lea.vmem %s0, %s436
        %v438 = vld [vmem:[%s437] sm:$0xff]
        %v439 = vld [vmem:[%s437 + $0x8] sm:$0xff]
        %v440 = vld [vmem:[%s437 + $0x10] sm:$0xff]
        %v441 = vld [vmem:[%s1] sm:$0xff]
        %v442 = vld [vmem:[%s1 + $0x8] sm:$0xff]
        %v443 = vld [vmem:[%s1 + $0x10] sm:$0xff]
        %v444 = vld [vmem:[%s1 + $0x18] sm:$0xff]
        %v445 = vld [vmem:[%s1 + $0x20] sm:$0xff]
        %v446 = vld [vmem:[%s1 + $0x28] sm:$0xff]
        %v447 = vld [vmem:[%s1 + $0x30] sm:$0xf]
        %v448 = vld [vmem:[%s1 + $0x38] sm:$0xf]
        %v449 = vld [vmem:[%s437 + $0x1] sm:$0xff]
        %v450 = vld [vmem:[%s437 + $0x9] sm:$0xff]
        %v451 = vld [vmem:[%s437 + $0x11] sm:$0xff]
        %s452 = scalar_lea.vmem %s1, 64
        %v453 = vld [vmem:[%s452] sm:$0xff]
        %v454 = vld [vmem:[%s452 + $0x8] sm:$0xff]
        %v455 = vld [vmem:[%s452 + $0x10] sm:$0xff]
        %v456 = vld [vmem:[%s452 + $0x18] sm:$0xff]
        %v457 = vld [vmem:[%s452 + $0x20] sm:$0xff]
        %v458 = vld [vmem:[%s452 + $0x28] sm:$0xff]
        %v459 = vld [vmem:[%s452 + $0x30] sm:$0xf]
        %v460 = vld [vmem:[%s452 + $0x38] sm:$0xf]
        %vm461 = vcmask 228352
        %v463 = vsel %vm461, %v449, 0
        %v466 = vsel %vm461, %v450, 0
        %v469 = vsel %vm461, %v451, 0
        %vm471 = vcmask 1043456
        %v473 = vsel %vm471, %v459, 0
        %v476 = vsel %vm471, %v460, 0
        %478 = vmatprep.subr.mxu0 0.0
        %479 = vmatpush1.msra.mxu0 0.0
        %480 = vmatprep.subr.mxu0 0.0
        %481 = vmatpush1.msra.mxu0 0.0
        %482 = vmatprep.subr.mxu0 0.0
        %483 = vmatpush1.msra.mxu0 0.0
        %484 = vmatprep.subr.mxu0 0.0
        %485 = vmatpush1.msra.mxu0 0.0
        %486 = vmatprep.subr.mxu0 0.0
        %487 = vmatpush1.msra.mxu0 0.0
        %488 = vmatprep.subr.mxu0 0.0
        %489 = vmatpush1.msra.mxu0 0.0
        %490 = vmatprep.subr.mxu0 0.0
        %491 = vmatpush1.msra.mxu0 0.0
        %492 = vmatprep.subr.mxu0 0.0
        %493 = vmatpush1.msra.mxu0 0.0
        %494 = vmatprep.subr.mxu0 0.0
        %495 = vmatpush1.msra.mxu0 0.0
        %496 = vmatprep.subr.mxu0 0.0
        %497 = vmatpush1.msra.mxu0 0.0
        %498 = vmatprep.subr.mxu0 0.0
        %499 = vmatpush1.msra.mxu0 0.0
        %500 = vmatprep.subr.mxu0 0.0
        %501 = vmatpush1.msra.mxu0 0.0
        %502 = vmatprep.subr.mxu0 %v476
        %503 = vmatpush1.msra.mxu0 %v473
        %504 = vmatprep.subr.mxu0 %v458
        %505 = vmatpush1.msra.mxu0 %v457
        %506 = vmatprep.subr.mxu0 %v456
        %507 = vmatpush1.msra.mxu0 %v455
        %508 = vmatprep.subr.mxu0 %v454
        %509 = vmatpush1.msra.mxu0 %v453
        %510 = vmatprep.subr.mxu0 0.0
        %511 = vmatpush2.msra.mxu0 0.0
        %512 = vmatprep.subr.mxu0 0.0
        %513 = vmatpush2.msra.mxu0 0.0
        %514 = vmatprep.subr.mxu0 0.0
        %515 = vmatpush2.msra.mxu0 0.0
        %516 = vmatprep.subr.mxu0 0.0
        %517 = vmatpush2.msra.mxu0 0.0
        %518 = vmatprep.subr.mxu0 0.0
        %519 = vmatpush2.msra.mxu0 0.0
        %520 = vmatprep.subr.mxu0 0.0
        %521 = vmatpush2.msra.mxu0 0.0
        %522 = vmatprep.subr.mxu0 0.0
        %523 = vmatpush2.msra.mxu0 0.0
        %524 = vmatprep.subr.mxu0 0.0
        %525 = vmatpush2.msra.mxu0 0.0
        %526 = vmatprep.subr.mxu0 0.0
        %527 = vmatpush2.msra.mxu0 0.0
        %528 = vmatprep.subr.mxu0 0.0
        %529 = vmatpush2.msra.mxu0 0.0
        %530 = vmatprep.subr.mxu0 0.0
        %531 = vmatpush2.msra.mxu0 0.0
        %532 = vmatprep.subr.mxu0 0.0
        %533 = vmatpush2.msra.mxu0 0.0
        %534 = vmatprep.subr.mxu0 0.0
        %535 = vmatpush2.msra.mxu0 0.0
        %536 = vmatprep.subr.mxu0 0.0
        %537 = vmatpush2.msra.mxu0 0.0
        %538 = vmatprep.subr.mxu0 0.0
        %539 = vmatpush2.msra.mxu0 0.0
        %540 = vmatprep.subr.mxu0 0.0
        %541 = vmatpush2.msra.mxu0 0.0
        %542 = vmatprep.mubr.f32.mxu0 0.0
        %543 = vmatmul.mubr.f32.gmra.mxu0 %v463
        %v544 = vpop.f32.mrf.mxu0
        %v545 = vadd.f32 0.0, %v544
        %v546 = vpop.f32.mrf.mxu0
        %v547 = vadd.f32 0.0, %v546
        %548 = vmatprep.mubr.f32.mxu0 0.0
        %549 = vmatmul.mubr.f32.gmra.mxu0 %v466
        %v550 = vpop.f32.mrf.mxu0
        %v551 = vadd.f32 0.0, %v550
        %v552 = vpop.f32.mrf.mxu0
        %v553 = vadd.f32 0.0, %v552
        %554 = vmatprep.mubr.f32.mxu0 0.0
        %555 = vmatmul.mubr.f32.gmra.mxu0 %v469
        %v556 = vpop.f32.mrf.mxu0
        %v557 = vadd.f32 0.0, %v556
        %v558 = vpop.f32.mrf.mxu0
        %v559 = vadd.f32 0.0, %v558
        %560 = vdwg.mxu0
        %v562 = vsel %vm461, %v438, 0
        %v565 = vsel %vm461, %v439, 0
        %v568 = vsel %vm461, %v440, 0
        %v571 = vsel %vm471, %v447, 0
        %v574 = vsel %vm471, %v448, 0
        %576 = vmatprep.subr.mxu0 0.0
        %577 = vmatpush1.msra.mxu0 0.0
        %578 = vmatprep.subr.mxu0 0.0
        %579 = vmatpush1.msra.mxu0 0.0
        %580 = vmatprep.subr.mxu0 0.0
        %581 = vmatpush1.msra.mxu0 0.0
        %582 = vmatprep.subr.mxu0 0.0
        %583 = vmatpush1.msra.mxu0 0.0
        %584 = vmatprep.subr.mxu0 0.0
        %585 = vmatpush1.msra.mxu0 0.0
        %586 = vmatprep.subr.mxu0 0.0
        %587 = vmatpush1.msra.mxu0 0.0
        %588 = vmatprep.subr.mxu0 0.0
        %589 = vmatpush1.msra.mxu0 0.0
        %590 = vmatprep.subr.mxu0 0.0
        %591 = vmatpush1.msra.mxu0 0.0
        %592 = vmatprep.subr.mxu0 0.0
        %593 = vmatpush1.msra.mxu0 0.0
        %594 = vmatprep.subr.mxu0 0.0
        %595 = vmatpush1.msra.mxu0 0.0
        %596 = vmatprep.subr.mxu0 0.0
        %597 = vmatpush1.msra.mxu0 0.0
        %598 = vmatprep.subr.mxu0 0.0
        %599 = vmatpush1.msra.mxu0 0.0
        %600 = vmatprep.subr.mxu0 %v574
        %601 = vmatpush1.msra.mxu0 %v571
        %602 = vmatprep.subr.mxu0 %v446
        %603 = vmatpush1.msra.mxu0 %v445
        %604 = vmatprep.subr.mxu0 %v444
        %605 = vmatpush1.msra.mxu0 %v443
        %606 = vmatprep.subr.mxu0 %v442
        %607 = vmatpush1.msra.mxu0 %v441
        %608 = vmatprep.subr.mxu0 0.0
        %609 = vmatpush2.msra.mxu0 0.0
        %610 = vmatprep.subr.mxu0 0.0
        %611 = vmatpush2.msra.mxu0 0.0
        %612 = vmatprep.subr.mxu0 0.0
        %613 = vmatpush2.msra.mxu0 0.0
        %614 = vmatprep.subr.mxu0 0.0
        %615 = vmatpush2.msra.mxu0 0.0
        %616 = vmatprep.subr.mxu0 0.0
        %617 = vmatpush2.msra.mxu0 0.0
        %618 = vmatprep.subr.mxu0 0.0
        %619 = vmatpush2.msra.mxu0 0.0
        %620 = vmatprep.subr.mxu0 0.0
        %621 = vmatpush2.msra.mxu0 0.0
        %622 = vmatprep.subr.mxu0 0.0
        %623 = vmatpush2.msra.mxu0 0.0
        %624 = vmatprep.subr.mxu0 0.0
        %625 = vmatpush2.msra.mxu0 0.0
        %626 = vmatprep.subr.mxu0 0.0
        %627 = vmatpush2.msra.mxu0 0.0
        %628 = vmatprep.subr.mxu0 0.0
        %629 = vmatpush2.msra.mxu0 0.0
        %630 = vmatprep.subr.mxu0 0.0
        %631 = vmatpush2.msra.mxu0 0.0
        %632 = vmatprep.subr.mxu0 0.0
        %633 = vmatpush2.msra.mxu0 0.0
        %634 = vmatprep.subr.mxu0 0.0
        %635 = vmatpush2.msra.mxu0 0.0
        %636 = vmatprep.subr.mxu0 0.0
        %637 = vmatpush2.msra.mxu0 0.0
        %638 = vmatprep.subr.mxu0 0.0
        %639 = vmatpush2.msra.mxu0 0.0
        %640 = vmatprep.mubr.f32.mxu0 0.0
        %641 = vmatmul.mubr.f32.gmra.mxu0 %v562
        %v642 = vpop.f32.mrf.mxu0
        %v643 = vadd.f32 %v545, %v642
        %v644 = vpop.f32.mrf.mxu0
        %v645 = vadd.f32 %v547, %v644
        %646 = vmatprep.mubr.f32.mxu0 0.0
        %647 = vmatmul.mubr.f32.gmra.mxu0 %v565
        %v648 = vpop.f32.mrf.mxu0
        %v649 = vadd.f32 %v551, %v648
        %v650 = vpop.f32.mrf.mxu0
        %v651 = vadd.f32 %v553, %v650
        %652 = vmatprep.mubr.f32.mxu0 0.0
        %653 = vmatmul.mubr.f32.gmra.mxu0 %v568
        %v654 = vpop.f32.mrf.mxu0
        %v655 = vadd.f32 %v557, %v654
        %v656 = vpop.f32.mrf.mxu0
        %v657 = vadd.f32 %v559, %v656
        %658 = vdwg.mxu0
        %v659 = vld [vmem:[%s437 + $0x2] sm:$0xff]
        %v660 = vld [vmem:[%s437 + $0xa] sm:$0xff]
        %v661 = vld [vmem:[%s437 + $0x12] sm:$0xff]
        %s662 = scalar_lea.vmem %s1, 128
        %v663 = vld [vmem:[%s662] sm:$0xff]
        %v664 = vld [vmem:[%s662 + $0x8] sm:$0xff]
        %v665 = vld [vmem:[%s662 + $0x10] sm:$0xff]
        %v666 = vld [vmem:[%s662 + $0x18] sm:$0xff]
        %v667 = vld [vmem:[%s662 + $0x20] sm:$0xff]
        %v668 = vld [vmem:[%s662 + $0x28] sm:$0xff]
        %v669 = vld [vmem:[%s662 + $0x30] sm:$0xf]
        %v670 = vld [vmem:[%s662 + $0x38] sm:$0xf]
        %v672 = vsel %vm461, %v659, 0
        %v675 = vsel %vm461, %v660, 0
        %v678 = vsel %vm461, %v661, 0
        %v681 = vsel %vm471, %v669, 0
        %v684 = vsel %vm471, %v670, 0
        %686 = vmatprep.subr.mxu0 0.0
        %687 = vmatpush1.msra.mxu0 0.0
        %688 = vmatprep.subr.mxu0 0.0
        %689 = vmatpush1.msra.mxu0 0.0
        %690 = vmatprep.subr.mxu0 0.0
        %691 = vmatpush1.msra.mxu0 0.0
        %692 = vmatprep.subr.mxu0 0.0
        %693 = vmatpush1.msra.mxu0 0.0
        %694 = vmatprep.subr.mxu0 0.0
        %695 = vmatpush1.msra.mxu0 0.0
        %696 = vmatprep.subr.mxu0 0.0
        %697 = vmatpush1.msra.mxu0 0.0
        %698 = vmatprep.subr.mxu0 0.0
        %699 = vmatpush1.msra.mxu0 0.0
        %700 = vmatprep.subr.mxu0 0.0
        %701 = vmatpush1.msra.mxu0 0.0
        %702 = vmatprep.subr.mxu0 0.0
        %703 = vmatpush1.msra.mxu0 0.0
        %704 = vmatprep.subr.mxu0 0.0
        %705 = vmatpush1.msra.mxu0 0.0
        %706 = vmatprep.subr.mxu0 0.0
        %707 = vmatpush1.msra.mxu0 0.0
        %708 = vmatprep.subr.mxu0 0.0
        %709 = vmatpush1.msra.mxu0 0.0
        %710 = vmatprep.subr.mxu0 %v684
        %711 = vmatpush1.msra.mxu0 %v681
        %712 = vmatprep.subr.mxu0 %v668
        %713 = vmatpush1.msra.mxu0 %v667
        %714 = vmatprep.subr.mxu0 %v666
        %715 = vmatpush1.msra.mxu0 %v665
        %716 = vmatprep.subr.mxu0 %v664
        %717 = vmatpush1.msra.mxu0 %v663
        %718 = vmatprep.subr.mxu0 0.0
        %719 = vmatpush2.msra.mxu0 0.0
        %720 = vmatprep.subr.mxu0 0.0
        %721 = vmatpush2.msra.mxu0 0.0
        %722 = vmatprep.subr.mxu0 0.0
        %723 = vmatpush2.msra.mxu0 0.0
        %724 = vmatprep.subr.mxu0 0.0
        %725 = vmatpush2.msra.mxu0 0.0
        %726 = vmatprep.subr.mxu0 0.0
        %727 = vmatpush2.msra.mxu0 0.0
        %728 = vmatprep.subr.mxu0 0.0
        %729 = vmatpush2.msra.mxu0 0.0
        %730 = vmatprep.subr.mxu0 0.0
        %731 = vmatpush2.msra.mxu0 0.0
        %732 = vmatprep.subr.mxu0 0.0
        %733 = vmatpush2.msra.mxu0 0.0
        %734 = vmatprep.subr.mxu0 0.0
        %735 = vmatpush2.msra.mxu0 0.0
        %736 = vmatprep.subr.mxu0 0.0
        %737 = vmatpush2.msra.mxu0 0.0
        %738 = vmatprep.subr.mxu0 0.0
        %739 = vmatpush2.msra.mxu0 0.0
        %740 = vmatprep.subr.mxu0 0.0
        %741 = vmatpush2.msra.mxu0 0.0
        %742 = vmatprep.subr.mxu0 0.0
        %743 = vmatpush2.msra.mxu0 0.0
        %744 = vmatprep.subr.mxu0 0.0
        %745 = vmatpush2.msra.mxu0 0.0
        %746 = vmatprep.subr.mxu0 0.0
        %747 = vmatpush2.msra.mxu0 0.0
        %748 = vmatprep.subr.mxu0 0.0
        %749 = vmatpush2.msra.mxu0 0.0
        %750 = vmatprep.mubr.f32.mxu0 0.0
        %751 = vmatmul.mubr.f32.gmra.mxu0 %v672
        %v752 = vpop.f32.mrf.mxu0
        %v753 = vadd.f32 0.0, %v752
        %v754 = vpop.f32.mrf.mxu0
        %v755 = vadd.f32 0.0, %v754
        %756 = vmatprep.mubr.f32.mxu0 0.0
        %757 = vmatmul.mubr.f32.gmra.mxu0 %v675
        %v758 = vpop.f32.mrf.mxu0
        %v759 = vadd.f32 0.0, %v758
        %v760 = vpop.f32.mrf.mxu0
        %v761 = vadd.f32 0.0, %v760
        %762 = vmatprep.mubr.f32.mxu0 0.0
        %763 = vmatmul.mubr.f32.gmra.mxu0 %v678
        %v764 = vpop.f32.mrf.mxu0
        %v765 = vadd.f32 0.0, %v764
        %v766 = vpop.f32.mrf.mxu0
        %v767 = vadd.f32 0.0, %v766
        %768 = vdwg.mxu0
        %v769 = vadd.f32 %v643, %v753
        %v770 = vadd.f32 %v645, %v755
        %v771 = vadd.f32 %v649, %v759
        %v772 = vadd.f32 %v651, %v761
        %v773 = vadd.f32 %v655, %v765
        %v774 = vadd.f32 %v657, %v767
        %v775 = vld [vmem:[%s437 + $0x3] sm:$0xff]
        %v776 = vld [vmem:[%s437 + $0xb] sm:$0xff]
        %v777 = vld [vmem:[%s437 + $0x13] sm:$0xff]
        %s778 = scalar_lea.vmem %s1, 192
        %v779 = vld [vmem:[%s778] sm:$0xff]
        %v780 = vld [vmem:[%s778 + $0x8] sm:$0xff]
        %v781 = vld [vmem:[%s778 + $0x10] sm:$0xff]
        %v782 = vld [vmem:[%s778 + $0x18] sm:$0xff]
        %v783 = vld [vmem:[%s778 + $0x20] sm:$0xff]
        %v784 = vld [vmem:[%s778 + $0x28] sm:$0xff]
        %v785 = vld [vmem:[%s778 + $0x30] sm:$0xf]
        %v786 = vld [vmem:[%s778 + $0x38] sm:$0xf]
        %v788 = vsel %vm461, %v775, 0
        %v791 = vsel %vm461, %v776, 0
        %v794 = vsel %vm461, %v777, 0
        %v797 = vsel %vm471, %v785, 0
        %v800 = vsel %vm471, %v786, 0
        %802 = vmatprep.subr.mxu0 0.0
        %803 = vmatpush1.msra.mxu0 0.0
        %804 = vmatprep.subr.mxu0 0.0
        %805 = vmatpush1.msra.mxu0 0.0
        %806 = vmatprep.subr.mxu0 0.0
        %807 = vmatpush1.msra.mxu0 0.0
        %808 = vmatprep.subr.mxu0 0.0
        %809 = vmatpush1.msra.mxu0 0.0
        %810 = vmatprep.subr.mxu0 0.0
        %811 = vmatpush1.msra.mxu0 0.0
        %812 = vmatprep.subr.mxu0 0.0
        %813 = vmatpush1.msra.mxu0 0.0
        %814 = vmatprep.subr.mxu0 0.0
        %815 = vmatpush1.msra.mxu0 0.0
        %816 = vmatprep.subr.mxu0 0.0
        %817 = vmatpush1.msra.mxu0 0.0
        %818 = vmatprep.subr.mxu0 0.0
        %819 = vmatpush1.msra.mxu0 0.0
        %820 = vmatprep.subr.mxu0 0.0
        %821 = vmatpush1.msra.mxu0 0.0
        %822 = vmatprep.subr.mxu0 0.0
        %823 = vmatpush1.msra.mxu0 0.0
        %824 = vmatprep.subr.mxu0 0.0
        %825 = vmatpush1.msra.mxu0 0.0
        %826 = vmatprep.subr.mxu0 %v800
        %827 = vmatpush1.msra.mxu0 %v797
        %828 = vmatprep.subr.mxu0 %v784
        %829 = vmatpush1.msra.mxu0 %v783
        %830 = vmatprep.subr.mxu0 %v782
        %831 = vmatpush1.msra.mxu0 %v781
        %832 = vmatprep.subr.mxu0 %v780
        %833 = vmatpush1.msra.mxu0 %v779
        %834 = vmatprep.subr.mxu0 0.0
        %835 = vmatpush2.msra.mxu0 0.0
        %836 = vmatprep.subr.mxu0 0.0
        %837 = vmatpush2.msra.mxu0 0.0
        %838 = vmatprep.subr.mxu0 0.0
        %839 = vmatpush2.msra.mxu0 0.0
        %840 = vmatprep.subr.mxu0 0.0
        %841 = vmatpush2.msra.mxu0 0.0
        %842 = vmatprep.subr.mxu0 0.0
        %843 = vmatpush2.msra.mxu0 0.0
        %844 = vmatprep.subr.mxu0 0.0
        %845 = vmatpush2.msra.mxu0 0.0
        %846 = vmatprep.subr.mxu0 0.0
        %847 = vmatpush2.msra.mxu0 0.0
        %848 = vmatprep.subr.mxu0 0.0
        %849 = vmatpush2.msra.mxu0 0.0
        %850 = vmatprep.subr.mxu0 0.0
        %851 = vmatpush2.msra.mxu0 0.0
        %852 = vmatprep.subr.mxu0 0.0
        %853 = vmatpush2.msra.mxu0 0.0
        %854 = vmatprep.subr.mxu0 0.0
        %855 = vmatpush2.msra.mxu0 0.0
        %856 = vmatprep.subr.mxu0 0.0
        %857 = vmatpush2.msra.mxu0 0.0
        %858 = vmatprep.subr.mxu0 0.0
        %859 = vmatpush2.msra.mxu0 0.0
        %860 = vmatprep.subr.mxu0 0.0
        %861 = vmatpush2.msra.mxu0 0.0
        %862 = vmatprep.subr.mxu0 0.0
        %863 = vmatpush2.msra.mxu0 0.0
        %864 = vmatprep.subr.mxu0 0.0
        %865 = vmatpush2.msra.mxu0 0.0
        %866 = vmatprep.mubr.f32.mxu0 0.0
        %867 = vmatmul.mubr.f32.gmra.mxu0 %v788
        %v868 = vpop.f32.mrf.mxu0
        %v869 = vadd.f32 0.0, %v868
        %v870 = vpop.f32.mrf.mxu0
        %v871 = vadd.f32 0.0, %v870
        %872 = vmatprep.mubr.f32.mxu0 0.0
        %873 = vmatmul.mubr.f32.gmra.mxu0 %v791
        %v874 = vpop.f32.mrf.mxu0
        %v875 = vadd.f32 0.0, %v874
        %v876 = vpop.f32.mrf.mxu0
        %v877 = vadd.f32 0.0, %v876
        %878 = vmatprep.mubr.f32.mxu0 0.0
        %879 = vmatmul.mubr.f32.gmra.mxu0 %v794
        %v880 = vpop.f32.mrf.mxu0
        %v881 = vadd.f32 0.0, %v880
        %v882 = vpop.f32.mrf.mxu0
        %v883 = vadd.f32 0.0, %v882
        %884 = vdwg.mxu0
        %v885 = vadd.f32 %v769, %v869
        %v886 = vadd.f32 %v770, %v871
        %v887 = vadd.f32 %v771, %v875
        %v888 = vadd.f32 %v772, %v877
        %v889 = vadd.f32 %v773, %v881
        %v890 = vadd.f32 %v774, %v883
        %v891 = vld [vmem:[%s437 + $0x4] sm:$0xff]
        %v892 = vld [vmem:[%s437 + $0xc] sm:$0xff]
        %v893 = vld [vmem:[%s437 + $0x14] sm:$0xff]
        %s894 = scalar_lea.vmem %s1, 256
        %v895 = vld [vmem:[%s894] sm:$0xff]
        %v896 = vld [vmem:[%s894 + $0x8] sm:$0xff]
        %v897 = vld [vmem:[%s894 + $0x10] sm:$0xff]
        %v898 = vld [vmem:[%s894 + $0x18] sm:$0xff]
        %v899 = vld [vmem:[%s894 + $0x20] sm:$0xff]
        %v900 = vld [vmem:[%s894 + $0x28] sm:$0xff]
        %v901 = vld [vmem:[%s894 + $0x30] sm:$0xf]
        %v902 = vld [vmem:[%s894 + $0x38] sm:$0xf]
        %v904 = vsel %vm461, %v891, 0
        %v907 = vsel %vm461, %v892, 0
        %v910 = vsel %vm461, %v893, 0
        %v913 = vsel %vm471, %v901, 0
        %v916 = vsel %vm471, %v902, 0
        %918 = vmatprep.subr.mxu0 0.0
        %919 = vmatpush1.msra.mxu0 0.0
        %920 = vmatprep.subr.mxu0 0.0
        %921 = vmatpush1.msra.mxu0 0.0
        %922 = vmatprep.subr.mxu0 0.0
        %923 = vmatpush1.msra.mxu0 0.0
        %924 = vmatprep.subr.mxu0 0.0
        %925 = vmatpush1.msra.mxu0 0.0
        %926 = vmatprep.subr.mxu0 0.0
        %927 = vmatpush1.msra.mxu0 0.0
        %928 = vmatprep.subr.mxu0 0.0
        %929 = vmatpush1.msra.mxu0 0.0
        %930 = vmatprep.subr.mxu0 0.0
        %931 = vmatpush1.msra.mxu0 0.0
        %932 = vmatprep.subr.mxu0 0.0
        %933 = vmatpush1.msra.mxu0 0.0
        %934 = vmatprep.subr.mxu0 0.0
        %935 = vmatpush1.msra.mxu0 0.0
        %936 = vmatprep.subr.mxu0 0.0
        %937 = vmatpush1.msra.mxu0 0.0
        %938 = vmatprep.subr.mxu0 0.0
        %939 = vmatpush1.msra.mxu0 0.0
        %940 = vmatprep.subr.mxu0 0.0
        %941 = vmatpush1.msra.mxu0 0.0
        %942 = vmatprep.subr.mxu0 %v916
        %943 = vmatpush1.msra.mxu0 %v913
        %944 = vmatprep.subr.mxu0 %v900
        %945 = vmatpush1.msra.mxu0 %v899
        %946 = vmatprep.subr.mxu0 %v898
        %947 = vmatpush1.msra.mxu0 %v897
        %948 = vmatprep.subr.mxu0 %v896
        %949 = vmatpush1.msra.mxu0 %v895
        %950 = vmatprep.subr.mxu0 0.0
        %951 = vmatpush2.msra.mxu0 0.0
        %952 = vmatprep.subr.mxu0 0.0
        %953 = vmatpush2.msra.mxu0 0.0
        %954 = vmatprep.subr.mxu0 0.0
        %955 = vmatpush2.msra.mxu0 0.0
        %956 = vmatprep.subr.mxu0 0.0
        %957 = vmatpush2.msra.mxu0 0.0
        %958 = vmatprep.subr.mxu0 0.0
        %959 = vmatpush2.msra.mxu0 0.0
        %960 = vmatprep.subr.mxu0 0.0
        %961 = vmatpush2.msra.mxu0 0.0
        %962 = vmatprep.subr.mxu0 0.0
        %963 = vmatpush2.msra.mxu0 0.0
        %964 = vmatprep.subr.mxu0 0.0
        %965 = vmatpush2.msra.mxu0 0.0
        %966 = vmatprep.subr.mxu0 0.0
        %967 = vmatpush2.msra.mxu0 0.0
        %968 = vmatprep.subr.mxu0 0.0
        %969 = vmatpush2.msra.mxu0 0.0
        %970 = vmatprep.subr.mxu0 0.0
        %971 = vmatpush2.msra.mxu0 0.0
        %972 = vmatprep.subr.mxu0 0.0
        %973 = vmatpush2.msra.mxu0 0.0
        %974 = vmatprep.subr.mxu0 0.0
        %975 = vmatpush2.msra.mxu0 0.0
        %976 = vmatprep.subr.mxu0 0.0
        %977 = vmatpush2.msra.mxu0 0.0
        %978 = vmatprep.subr.mxu0 0.0
        %979 = vmatpush2.msra.mxu0 0.0
        %980 = vmatprep.subr.mxu0 0.0
        %981 = vmatpush2.msra.mxu0 0.0
        %982 = vmatprep.mubr.f32.mxu0 0.0
        %983 = vmatmul.mubr.f32.gmra.mxu0 %v904
        %v984 = vpop.f32.mrf.mxu0
        %v985 = vadd.f32 0.0, %v984
        %v986 = vpop.f32.mrf.mxu0
        %v987 = vadd.f32 0.0, %v986
        %988 = vmatprep.mubr.f32.mxu0 0.0
        %989 = vmatmul.mubr.f32.gmra.mxu0 %v907
        %v990 = vpop.f32.mrf.mxu0
        %v991 = vadd.f32 0.0, %v990
        %v992 = vpop.f32.mrf.mxu0
        %v993 = vadd.f32 0.0, %v992
        %994 = vmatprep.mubr.f32.mxu0 0.0
        %995 = vmatmul.mubr.f32.gmra.mxu0 %v910
        %v996 = vpop.f32.mrf.mxu0
        %v997 = vadd.f32 0.0, %v996
        %v998 = vpop.f32.mrf.mxu0
        %v999 = vadd.f32 0.0, %v998
        %1000 = vdwg.mxu0
        %v1001 = vadd.f32 %v885, %v985
        %v1002 = vadd.f32 %v886, %v987
        %v1003 = vadd.f32 %v887, %v991
        %v1004 = vadd.f32 %v888, %v993
        %v1005 = vadd.f32 %v889, %v997
        %v1006 = vadd.f32 %v890, %v999
        %v1007 = vld [vmem:[%s5] sm:$0xff]
        %v1008 = vld [vmem:[%s5 + $0x8] sm:$0xf]
        %vm1009 = vcmask 195584
        %v1011 = vsel %vm1009, %v1007, 0
        %v1014 = vsel %vm1009, %v1008, 0
        %1016 = vmatprep.subr.mxu0 0.0
        %1017 = vmatpush1.msra.mxu0 0.0
        %1018 = vmatprep.subr.mxu0 0.0
        %1019 = vmatpush1.msra.mxu0 0.0
        %1020 = vmatprep.subr.mxu0 0.0
        %1021 = vmatpush1.msra.mxu0 0.0
        %1022 = vmatprep.subr.mxu0 0.0
        %1023 = vmatpush1.msra.mxu0 0.0
        %1024 = vmatprep.subr.mxu0 0.0
        %1025 = vmatpush1.msra.mxu0 0.0
        %1026 = vmatprep.subr.mxu0 0.0
        %1027 = vmatpush1.msra.mxu0 0.0
        %1028 = vmatprep.subr.mxu0 0.0
        %1029 = vmatpush1.msra.mxu0 0.0
        %1030 = vmatprep.subr.mxu0 0.0
        %1031 = vmatpush1.msra.mxu0 0.0
        %1032 = vmatprep.subr.mxu0 0.0
        %1033 = vmatpush1.msra.mxu0 0.0
        %1034 = vmatprep.subr.mxu0 0.0
        %1035 = vmatpush1.msra.mxu0 0.0
        %1036 = vmatprep.subr.mxu0 0.0
        %1037 = vmatpush1.msra.mxu0 0.0
        %1038 = vmatprep.subr.mxu0 0.0
        %1039 = vmatpush1.msra.mxu0 0.0
        %1040 = vmatprep.subr.mxu0 0.0
        %1041 = vmatpush1.msra.mxu0 0.0
        %1042 = vmatprep.subr.mxu0 %v1006
        %1043 = vmatpush1.msra.mxu0 %v1005
        %1044 = vmatprep.subr.mxu0 %v1004
        %1045 = vmatpush1.msra.mxu0 %v1003
        %1046 = vmatprep.subr.mxu0 %v1002
        %1047 = vmatpush1.msra.mxu0 %v1001
        %1048 = vmatprep.subr.mxu0 0.0
        %1049 = vmatpush2.msra.mxu0 0.0
        %1050 = vmatprep.subr.mxu0 0.0
        %1051 = vmatpush2.msra.mxu0 0.0
        %1052 = vmatprep.subr.mxu0 0.0
        %1053 = vmatpush2.msra.mxu0 0.0
        %1054 = vmatprep.subr.mxu0 0.0
        %1055 = vmatpush2.msra.mxu0 0.0
        %1056 = vmatprep.subr.mxu0 0.0
        %1057 = vmatpush2.msra.mxu0 0.0
        %1058 = vmatprep.subr.mxu0 0.0
        %1059 = vmatpush2.msra.mxu0 0.0
        %1060 = vmatprep.subr.mxu0 0.0
        %1061 = vmatpush2.msra.mxu0 0.0
        %1062 = vmatprep.subr.mxu0 0.0
        %1063 = vmatpush2.msra.mxu0 0.0
        %1064 = vmatprep.subr.mxu0 0.0
        %1065 = vmatpush2.msra.mxu0 0.0
        %1066 = vmatprep.subr.mxu0 0.0
        %1067 = vmatpush2.msra.mxu0 0.0
        %1068 = vmatprep.subr.mxu0 0.0
        %1069 = vmatpush2.msra.mxu0 0.0
        %1070 = vmatprep.subr.mxu0 0.0
        %1071 = vmatpush2.msra.mxu0 0.0
        %1072 = vmatprep.subr.mxu0 0.0
        %1073 = vmatpush2.msra.mxu0 0.0
        %1074 = vmatprep.subr.mxu0 0.0
        %1075 = vmatpush2.msra.mxu0 0.0
        %1076 = vmatprep.subr.mxu0 0.0
        %1077 = vmatpush2.msra.mxu0 0.0
        %1078 = vmatprep.subr.mxu0 0.0
        %1079 = vmatpush2.msra.mxu0 0.0
        %1080 = vmatprep.mubr.f32.mxu0 0.0
        %1081 = vmatmul.mubr.f32.gmra.mxu0 %v1011
        %v1082 = vpop.f32.mrf.mxu0
        %v1083 = vadd.f32 0.0, %v1082
        %v1084 = vpop.f32.mrf.mxu0
        %v1085 = vadd.f32 0.0, %v1084
        %1086 = vmatprep.mubr.f32.mxu0 0.0
        %1087 = vmatmul.mubr.f32.gmra.mxu0 %v1014
        %v1088 = vpop.f32.mrf.mxu0
        %v1089 = vadd.f32 0.0, %v1088
        %v1090 = vpop.f32.mrf.mxu0
        %v1091 = vadd.f32 0.0, %v1090
        %1092 = vdwg.mxu0
        %s1093 = scalar_lea.vmem %s5, 16
        %v1094 = vld [vmem:[%s1093] sm:$0xff]
        %v1095 = vld [vmem:[%s1093 + $0x8] sm:$0xf]
        %v1097 = vsel %vm1009, %v1094, 0
        %v1100 = vsel %vm1009, %v1095, 0
        %1102 = vmatprep.subr.mxu0 0.0
        %1103 = vmatpush1.msra.mxu0 0.0
        %1104 = vmatprep.subr.mxu0 0.0
        %1105 = vmatpush1.msra.mxu0 0.0
        %1106 = vmatprep.subr.mxu0 0.0
        %1107 = vmatpush1.msra.mxu0 0.0
        %1108 = vmatprep.subr.mxu0 0.0
        %1109 = vmatpush1.msra.mxu0 0.0
        %1110 = vmatprep.subr.mxu0 0.0
        %1111 = vmatpush1.msra.mxu0 0.0
        %1112 = vmatprep.subr.mxu0 0.0
        %1113 = vmatpush1.msra.mxu0 0.0
        %1114 = vmatprep.subr.mxu0 0.0
        %1115 = vmatpush1.msra.mxu0 0.0
        %1116 = vmatprep.subr.mxu0 0.0
        %1117 = vmatpush1.msra.mxu0 0.0
        %1118 = vmatprep.subr.mxu0 0.0
        %1119 = vmatpush1.msra.mxu0 0.0
        %1120 = vmatprep.subr.mxu0 0.0
        %1121 = vmatpush1.msra.mxu0 0.0
        %1122 = vmatprep.subr.mxu0 0.0
        %1123 = vmatpush1.msra.mxu0 0.0
        %1124 = vmatprep.subr.mxu0 0.0
        %1125 = vmatpush1.msra.mxu0 0.0
        %1126 = vmatprep.subr.mxu0 0.0
        %1127 = vmatpush1.msra.mxu0 0.0
        %1128 = vmatprep.subr.mxu0 %v1006
        %1129 = vmatpush1.msra.mxu0 %v1005
        %1130 = vmatprep.subr.mxu0 %v1004
        %1131 = vmatpush1.msra.mxu0 %v1003
        %1132 = vmatprep.subr.mxu0 %v1002
        %1133 = vmatpush1.msra.mxu0 %v1001
        %1134 = vmatprep.subr.mxu0 0.0
        %1135 = vmatpush2.msra.mxu0 0.0
        %1136 = vmatprep.subr.mxu0 0.0
        %1137 = vmatpush2.msra.mxu0 0.0
        %1138 = vmatprep.subr.mxu0 0.0
        %1139 = vmatpush2.msra.mxu0 0.0
        %1140 = vmatprep.subr.mxu0 0.0
        %1141 = vmatpush2.msra.mxu0 0.0
        %1142 = vmatprep.subr.mxu0 0.0
        %1143 = vmatpush2.msra.mxu0 0.0
        %1144 = vmatprep.subr.mxu0 0.0
        %1145 = vmatpush2.msra.mxu0 0.0
        %1146 = vmatprep.subr.mxu0 0.0
        %1147 = vmatpush2.msra.mxu0 0.0
        %1148 = vmatprep.subr.mxu0 0.0
        %1149 = vmatpush2.msra.mxu0 0.0
        %1150 = vmatprep.subr.mxu0 0.0
        %1151 = vmatpush2.msra.mxu0 0.0
        %1152 = vmatprep.subr.mxu0 0.0
        %1153 = vmatpush2.msra.mxu0 0.0
        %1154 = vmatprep.subr.mxu0 0.0
        %1155 = vmatpush2.msra.mxu0 0.0
        %1156 = vmatprep.subr.mxu0 0.0
        %1157 = vmatpush2.msra.mxu0 0.0
        %1158 = vmatprep.subr.mxu0 0.0
        %1159 = vmatpush2.msra.mxu0 0.0
        %1160 = vmatprep.subr.mxu0 0.0
        %1161 = vmatpush2.msra.mxu0 0.0
        %1162 = vmatprep.subr.mxu0 0.0
        %1163 = vmatpush2.msra.mxu0 0.0
        %1164 = vmatprep.subr.mxu0 0.0
        %1165 = vmatpush2.msra.mxu0 0.0
        %1166 = vmatprep.mubr.f32.mxu0 0.0
        %1167 = vmatmul.mubr.f32.gmra.mxu0 %v1097
        %v1168 = vpop.f32.mrf.mxu0
        %v1169 = vadd.f32 0.0, %v1168
        %v1170 = vpop.f32.mrf.mxu0
        %v1171 = vadd.f32 0.0, %v1170
        %1172 = vmatprep.mubr.f32.mxu0 0.0
        %1173 = vmatmul.mubr.f32.gmra.mxu0 %v1100
        %v1174 = vpop.f32.mrf.mxu0
        %v1175 = vadd.f32 0.0, %v1174
        %v1176 = vpop.f32.mrf.mxu0
        %v1177 = vadd.f32 0.0, %v1176
        %1178 = vdwg.mxu0
        %v1179 = vld [vmem:[%s6] sm:$0xff]
        %v1180 = vld [vmem:[%s6 + $0x8] sm:$0xff]
        %v1181 = vld [vmem:[%s6 + $0x10] sm:$0xff]
        %v1182 = vld [vmem:[%s6 + $0x18] sm:$0xff]
        %v1183 = vld [vmem:[%s6 + $0x20] sm:$0xff]
        %v1184 = vld [vmem:[%s6 + $0x28] sm:$0xff]
        %v1185 = vld [vmem:[%s6 + $0x30] sm:$0xff]
        %v1186 = vld [vmem:[%s6 + $0x38] sm:$0xff]
        %v1187 = vld [vmem:[%s6 + $0x40] sm:$0xff]
        %v1188 = vld [vmem:[%s6 + $0x48] sm:$0xff]
        %v1189 = vld [vmem:[%s6 + $0x50] sm:$0xff]
        %v1190 = vld [vmem:[%s6 + $0x58] sm:$0xff]
        %v1191 = vld [vmem:[%s6 + $0x60] sm:$0xff]
        %v1192 = vld [vmem:[%s6 + $0x68] sm:$0xff]
        %v1193 = vld [vmem:[%s6 + $0x70] sm:$0xff]
        %v1194 = vld [vmem:[%s6 + $0x78] sm:$0xff]
        %v1195 = vld [vmem:[%s6 + $0x80] sm:$0xff]
        %v1196 = vld [vmem:[%s6 + $0x88] sm:$0xff]
        %v1197 = vld [vmem:[%s6 + $0x90] sm:$0xff]
        %v1198 = vld [vmem:[%s6 + $0x98] sm:$0xff]
        %v1199 = vld [vmem:[%s6 + $0xa0] sm:$0xff]
        %v1200 = vld [vmem:[%s6 + $0xa8] sm:$0xff]
        %v1201 = vld [vmem:[%s6 + $0xb0] sm:$0xff]
        %v1202 = vld [vmem:[%s6 + $0xb8] sm:$0xff]
        %v1203 = vld [vmem:[%s6 + $0xc0] sm:$0xff]
        %v1204 = vld [vmem:[%s6 + $0xc8] sm:$0xff]
        %v1205 = vld [vmem:[%s6 + $0xd0] sm:$0xff]
        %v1206 = vld [vmem:[%s6 + $0xd8] sm:$0xff]
        %v1207 = vld [vmem:[%s6 + $0xe0] sm:$0xff]
        %v1208 = vld [vmem:[%s6 + $0xe8] sm:$0xff]
        %vm1209 = vcmask 916480
        %v1211 = vsel %vm1209, %v1085, 0
        %v1214 = vsel %vm1209, %v1091, 0
        %1216 = vmatprep.subr.mxu0 0.0
        %1217 = vmatpush1.msra.mxu0 %v1194
        %1218 = vmatprep.subr.mxu0 0.0
        %1219 = vmatpush1.msra.mxu0 %v1193
        %1220 = vmatprep.subr.mxu0 0.0
        %1221 = vmatpush1.msra.mxu0 %v1192
        %1222 = vmatprep.subr.mxu0 0.0
        %1223 = vmatpush1.msra.mxu0 %v1191
        %1224 = vmatprep.subr.mxu0 0.0
        %1225 = vmatpush1.msra.mxu0 %v1190
        %1226 = vmatprep.subr.mxu0 0.0
        %1227 = vmatpush1.msra.mxu0 %v1189
        %1228 = vmatprep.subr.mxu0 0.0
        %1229 = vmatpush1.msra.mxu0 %v1188
        %1230 = vmatprep.subr.mxu0 0.0
        %1231 = vmatpush1.msra.mxu0 %v1187
        %1232 = vmatprep.subr.mxu0 0.0
        %1233 = vmatpush1.msra.mxu0 %v1186
        %1234 = vmatprep.subr.mxu0 0.0
        %1235 = vmatpush1.msra.mxu0 %v1185
        %1236 = vmatprep.subr.mxu0 0.0
        %1237 = vmatpush1.msra.mxu0 %v1184
        %1238 = vmatprep.subr.mxu0 0.0
        %1239 = vmatpush1.msra.mxu0 %v1183
        %1240 = vmatprep.subr.mxu0 0.0
        %1241 = vmatpush1.msra.mxu0 %v1182
        %1242 = vmatprep.subr.mxu0 0.0
        %1243 = vmatpush1.msra.mxu0 %v1181
        %1244 = vmatprep.subr.mxu0 0.0
        %1245 = vmatpush1.msra.mxu0 %v1180
        %1246 = vmatprep.subr.mxu0 0.0
        %1247 = vmatpush1.msra.mxu0 %v1179
        %1248 = vmatprep.subr.mxu0 0.0
        %1249 = vmatpush2.msra.mxu0 0.0
        %1250 = vmatprep.subr.mxu0 0.0
        %1251 = vmatpush2.msra.mxu0 0.0
        %1252 = vmatprep.subr.mxu0 0.0
        %1253 = vmatpush2.msra.mxu0 %v1208
        %1254 = vmatprep.subr.mxu0 0.0
        %1255 = vmatpush2.msra.mxu0 %v1207
        %1256 = vmatprep.subr.mxu0 0.0
        %1257 = vmatpush2.msra.mxu0 %v1206
        %1258 = vmatprep.subr.mxu0 0.0
        %1259 = vmatpush2.msra.mxu0 %v1205
        %1260 = vmatprep.subr.mxu0 0.0
        %1261 = vmatpush2.msra.mxu0 %v1204
        %1262 = vmatprep.subr.mxu0 0.0
        %1263 = vmatpush2.msra.mxu0 %v1203
        %1264 = vmatprep.subr.mxu0 0.0
        %1265 = vmatpush2.msra.mxu0 %v1202
        %1266 = vmatprep.subr.mxu0 0.0
        %1267 = vmatpush2.msra.mxu0 %v1201
        %1268 = vmatprep.subr.mxu0 0.0
        %1269 = vmatpush2.msra.mxu0 %v1200
        %1270 = vmatprep.subr.mxu0 0.0
        %1271 = vmatpush2.msra.mxu0 %v1199
        %1272 = vmatprep.subr.mxu0 0.0
        %1273 = vmatpush2.msra.mxu0 %v1198
        %1274 = vmatprep.subr.mxu0 0.0
        %1275 = vmatpush2.msra.mxu0 %v1197
        %1276 = vmatprep.subr.mxu0 0.0
        %1277 = vmatpush2.msra.mxu0 %v1196
        %1278 = vmatprep.subr.mxu0 0.0
        %1279 = vmatpush2.msra.mxu0 %v1195
        %1280 = vmatprep.mubr.f32.mxu0 %v1211
        %1281 = vmatmul.mubr.f32.gmra.mxu0 %v1083
        %v1282 = vpop.f32.mrf.mxu0
        %v1283 = vadd.f32 0.0, %v1282
        %v1284 = vpop.f32.mrf.mxu0
        %1285 = vmatprep.mubr.f32.mxu0 %v1214
        %1286 = vmatmul.mubr.f32.gmra.mxu0 %v1089
        %v1287 = vpop.f32.mrf.mxu0
        %v1288 = vadd.f32 0.0, %v1287
        %v1289 = vpop.f32.mrf.mxu0
        %1290 = vdwg.mxu0
        %s1291 = scalar_lea.vmem %s6, 240
        %v1292 = vld [vmem:[%s1291] sm:$0xff]
        %v1293 = vld [vmem:[%s1291 + $0x8] sm:$0xff]
        %v1294 = vld [vmem:[%s1291 + $0x10] sm:$0xff]
        %v1295 = vld [vmem:[%s1291 + $0x18] sm:$0xff]
        %v1296 = vld [vmem:[%s1291 + $0x20] sm:$0xff]
        %v1297 = vld [vmem:[%s1291 + $0x28] sm:$0xff]
        %v1298 = vld [vmem:[%s1291 + $0x30] sm:$0xff]
        %v1299 = vld [vmem:[%s1291 + $0x38] sm:$0xff]
        %v1300 = vld [vmem:[%s1291 + $0x40] sm:$0xff]
        %v1301 = vld [vmem:[%s1291 + $0x48] sm:$0xff]
        %v1302 = vld [vmem:[%s1291 + $0x50] sm:$0xff]
        %v1303 = vld [vmem:[%s1291 + $0x58] sm:$0xff]
        %v1304 = vld [vmem:[%s1291 + $0x60] sm:$0xff]
        %v1305 = vld [vmem:[%s1291 + $0x68] sm:$0xff]
        %v1306 = vld [vmem:[%s1291 + $0x70] sm:$0xff]
        %v1307 = vld [vmem:[%s1291 + $0x78] sm:$0xff]
        %v1308 = vld [vmem:[%s1291 + $0x80] sm:$0xff]
        %v1309 = vld [vmem:[%s1291 + $0x88] sm:$0xff]
        %v1310 = vld [vmem:[%s1291 + $0x90] sm:$0xff]
        %v1311 = vld [vmem:[%s1291 + $0x98] sm:$0xff]
        %v1312 = vld [vmem:[%s1291 + $0xa0] sm:$0xff]
        %v1313 = vld [vmem:[%s1291 + $0xa8] sm:$0xff]
        %v1314 = vld [vmem:[%s1291 + $0xb0] sm:$0xff]
        %v1315 = vld [vmem:[%s1291 + $0xb8] sm:$0xff]
        %v1316 = vld [vmem:[%s1291 + $0xc0] sm:$0xff]
        %v1317 = vld [vmem:[%s1291 + $0xc8] sm:$0xff]
        %v1318 = vld [vmem:[%s1291 + $0xd0] sm:$0xff]
        %v1319 = vld [vmem:[%s1291 + $0xd8] sm:$0xff]
        %v1320 = vld [vmem:[%s1291 + $0xe0] sm:$0xff]
        %v1321 = vld [vmem:[%s1291 + $0xe8] sm:$0xff]
        %1322 = vmatprep.subr.mxu0 0.0
        %1323 = vmatpush1.msra.mxu0 %v1307
        %1324 = vmatprep.subr.mxu0 0.0
        %1325 = vmatpush1.msra.mxu0 %v1306
        %1326 = vmatprep.subr.mxu0 0.0
        %1327 = vmatpush1.msra.mxu0 %v1305
        %1328 = vmatprep.subr.mxu0 0.0
        %1329 = vmatpush1.msra.mxu0 %v1304
        %1330 = vmatprep.subr.mxu0 0.0
        %1331 = vmatpush1.msra.mxu0 %v1303
        %1332 = vmatprep.subr.mxu0 0.0
        %1333 = vmatpush1.msra.mxu0 %v1302
        %1334 = vmatprep.subr.mxu0 0.0
        %1335 = vmatpush1.msra.mxu0 %v1301
        %1336 = vmatprep.subr.mxu0 0.0
        %1337 = vmatpush1.msra.mxu0 %v1300
        %1338 = vmatprep.subr.mxu0 0.0
        %1339 = vmatpush1.msra.mxu0 %v1299
        %1340 = vmatprep.subr.mxu0 0.0
        %1341 = vmatpush1.msra.mxu0 %v1298
        %1342 = vmatprep.subr.mxu0 0.0
        %1343 = vmatpush1.msra.mxu0 %v1297
        %1344 = vmatprep.subr.mxu0 0.0
        %1345 = vmatpush1.msra.mxu0 %v1296
        %1346 = vmatprep.subr.mxu0 0.0
        %1347 = vmatpush1.msra.mxu0 %v1295
        %1348 = vmatprep.subr.mxu0 0.0
        %1349 = vmatpush1.msra.mxu0 %v1294
        %1350 = vmatprep.subr.mxu0 0.0
        %1351 = vmatpush1.msra.mxu0 %v1293
        %1352 = vmatprep.subr.mxu0 0.0
        %1353 = vmatpush1.msra.mxu0 %v1292
        %1354 = vmatprep.subr.mxu0 0.0
        %1355 = vmatpush2.msra.mxu0 0.0
        %1356 = vmatprep.subr.mxu0 0.0
        %1357 = vmatpush2.msra.mxu0 0.0
        %1358 = vmatprep.subr.mxu0 0.0
        %1359 = vmatpush2.msra.mxu0 %v1321
        %1360 = vmatprep.subr.mxu0 0.0
        %1361 = vmatpush2.msra.mxu0 %v1320
        %1362 = vmatprep.subr.mxu0 0.0
        %1363 = vmatpush2.msra.mxu0 %v1319
        %1364 = vmatprep.subr.mxu0 0.0
        %1365 = vmatpush2.msra.mxu0 %v1318
        %1366 = vmatprep.subr.mxu0 0.0
        %1367 = vmatpush2.msra.mxu0 %v1317
        %1368 = vmatprep.subr.mxu0 0.0
        %1369 = vmatpush2.msra.mxu0 %v1316
        %1370 = vmatprep.subr.mxu0 0.0
        %1371 = vmatpush2.msra.mxu0 %v1315
        %1372 = vmatprep.subr.mxu0 0.0
        %1373 = vmatpush2.msra.mxu0 %v1314
        %1374 = vmatprep.subr.mxu0 0.0
        %1375 = vmatpush2.msra.mxu0 %v1313
        %1376 = vmatprep.subr.mxu0 0.0
        %1377 = vmatpush2.msra.mxu0 %v1312
        %1378 = vmatprep.subr.mxu0 0.0
        %1379 = vmatpush2.msra.mxu0 %v1311
        %1380 = vmatprep.subr.mxu0 0.0
        %1381 = vmatpush2.msra.mxu0 %v1310
        %1382 = vmatprep.subr.mxu0 0.0
        %1383 = vmatpush2.msra.mxu0 %v1309
        %1384 = vmatprep.subr.mxu0 0.0
        %1385 = vmatpush2.msra.mxu0 %v1308
        %1386 = vmatprep.mubr.f32.mxu0 %v1211
        %1387 = vmatmul.mubr.f32.gmra.mxu0 %v1083
        %v1388 = vpop.f32.mrf.mxu0
        %v1389 = vadd.f32 0.0, %v1388
        %v1390 = vpop.f32.mrf.mxu0
        %1391 = vmatprep.mubr.f32.mxu0 %v1214
        %1392 = vmatmul.mubr.f32.gmra.mxu0 %v1089
        %v1393 = vpop.f32.mrf.mxu0
        %v1394 = vadd.f32 0.0, %v1393
        %v1395 = vpop.f32.mrf.mxu0
        %1396 = vdwg.mxu0
        %v1397 = vmax.f32 %v1283, %v1389
        %v1398 = vmax.f32 %v1288, %v1394
        %v1400 = vsel %vm1209, %v1171, 0
        %v1403 = vsel %vm1209, %v1177, 0
        %1405 = vmatprep.subr.mxu0 0.0
        %1406 = vmatpush1.msra.mxu0 %v1194
        %1407 = vmatprep.subr.mxu0 0.0
        %1408 = vmatpush1.msra.mxu0 %v1193
        %1409 = vmatprep.subr.mxu0 0.0
        %1410 = vmatpush1.msra.mxu0 %v1192
        %1411 = vmatprep.subr.mxu0 0.0
        %1412 = vmatpush1.msra.mxu0 %v1191
        %1413 = vmatprep.subr.mxu0 0.0
        %1414 = vmatpush1.msra.mxu0 %v1190
        %1415 = vmatprep.subr.mxu0 0.0
        %1416 = vmatpush1.msra.mxu0 %v1189
        %1417 = vmatprep.subr.mxu0 0.0
        %1418 = vmatpush1.msra.mxu0 %v1188
        %1419 = vmatprep.subr.mxu0 0.0
        %1420 = vmatpush1.msra.mxu0 %v1187
        %1421 = vmatprep.subr.mxu0 0.0
        %1422 = vmatpush1.msra.mxu0 %v1186
        %1423 = vmatprep.subr.mxu0 0.0
        %1424 = vmatpush1.msra.mxu0 %v1185
        %1425 = vmatprep.subr.mxu0 0.0
        %1426 = vmatpush1.msra.mxu0 %v1184
        %1427 = vmatprep.subr.mxu0 0.0
        %1428 = vmatpush1.msra.mxu0 %v1183
        %1429 = vmatprep.subr.mxu0 0.0
        %1430 = vmatpush1.msra.mxu0 %v1182
        %1431 = vmatprep.subr.mxu0 0.0
        %1432 = vmatpush1.msra.mxu0 %v1181
        %1433 = vmatprep.subr.mxu0 0.0
        %1434 = vmatpush1.msra.mxu0 %v1180
        %1435 = vmatprep.subr.mxu0 0.0
        %1436 = vmatpush1.msra.mxu0 %v1179
        %1437 = vmatprep.subr.mxu0 0.0
        %1438 = vmatpush2.msra.mxu0 0.0
        %1439 = vmatprep.subr.mxu0 0.0
        %1440 = vmatpush2.msra.mxu0 0.0
        %1441 = vmatprep.subr.mxu0 0.0
        %1442 = vmatpush2.msra.mxu0 %v1208
        %1443 = vmatprep.subr.mxu0 0.0
        %1444 = vmatpush2.msra.mxu0 %v1207
        %1445 = vmatprep.subr.mxu0 0.0
        %1446 = vmatpush2.msra.mxu0 %v1206
        %1447 = vmatprep.subr.mxu0 0.0
        %1448 = vmatpush2.msra.mxu0 %v1205
        %1449 = vmatprep.subr.mxu0 0.0
        %1450 = vmatpush2.msra.mxu0 %v1204
        %1451 = vmatprep.subr.mxu0 0.0
        %1452 = vmatpush2.msra.mxu0 %v1203
        %1453 = vmatprep.subr.mxu0 0.0
        %1454 = vmatpush2.msra.mxu0 %v1202
        %1455 = vmatprep.subr.mxu0 0.0
        %1456 = vmatpush2.msra.mxu0 %v1201
        %1457 = vmatprep.subr.mxu0 0.0
        %1458 = vmatpush2.msra.mxu0 %v1200
        %1459 = vmatprep.subr.mxu0 0.0
        %1460 = vmatpush2.msra.mxu0 %v1199
        %1461 = vmatprep.subr.mxu0 0.0
        %1462 = vmatpush2.msra.mxu0 %v1198
        %1463 = vmatprep.subr.mxu0 0.0
        %1464 = vmatpush2.msra.mxu0 %v1197
        %1465 = vmatprep.subr.mxu0 0.0
        %1466 = vmatpush2.msra.mxu0 %v1196
        %1467 = vmatprep.subr.mxu0 0.0
        %1468 = vmatpush2.msra.mxu0 %v1195
        %1469 = vmatprep.mubr.f32.mxu0 %v1400
        %1470 = vmatmul.mubr.f32.gmra.mxu0 %v1169
        %v1471 = vpop.f32.mrf.mxu0
        %v1472 = vadd.f32 0.0, %v1471
        %v1473 = vpop.f32.mrf.mxu0
        %1474 = vmatprep.mubr.f32.mxu0 %v1403
        %1475 = vmatmul.mubr.f32.gmra.mxu0 %v1175
        %v1476 = vpop.f32.mrf.mxu0
        %v1477 = vadd.f32 0.0, %v1476
        %v1478 = vpop.f32.mrf.mxu0
        %1479 = vdwg.mxu0
        %1480 = vmatprep.subr.mxu0 0.0
        %1481 = vmatpush1.msra.mxu0 %v1307
        %1482 = vmatprep.subr.mxu0 0.0
        %1483 = vmatpush1.msra.mxu0 %v1306
        %1484 = vmatprep.subr.mxu0 0.0
        %1485 = vmatpush1.msra.mxu0 %v1305
        %1486 = vmatprep.subr.mxu0 0.0
        %1487 = vmatpush1.msra.mxu0 %v1304
        %1488 = vmatprep.subr.mxu0 0.0
        %1489 = vmatpush1.msra.mxu0 %v1303
        %1490 = vmatprep.subr.mxu0 0.0
        %1491 = vmatpush1.msra.mxu0 %v1302
        %1492 = vmatprep.subr.mxu0 0.0
        %1493 = vmatpush1.msra.mxu0 %v1301
        %1494 = vmatprep.subr.mxu0 0.0
        %1495 = vmatpush1.msra.mxu0 %v1300
        %1496 = vmatprep.subr.mxu0 0.0
        %1497 = vmatpush1.msra.mxu0 %v1299
        %1498 = vmatprep.subr.mxu0 0.0
        %1499 = vmatpush1.msra.mxu0 %v1298
        %1500 = vmatprep.subr.mxu0 0.0
        %1501 = vmatpush1.msra.mxu0 %v1297
        %1502 = vmatprep.subr.mxu0 0.0
        %1503 = vmatpush1.msra.mxu0 %v1296
        %1504 = vmatprep.subr.mxu0 0.0
        %1505 = vmatpush1.msra.mxu0 %v1295
        %1506 = vmatprep.subr.mxu0 0.0
        %1507 = vmatpush1.msra.mxu0 %v1294
        %1508 = vmatprep.subr.mxu0 0.0
        %1509 = vmatpush1.msra.mxu0 %v1293
        %1510 = vmatprep.subr.mxu0 0.0
        %1511 = vmatpush1.msra.mxu0 %v1292
        %1512 = vmatprep.subr.mxu0 0.0
        %1513 = vmatpush2.msra.mxu0 0.0
        %1514 = vmatprep.subr.mxu0 0.0
        %1515 = vmatpush2.msra.mxu0 0.0
        %1516 = vmatprep.subr.mxu0 0.0
        %1517 = vmatpush2.msra.mxu0 %v1321
        %1518 = vmatprep.subr.mxu0 0.0
        %1519 = vmatpush2.msra.mxu0 %v1320
        %1520 = vmatprep.subr.mxu0 0.0
        %1521 = vmatpush2.msra.mxu0 %v1319
        %1522 = vmatprep.subr.mxu0 0.0
        %1523 = vmatpush2.msra.mxu0 %v1318
        %1524 = vmatprep.subr.mxu0 0.0
        %1525 = vmatpush2.msra.mxu0 %v1317
        %1526 = vmatprep.subr.mxu0 0.0
        %1527 = vmatpush2.msra.mxu0 %v1316
        %1528 = vmatprep.subr.mxu0 0.0
        %1529 = vmatpush2.msra.mxu0 %v1315
        %1530 = vmatprep.subr.mxu0 0.0
        %1531 = vmatpush2.msra.mxu0 %v1314
        %1532 = vmatprep.subr.mxu0 0.0
        %1533 = vmatpush2.msra.mxu0 %v1313
        %1534 = vmatprep.subr.mxu0 0.0
        %1535 = vmatpush2.msra.mxu0 %v1312
        %1536 = vmatprep.subr.mxu0 0.0
        %1537 = vmatpush2.msra.mxu0 %v1311
        %1538 = vmatprep.subr.mxu0 0.0
        %1539 = vmatpush2.msra.mxu0 %v1310
        %1540 = vmatprep.subr.mxu0 0.0
        %1541 = vmatpush2.msra.mxu0 %v1309
        %1542 = vmatprep.subr.mxu0 0.0
        %1543 = vmatpush2.msra.mxu0 %v1308
        %1544 = vmatprep.mubr.f32.mxu0 %v1400
        %1545 = vmatmul.mubr.f32.gmra.mxu0 %v1169
        %v1546 = vpop.f32.mrf.mxu0
        %v1547 = vadd.f32 0.0, %v1546
        %v1548 = vpop.f32.mrf.mxu0
        %1549 = vmatprep.mubr.f32.mxu0 %v1403
        %1550 = vmatmul.mubr.f32.gmra.mxu0 %v1175
        %v1551 = vpop.f32.mrf.mxu0
        %v1552 = vadd.f32 0.0, %v1551
        %v1553 = vpop.f32.mrf.mxu0
        %1554 = vdwg.mxu0
        %v1555 = vmax.f32 %v1472, %v1547
        %v1556 = vmax.f32 %v1477, %v1552
        %v1557 = vmax.f32 %v1397, %v1555
        %v1558 = vmax.f32 %v1398, %v1556
        %v1559 = vld [vmem:[%s2] sm:$0x1]
        %v1561 = vlaneseq
        %v1562 = vshrl.u32 %v1561, 7
        %v1563 = vsub.s32 0, %v1562
        %v1564 = vrot.slane %v1559, %v1563
        %v1566 = vadd.f32 %v1557, %v1564
        %v1567 = vadd.f32 %v1558, %v1564
        %v1568 = vmax.f32 %v1566, 0.0
        %v1569 = vmax.f32 %v1567, 0.0
        %vm1570 = vcmask 982016
        %1571 = vst.msk [vmem:[#allocation2] sm:$0xff] %vm1570, %v1568
        %vm1572 = vcmask 977920
        %1573 = vst.msk [vmem:[#allocation2 + $0x8] sm:$0xf] %vm1572, %v1569
        %v1574 = vld [vmem:[#allocation2] sm:$0xff]
        %v1575 = vld [vmem:[%s3] sm:$0xff]
        %v1576 = vld [vmem:[%s3 + $0x8] sm:$0xff]
        %v1577 = vld [vmem:[%s3 + $0x10] sm:$0xff]
        %v1578 = vld [vmem:[%s3 + $0x18] sm:$0xff]
        %v1579 = vld [vmem:[%s3 + $0x20] sm:$0xff]
        %v1580 = vld [vmem:[%s3 + $0x28] sm:$0xff]
        %v1581 = vld [vmem:[%s3 + $0x30] sm:$0xff]
        %v1582 = vld [vmem:[%s3 + $0x38] sm:$0xff]
        %v1583 = vld [vmem:[%s3 + $0x40] sm:$0xff]
        %v1584 = vld [vmem:[%s3 + $0x48] sm:$0xff]
        %v1585 = vld [vmem:[%s3 + $0x50] sm:$0xff]
        %v1586 = vld [vmem:[%s3 + $0x58] sm:$0xff]
        %v1587 = vld [vmem:[%s3 + $0x60] sm:$0xff]
        %v1588 = vld [vmem:[%s3 + $0x68] sm:$0xff]
        %v1589 = vld [vmem:[%s3 + $0x70] sm:$0xff]
        %v1590 = vld [vmem:[%s3 + $0x78] sm:$0xff]
        %v1591 = vld [vmem:[%s3 + $0x80] sm:$0xff]
        %v1592 = vld [vmem:[%s3 + $0x88] sm:$0xff]
        %v1593 = vld [vmem:[%s3 + $0x90] sm:$0xff]
        %v1594 = vld [vmem:[%s3 + $0x98] sm:$0xff]
        %v1595 = vld [vmem:[%s3 + $0xa0] sm:$0xff]
        %v1596 = vld [vmem:[%s3 + $0xa8] sm:$0xff]
        %v1597 = vld [vmem:[%s3 + $0xb0] sm:$0xff]
        %v1598 = vld [vmem:[%s3 + $0xb8] sm:$0xff]
        %v1599 = vld [vmem:[%s3 + $0xc0] sm:$0xff]
        %v1600 = vld [vmem:[%s3 + $0xc8] sm:$0xff]
        %v1601 = vld [vmem:[%s3 + $0xd0] sm:$0xff]
        %v1602 = vld [vmem:[%s3 + $0xd8] sm:$0xff]
        %v1603 = vld [vmem:[%s3 + $0xe0] sm:$0xff]
        %v1604 = vld [vmem:[%s3 + $0xe8] sm:$0xff]
        %v1605 = vld [vmem:[#allocation2 + $0x1] sm:$0xff]
        %s1606 = scalar_lea.vmem %s3, 240
        %v1607 = vld [vmem:[%s1606] sm:$0xff]
        %v1608 = vld [vmem:[%s1606 + $0x8] sm:$0xff]
        %v1609 = vld [vmem:[%s1606 + $0x10] sm:$0xff]
        %v1610 = vld [vmem:[%s1606 + $0x18] sm:$0xff]
        %v1611 = vld [vmem:[%s1606 + $0x20] sm:$0xff]
        %v1612 = vld [vmem:[%s1606 + $0x28] sm:$0xff]
        %v1613 = vld [vmem:[%s1606 + $0x30] sm:$0xff]
        %v1614 = vld [vmem:[%s1606 + $0x38] sm:$0xff]
        %v1615 = vld [vmem:[%s1606 + $0x40] sm:$0xff]
        %v1616 = vld [vmem:[%s1606 + $0x48] sm:$0xff]
        %v1617 = vld [vmem:[%s1606 + $0x50] sm:$0xff]
        %v1618 = vld [vmem:[%s1606 + $0x58] sm:$0xff]
        %v1619 = vld [vmem:[%s1606 + $0x60] sm:$0xff]
        %v1620 = vld [vmem:[%s1606 + $0x68] sm:$0xff]
        %v1621 = vld [vmem:[%s1606 + $0x70] sm:$0xff]
        %v1622 = vld [vmem:[%s1606 + $0x78] sm:$0xff]
        %v1623 = vld [vmem:[%s1606 + $0x80] sm:$0xff]
        %v1624 = vld [vmem:[%s1606 + $0x88] sm:$0xff]
        %v1625 = vld [vmem:[%s1606 + $0x90] sm:$0xff]
        %v1626 = vld [vmem:[%s1606 + $0x98] sm:$0xff]
        %v1627 = vld [vmem:[%s1606 + $0xa0] sm:$0xff]
        %v1628 = vld [vmem:[%s1606 + $0xa8] sm:$0xff]
        %v1629 = vld [vmem:[%s1606 + $0xb0] sm:$0xff]
        %v1630 = vld [vmem:[%s1606 + $0xb8] sm:$0xff]
        %v1631 = vld [vmem:[%s1606 + $0xc0] sm:$0xff]
        %v1632 = vld [vmem:[%s1606 + $0xc8] sm:$0xff]
        %v1633 = vld [vmem:[%s1606 + $0xd0] sm:$0xff]
        %v1634 = vld [vmem:[%s1606 + $0xd8] sm:$0xff]
        %v1635 = vld [vmem:[%s1606 + $0xe0] sm:$0xff]
        %v1636 = vld [vmem:[%s1606 + $0xe8] sm:$0xff]
        %v1638 = vsel %vm1570, %v1605, 0
        %1640 = vmatprep.subr.mxu0 0.0
        %1641 = vmatpush1.msra.mxu0 0.0
        %1642 = vmatprep.subr.mxu0 %v1636
        %1643 = vmatpush1.msra.mxu0 %v1635
        %1644 = vmatprep.subr.mxu0 %v1634
        %1645 = vmatpush1.msra.mxu0 %v1633
        %1646 = vmatprep.subr.mxu0 %v1632
        %1647 = vmatpush1.msra.mxu0 %v1631
        %1648 = vmatprep.subr.mxu0 %v1630
        %1649 = vmatpush1.msra.mxu0 %v1629
        %1650 = vmatprep.subr.mxu0 %v1628
        %1651 = vmatpush1.msra.mxu0 %v1627
        %1652 = vmatprep.subr.mxu0 %v1626
        %1653 = vmatpush1.msra.mxu0 %v1625
        %1654 = vmatprep.subr.mxu0 %v1624
        %1655 = vmatpush1.msra.mxu0 %v1623
        %1656 = vmatprep.subr.mxu0 %v1622
        %1657 = vmatpush1.msra.mxu0 %v1621
        %1658 = vmatprep.subr.mxu0 %v1620
        %1659 = vmatpush1.msra.mxu0 %v1619
        %1660 = vmatprep.subr.mxu0 %v1618
        %1661 = vmatpush1.msra.mxu0 %v1617
        %1662 = vmatprep.subr.mxu0 %v1616
        %1663 = vmatpush1.msra.mxu0 %v1615
        %1664 = vmatprep.subr.mxu0 %v1614
        %1665 = vmatpush1.msra.mxu0 %v1613
        %1666 = vmatprep.subr.mxu0 %v1612
        %1667 = vmatpush1.msra.mxu0 %v1611
        %1668 = vmatprep.subr.mxu0 %v1610
        %1669 = vmatpush1.msra.mxu0 %v1609
        %1670 = vmatprep.subr.mxu0 %v1608
        %1671 = vmatpush1.msra.mxu0 %v1607
        %1672 = vmatprep.subr.mxu0 0.0
        %1673 = vmatpush2.msra.mxu0 0.0
        %1674 = vmatprep.subr.mxu0 0.0
        %1675 = vmatpush2.msra.mxu0 0.0
        %1676 = vmatprep.subr.mxu0 0.0
        %1677 = vmatpush2.msra.mxu0 0.0
        %1678 = vmatprep.subr.mxu0 0.0
        %1679 = vmatpush2.msra.mxu0 0.0
        %1680 = vmatprep.subr.mxu0 0.0
        %1681 = vmatpush2.msra.mxu0 0.0
        %1682 = vmatprep.subr.mxu0 0.0
        %1683 = vmatpush2.msra.mxu0 0.0
        %1684 = vmatprep.subr.mxu0 0.0
        %1685 = vmatpush2.msra.mxu0 0.0
        %1686 = vmatprep.subr.mxu0 0.0
        %1687 = vmatpush2.msra.mxu0 0.0
        %1688 = vmatprep.subr.mxu0 0.0
        %1689 = vmatpush2.msra.mxu0 0.0
        %1690 = vmatprep.subr.mxu0 0.0
        %1691 = vmatpush2.msra.mxu0 0.0
        %1692 = vmatprep.subr.mxu0 0.0
        %1693 = vmatpush2.msra.mxu0 0.0
        %1694 = vmatprep.subr.mxu0 0.0
        %1695 = vmatpush2.msra.mxu0 0.0
        %1696 = vmatprep.subr.mxu0 0.0
        %1697 = vmatpush2.msra.mxu0 0.0
        %1698 = vmatprep.subr.mxu0 0.0
        %1699 = vmatpush2.msra.mxu0 0.0
        %1700 = vmatprep.subr.mxu0 0.0
        %1701 = vmatpush2.msra.mxu0 0.0
        %1702 = vmatprep.subr.mxu0 0.0
        %1703 = vmatpush2.msra.mxu0 0.0
        %1704 = vmatprep.mubr.f32.mxu0 0.0
        %1705 = vmatmul.mubr.f32.gmra.mxu0 %v1638
        %v1706 = vpop.f32.mrf.mxu0
        %v1707 = vadd.f32 0.0, %v1706
        %v1708 = vpop.f32.mrf.mxu0
        %v1709 = vadd.f32 0.0, %v1708
        %1710 = vdwg.mxu0
        %v1712 = vsel %vm1570, %v1574, 0
        %1714 = vmatprep.subr.mxu0 0.0
        %1715 = vmatpush1.msra.mxu0 0.0
        %1716 = vmatprep.subr.mxu0 %v1604
        %1717 = vmatpush1.msra.mxu0 %v1603
        %1718 = vmatprep.subr.mxu0 %v1602
        %1719 = vmatpush1.msra.mxu0 %v1601
        %1720 = vmatprep.subr.mxu0 %v1600
        %1721 = vmatpush1.msra.mxu0 %v1599
        %1722 = vmatprep.subr.mxu0 %v1598
        %1723 = vmatpush1.msra.mxu0 %v1597
        %1724 = vmatprep.subr.mxu0 %v1596
        %1725 = vmatpush1.msra.mxu0 %v1595
        %1726 = vmatprep.subr.mxu0 %v1594
        %1727 = vmatpush1.msra.mxu0 %v1593
        %1728 = vmatprep.subr.mxu0 %v1592
        %1729 = vmatpush1.msra.mxu0 %v1591
        %1730 = vmatprep.subr.mxu0 %v1590
        %1731 = vmatpush1.msra.mxu0 %v1589
        %1732 = vmatprep.subr.mxu0 %v1588
        %1733 = vmatpush1.msra.mxu0 %v1587
        %1734 = vmatprep.subr.mxu0 %v1586
        %1735 = vmatpush1.msra.mxu0 %v1585
        %1736 = vmatprep.subr.mxu0 %v1584
        %1737 = vmatpush1.msra.mxu0 %v1583
        %1738 = vmatprep.subr.mxu0 %v1582
        %1739 = vmatpush1.msra.mxu0 %v1581
        %1740 = vmatprep.subr.mxu0 %v1580
        %1741 = vmatpush1.msra.mxu0 %v1579
        %1742 = vmatprep.subr.mxu0 %v1578
        %1743 = vmatpush1.msra.mxu0 %v1577
        %1744 = vmatprep.subr.mxu0 %v1576
        %1745 = vmatpush1.msra.mxu0 %v1575
        %1746 = vmatprep.subr.mxu0 0.0
        %1747 = vmatpush2.msra.mxu0 0.0
        %1748 = vmatprep.subr.mxu0 0.0
        %1749 = vmatpush2.msra.mxu0 0.0
        %1750 = vmatprep.subr.mxu0 0.0
        %1751 = vmatpush2.msra.mxu0 0.0
        %1752 = vmatprep.subr.mxu0 0.0
        %1753 = vmatpush2.msra.mxu0 0.0
        %1754 = vmatprep.subr.mxu0 0.0
        %1755 = vmatpush2.msra.mxu0 0.0
        %1756 = vmatprep.subr.mxu0 0.0
        %1757 = vmatpush2.msra.mxu0 0.0
        %1758 = vmatprep.subr.mxu0 0.0
        %1759 = vmatpush2.msra.mxu0 0.0
        %1760 = vmatprep.subr.mxu0 0.0
        %1761 = vmatpush2.msra.mxu0 0.0
        %1762 = vmatprep.subr.mxu0 0.0
        %1763 = vmatpush2.msra.mxu0 0.0
        %1764 = vmatprep.subr.mxu0 0.0
        %1765 = vmatpush2.msra.mxu0 0.0
        %1766 = vmatprep.subr.mxu0 0.0
        %1767 = vmatpush2.msra.mxu0 0.0
        %1768 = vmatprep.subr.mxu0 0.0
        %1769 = vmatpush2.msra.mxu0 0.0
        %1770 = vmatprep.subr.mxu0 0.0
        %1771 = vmatpush2.msra.mxu0 0.0
        %1772 = vmatprep.subr.mxu0 0.0
        %1773 = vmatpush2.msra.mxu0 0.0
        %1774 = vmatprep.subr.mxu0 0.0
        %1775 = vmatpush2.msra.mxu0 0.0
        %1776 = vmatprep.subr.mxu0 0.0
        %1777 = vmatpush2.msra.mxu0 0.0
        %1778 = vmatprep.mubr.f32.mxu0 0.0
        %1779 = vmatmul.mubr.f32.gmra.mxu0 %v1712
        %v1780 = vpop.f32.mrf.mxu0
        %v1781 = vadd.f32 %v1707, %v1780
        %v1782 = vpop.f32.mrf.mxu0
        %v1783 = vadd.f32 %v1709, %v1782
        %1784 = vdwg.mxu0
        %v1785 = vld [vmem:[#allocation2 + $0x2] sm:$0xff]
        %s1786 = scalar_lea.vmem %s3, 480
        %v1787 = vld [vmem:[%s1786] sm:$0xff]
        %v1788 = vld [vmem:[%s1786 + $0x8] sm:$0xff]
        %v1789 = vld [vmem:[%s1786 + $0x10] sm:$0xff]
        %v1790 = vld [vmem:[%s1786 + $0x18] sm:$0xff]
        %v1791 = vld [vmem:[%s1786 + $0x20] sm:$0xff]
        %v1792 = vld [vmem:[%s1786 + $0x28] sm:$0xff]
        %v1793 = vld [vmem:[%s1786 + $0x30] sm:$0xff]
        %v1794 = vld [vmem:[%s1786 + $0x38] sm:$0xff]
        %v1795 = vld [vmem:[%s1786 + $0x40] sm:$0xff]
        %v1796 = vld [vmem:[%s1786 + $0x48] sm:$0xff]
        %v1797 = vld [vmem:[%s1786 + $0x50] sm:$0xff]
        %v1798 = vld [vmem:[%s1786 + $0x58] sm:$0xff]
        %v1799 = vld [vmem:[%s1786 + $0x60] sm:$0xff]
        %v1800 = vld [vmem:[%s1786 + $0x68] sm:$0xff]
        %v1801 = vld [vmem:[%s1786 + $0x70] sm:$0xff]
        %v1802 = vld [vmem:[%s1786 + $0x78] sm:$0xff]
        %v1803 = vld [vmem:[%s1786 + $0x80] sm:$0xff]
        %v1804 = vld [vmem:[%s1786 + $0x88] sm:$0xff]
        %v1805 = vld [vmem:[%s1786 + $0x90] sm:$0xff]
        %v1806 = vld [vmem:[%s1786 + $0x98] sm:$0xff]
        %v1807 = vld [vmem:[%s1786 + $0xa0] sm:$0xff]
        %v1808 = vld [vmem:[%s1786 + $0xa8] sm:$0xff]
        %v1809 = vld [vmem:[%s1786 + $0xb0] sm:$0xff]
        %v1810 = vld [vmem:[%s1786 + $0xb8] sm:$0xff]
        %v1811 = vld [vmem:[%s1786 + $0xc0] sm:$0xff]
        %v1812 = vld [vmem:[%s1786 + $0xc8] sm:$0xff]
        %v1813 = vld [vmem:[%s1786 + $0xd0] sm:$0xff]
        %v1814 = vld [vmem:[%s1786 + $0xd8] sm:$0xff]
        %v1815 = vld [vmem:[%s1786 + $0xe0] sm:$0xff]
        %v1816 = vld [vmem:[%s1786 + $0xe8] sm:$0xff]
        %v1818 = vsel %vm1570, %v1785, 0
        %1820 = vmatprep.subr.mxu0 0.0
        %1821 = vmatpush1.msra.mxu0 0.0
        %1822 = vmatprep.subr.mxu0 %v1816
        %1823 = vmatpush1.msra.mxu0 %v1815
        %1824 = vmatprep.subr.mxu0 %v1814
        %1825 = vmatpush1.msra.mxu0 %v1813
        %1826 = vmatprep.subr.mxu0 %v1812
        %1827 = vmatpush1.msra.mxu0 %v1811
        %1828 = vmatprep.subr.mxu0 %v1810
        %1829 = vmatpush1.msra.mxu0 %v1809
        %1830 = vmatprep.subr.mxu0 %v1808
        %1831 = vmatpush1.msra.mxu0 %v1807
        %1832 = vmatprep.subr.mxu0 %v1806
        %1833 = vmatpush1.msra.mxu0 %v1805
        %1834 = vmatprep.subr.mxu0 %v1804
        %1835 = vmatpush1.msra.mxu0 %v1803
        %1836 = vmatprep.subr.mxu0 %v1802
        %1837 = vmatpush1.msra.mxu0 %v1801
        %1838 = vmatprep.subr.mxu0 %v1800
        %1839 = vmatpush1.msra.mxu0 %v1799
        %1840 = vmatprep.subr.mxu0 %v1798
        %1841 = vmatpush1.msra.mxu0 %v1797
        %1842 = vmatprep.subr.mxu0 %v1796
        %1843 = vmatpush1.msra.mxu0 %v1795
        %1844 = vmatprep.subr.mxu0 %v1794
        %1845 = vmatpush1.msra.mxu0 %v1793
        %1846 = vmatprep.subr.mxu0 %v1792
        %1847 = vmatpush1.msra.mxu0 %v1791
        %1848 = vmatprep.subr.mxu0 %v1790
        %1849 = vmatpush1.msra.mxu0 %v1789
        %1850 = vmatprep.subr.mxu0 %v1788
        %1851 = vmatpush1.msra.mxu0 %v1787
        %1852 = vmatprep.subr.mxu0 0.0
        %1853 = vmatpush2.msra.mxu0 0.0
        %1854 = vmatprep.subr.mxu0 0.0
        %1855 = vmatpush2.msra.mxu0 0.0
        %1856 = vmatprep.subr.mxu0 0.0
        %1857 = vmatpush2.msra.mxu0 0.0
        %1858 = vmatprep.subr.mxu0 0.0
        %1859 = vmatpush2.msra.mxu0 0.0
        %1860 = vmatprep.subr.mxu0 0.0
        %1861 = vmatpush2.msra.mxu0 0.0
        %1862 = vmatprep.subr.mxu0 0.0
        %1863 = vmatpush2.msra.mxu0 0.0
        %1864 = vmatprep.subr.mxu0 0.0
        %1865 = vmatpush2.msra.mxu0 0.0
        %1866 = vmatprep.subr.mxu0 0.0
        %1867 = vmatpush2.msra.mxu0 0.0
        %1868 = vmatprep.subr.mxu0 0.0
        %1869 = vmatpush2.msra.mxu0 0.0
        %1870 = vmatprep.subr.mxu0 0.0
        %1871 = vmatpush2.msra.mxu0 0.0
        %1872 = vmatprep.subr.mxu0 0.0
        %1873 = vmatpush2.msra.mxu0 0.0
        %1874 = vmatprep.subr.mxu0 0.0
        %1875 = vmatpush2.msra.mxu0 0.0
        %1876 = vmatprep.subr.mxu0 0.0
        %1877 = vmatpush2.msra.mxu0 0.0
        %1878 = vmatprep.subr.mxu0 0.0
        %1879 = vmatpush2.msra.mxu0 0.0
        %1880 = vmatprep.subr.mxu0 0.0
        %1881 = vmatpush2.msra.mxu0 0.0
        %1882 = vmatprep.subr.mxu0 0.0
        %1883 = vmatpush2.msra.mxu0 0.0
        %1884 = vmatprep.mubr.f32.mxu0 0.0
        %1885 = vmatmul.mubr.f32.gmra.mxu0 %v1818
        %v1886 = vpop.f32.mrf.mxu0
        %v1887 = vadd.f32 0.0, %v1886
        %v1888 = vpop.f32.mrf.mxu0
        %v1889 = vadd.f32 0.0, %v1888
        %1890 = vdwg.mxu0
        %v1891 = vadd.f32 %v1781, %v1887
        %v1892 = vadd.f32 %v1783, %v1889
        %v1893 = vld [vmem:[#allocation2 + $0x3] sm:$0xff]
        %s1894 = scalar_lea.vmem %s3, 720
        %v1895 = vld [vmem:[%s1894] sm:$0xff]
        %v1896 = vld [vmem:[%s1894 + $0x8] sm:$0xff]
        %v1897 = vld [vmem:[%s1894 + $0x10] sm:$0xff]
        %v1898 = vld [vmem:[%s1894 + $0x18] sm:$0xff]
        %v1899 = vld [vmem:[%s1894 + $0x20] sm:$0xff]
        %v1900 = vld [vmem:[%s1894 + $0x28] sm:$0xff]
        %v1901 = vld [vmem:[%s1894 + $0x30] sm:$0xff]
        %v1902 = vld [vmem:[%s1894 + $0x38] sm:$0xff]
        %v1903 = vld [vmem:[%s1894 + $0x40] sm:$0xff]
        %v1904 = vld [vmem:[%s1894 + $0x48] sm:$0xff]
        %v1905 = vld [vmem:[%s1894 + $0x50] sm:$0xff]
        %v1906 = vld [vmem:[%s1894 + $0x58] sm:$0xff]
        %v1907 = vld [vmem:[%s1894 + $0x60] sm:$0xff]
        %v1908 = vld [vmem:[%s1894 + $0x68] sm:$0xff]
        %v1909 = vld [vmem:[%s1894 + $0x70] sm:$0xff]
        %v1910 = vld [vmem:[%s1894 + $0x78] sm:$0xff]
        %v1911 = vld [vmem:[%s1894 + $0x80] sm:$0xff]
        %v1912 = vld [vmem:[%s1894 + $0x88] sm:$0xff]
        %v1913 = vld [vmem:[%s1894 + $0x90] sm:$0xff]
        %v1914 = vld [vmem:[%s1894 + $0x98] sm:$0xff]
        %v1915 = vld [vmem:[%s1894 + $0xa0] sm:$0xff]
        %v1916 = vld [vmem:[%s1894 + $0xa8] sm:$0xff]
        %v1917 = vld [vmem:[%s1894 + $0xb0] sm:$0xff]
        %v1918 = vld [vmem:[%s1894 + $0xb8] sm:$0xff]
        %v1919 = vld [vmem:[%s1894 + $0xc0] sm:$0xff]
        %v1920 = vld [vmem:[%s1894 + $0xc8] sm:$0xff]
        %v1921 = vld [vmem:[%s1894 + $0xd0] sm:$0xff]
        %v1922 = vld [vmem:[%s1894 + $0xd8] sm:$0xff]
        %v1923 = vld [vmem:[%s1894 + $0xe0] sm:$0xff]
        %v1924 = vld [vmem:[%s1894 + $0xe8] sm:$0xff]
        %v1926 = vsel %vm1570, %v1893, 0
        %1928 = vmatprep.subr.mxu0 0.0
        %1929 = vmatpush1.msra.mxu0 0.0
        %1930 = vmatprep.subr.mxu0 %v1924
        %1931 = vmatpush1.msra.mxu0 %v1923
        %1932 = vmatprep.subr.mxu0 %v1922
        %1933 = vmatpush1.msra.mxu0 %v1921
        %1934 = vmatprep.subr.mxu0 %v1920
        %1935 = vmatpush1.msra.mxu0 %v1919
        %1936 = vmatprep.subr.mxu0 %v1918
        %1937 = vmatpush1.msra.mxu0 %v1917
        %1938 = vmatprep.subr.mxu0 %v1916
        %1939 = vmatpush1.msra.mxu0 %v1915
        %1940 = vmatprep.subr.mxu0 %v1914
        %1941 = vmatpush1.msra.mxu0 %v1913
        %1942 = vmatprep.subr.mxu0 %v1912
        %1943 = vmatpush1.msra.mxu0 %v1911
        %1944 = vmatprep.subr.mxu0 %v1910
        %1945 = vmatpush1.msra.mxu0 %v1909
        %1946 = vmatprep.subr.mxu0 %v1908
        %1947 = vmatpush1.msra.mxu0 %v1907
        %1948 = vmatprep.subr.mxu0 %v1906
        %1949 = vmatpush1.msra.mxu0 %v1905
        %1950 = vmatprep.subr.mxu0 %v1904
        %1951 = vmatpush1.msra.mxu0 %v1903
        %1952 = vmatprep.subr.mxu0 %v1902
        %1953 = vmatpush1.msra.mxu0 %v1901
        %1954 = vmatprep.subr.mxu0 %v1900
        %1955 = vmatpush1.msra.mxu0 %v1899
        %1956 = vmatprep.subr.mxu0 %v1898
        %1957 = vmatpush1.msra.mxu0 %v1897
        %1958 = vmatprep.subr.mxu0 %v1896
        %1959 = vmatpush1.msra.mxu0 %v1895
        %1960 = vmatprep.subr.mxu0 0.0
        %1961 = vmatpush2.msra.mxu0 0.0
        %1962 = vmatprep.subr.mxu0 0.0
        %1963 = vmatpush2.msra.mxu0 0.0
        %1964 = vmatprep.subr.mxu0 0.0
        %1965 = vmatpush2.msra.mxu0 0.0
        %1966 = vmatprep.subr.mxu0 0.0
        %1967 = vmatpush2.msra.mxu0 0.0
        %1968 = vmatprep.subr.mxu0 0.0
        %1969 = vmatpush2.msra.mxu0 0.0
        %1970 = vmatprep.subr.mxu0 0.0
        %1971 = vmatpush2.msra.mxu0 0.0
        %1972 = vmatprep.subr.mxu0 0.0
        %1973 = vmatpush2.msra.mxu0 0.0
        %1974 = vmatprep.subr.mxu0 0.0
        %1975 = vmatpush2.msra.mxu0 0.0
        %1976 = vmatprep.subr.mxu0 0.0
        %1977 = vmatpush2.msra.mxu0 0.0
        %1978 = vmatprep.subr.mxu0 0.0
        %1979 = vmatpush2.msra.mxu0 0.0
        %1980 = vmatprep.subr.mxu0 0.0
        %1981 = vmatpush2.msra.mxu0 0.0
        %1982 = vmatprep.subr.mxu0 0.0
        %1983 = vmatpush2.msra.mxu0 0.0
        %1984 = vmatprep.subr.mxu0 0.0
        %1985 = vmatpush2.msra.mxu0 0.0
        %1986 = vmatprep.subr.mxu0 0.0
        %1987 = vmatpush2.msra.mxu0 0.0
        %1988 = vmatprep.subr.mxu0 0.0
        %1989 = vmatpush2.msra.mxu0 0.0
        %1990 = vmatprep.subr.mxu0 0.0
        %1991 = vmatpush2.msra.mxu0 0.0
        %1992 = vmatprep.mubr.f32.mxu0 0.0
        %1993 = vmatmul.mubr.f32.gmra.mxu0 %v1926
        %v1994 = vpop.f32.mrf.mxu0
        %v1995 = vadd.f32 0.0, %v1994
        %v1996 = vpop.f32.mrf.mxu0
        %v1997 = vadd.f32 0.0, %v1996
        %1998 = vdwg.mxu0
        %v1999 = vadd.f32 %v1891, %v1995
        %v2000 = vadd.f32 %v1892, %v1997
        %v2001 = vld [vmem:[#allocation2 + $0x4] sm:$0xff]
        %s2002 = scalar_lea.vmem %s3, 960
        %v2003 = vld [vmem:[%s2002] sm:$0xff]
        %v2004 = vld [vmem:[%s2002 + $0x8] sm:$0xff]
        %v2005 = vld [vmem:[%s2002 + $0x10] sm:$0xff]
        %v2006 = vld [vmem:[%s2002 + $0x18] sm:$0xff]
        %v2007 = vld [vmem:[%s2002 + $0x20] sm:$0xff]
        %v2008 = vld [vmem:[%s2002 + $0x28] sm:$0xff]
        %v2009 = vld [vmem:[%s2002 + $0x30] sm:$0xff]
        %v2010 = vld [vmem:[%s2002 + $0x38] sm:$0xff]
        %v2011 = vld [vmem:[%s2002 + $0x40] sm:$0xff]
        %v2012 = vld [vmem:[%s2002 + $0x48] sm:$0xff]
        %v2013 = vld [vmem:[%s2002 + $0x50] sm:$0xff]
        %v2014 = vld [vmem:[%s2002 + $0x58] sm:$0xff]
        %v2015 = vld [vmem:[%s2002 + $0x60] sm:$0xff]
        %v2016 = vld [vmem:[%s2002 + $0x68] sm:$0xff]
        %v2017 = vld [vmem:[%s2002 + $0x70] sm:$0xff]
        %v2018 = vld [vmem:[%s2002 + $0x78] sm:$0xff]
        %v2019 = vld [vmem:[%s2002 + $0x80] sm:$0xff]
        %v2020 = vld [vmem:[%s2002 + $0x88] sm:$0xff]
        %v2021 = vld [vmem:[%s2002 + $0x90] sm:$0xff]
        %v2022 = vld [vmem:[%s2002 + $0x98] sm:$0xff]
        %v2023 = vld [vmem:[%s2002 + $0xa0] sm:$0xff]
        %v2024 = vld [vmem:[%s2002 + $0xa8] sm:$0xff]
        %v2025 = vld [vmem:[%s2002 + $0xb0] sm:$0xff]
        %v2026 = vld [vmem:[%s2002 + $0xb8] sm:$0xff]
        %v2027 = vld [vmem:[%s2002 + $0xc0] sm:$0xff]
        %v2028 = vld [vmem:[%s2002 + $0xc8] sm:$0xff]
        %v2029 = vld [vmem:[%s2002 + $0xd0] sm:$0xff]
        %v2030 = vld [vmem:[%s2002 + $0xd8] sm:$0xff]
        %v2031 = vld [vmem:[%s2002 + $0xe0] sm:$0xff]
        %v2032 = vld [vmem:[%s2002 + $0xe8] sm:$0xff]
        %v2034 = vsel %vm1570, %v2001, 0
        %2036 = vmatprep.subr.mxu0 0.0
        %2037 = vmatpush1.msra.mxu0 0.0
        %2038 = vmatprep.subr.mxu0 %v2032
        %2039 = vmatpush1.msra.mxu0 %v2031
        %2040 = vmatprep.subr.mxu0 %v2030
        %2041 = vmatpush1.msra.mxu0 %v2029
        %2042 = vmatprep.subr.mxu0 %v2028
        %2043 = vmatpush1.msra.mxu0 %v2027
        %2044 = vmatprep.subr.mxu0 %v2026
        %2045 = vmatpush1.msra.mxu0 %v2025
        %2046 = vmatprep.subr.mxu0 %v2024
        %2047 = vmatpush1.msra.mxu0 %v2023
        %2048 = vmatprep.subr.mxu0 %v2022
        %2049 = vmatpush1.msra.mxu0 %v2021
        %2050 = vmatprep.subr.mxu0 %v2020
        %2051 = vmatpush1.msra.mxu0 %v2019
        %2052 = vmatprep.subr.mxu0 %v2018
        %2053 = vmatpush1.msra.mxu0 %v2017
        %2054 = vmatprep.subr.mxu0 %v2016
        %2055 = vmatpush1.msra.mxu0 %v2015
        %2056 = vmatprep.subr.mxu0 %v2014
        %2057 = vmatpush1.msra.mxu0 %v2013
        %2058 = vmatprep.subr.mxu0 %v2012
        %2059 = vmatpush1.msra.mxu0 %v2011
        %2060 = vmatprep.subr.mxu0 %v2010
        %2061 = vmatpush1.msra.mxu0 %v2009
        %2062 = vmatprep.subr.mxu0 %v2008
        %2063 = vmatpush1.msra.mxu0 %v2007
        %2064 = vmatprep.subr.mxu0 %v2006
        %2065 = vmatpush1.msra.mxu0 %v2005
        %2066 = vmatprep.subr.mxu0 %v2004
        %2067 = vmatpush1.msra.mxu0 %v2003
        %2068 = vmatprep.subr.mxu0 0.0
        %2069 = vmatpush2.msra.mxu0 0.0
        %2070 = vmatprep.subr.mxu0 0.0
        %2071 = vmatpush2.msra.mxu0 0.0
        %2072 = vmatprep.subr.mxu0 0.0
        %2073 = vmatpush2.msra.mxu0 0.0
        %2074 = vmatprep.subr.mxu0 0.0
        %2075 = vmatpush2.msra.mxu0 0.0
        %2076 = vmatprep.subr.mxu0 0.0
        %2077 = vmatpush2.msra.mxu0 0.0
        %2078 = vmatprep.subr.mxu0 0.0
        %2079 = vmatpush2.msra.mxu0 0.0
        %2080 = vmatprep.subr.mxu0 0.0
        %2081 = vmatpush2.msra.mxu0 0.0
        %2082 = vmatprep.subr.mxu0 0.0
        %2083 = vmatpush2.msra.mxu0 0.0
        %2084 = vmatprep.subr.mxu0 0.0
        %2085 = vmatpush2.msra.mxu0 0.0
        %2086 = vmatprep.subr.mxu0 0.0
        %2087 = vmatpush2.msra.mxu0 0.0
        %2088 = vmatprep.subr.mxu0 0.0
        %2089 = vmatpush2.msra.mxu0 0.0
        %2090 = vmatprep.subr.mxu0 0.0
        %2091 = vmatpush2.msra.mxu0 0.0
        %2092 = vmatprep.subr.mxu0 0.0
        %2093 = vmatpush2.msra.mxu0 0.0
        %2094 = vmatprep.subr.mxu0 0.0
        %2095 = vmatpush2.msra.mxu0 0.0
        %2096 = vmatprep.subr.mxu0 0.0
        %2097 = vmatpush2.msra.mxu0 0.0
        %2098 = vmatprep.subr.mxu0 0.0
        %2099 = vmatpush2.msra.mxu0 0.0
        %2100 = vmatprep.mubr.f32.mxu0 0.0
        %2101 = vmatmul.mubr.f32.gmra.mxu0 %v2034
        %v2102 = vpop.f32.mrf.mxu0
        %v2103 = vadd.f32 0.0, %v2102
        %v2104 = vpop.f32.mrf.mxu0
        %v2105 = vadd.f32 0.0, %v2104
        %2106 = vdwg.mxu0
        %v2107 = vadd.f32 %v1999, %v2103
        %v2108 = vadd.f32 %v2000, %v2105
        %v2109 = vld [vmem:[%s7] sm:$0xf]
        %vm2110 = vcmask 64512
        %v2112 = vsel %vm2110, %v2109, 0
        %2114 = vmatprep.subr.mxu0 0.0
        %2115 = vmatpush1.msra.mxu0 0.0
        %2116 = vmatprep.subr.mxu0 0.0
        %2117 = vmatpush1.msra.mxu0 0.0
        %2118 = vmatprep.subr.mxu0 0.0
        %2119 = vmatpush1.msra.mxu0 0.0
        %2120 = vmatprep.subr.mxu0 0.0
        %2121 = vmatpush1.msra.mxu0 0.0
        %2122 = vmatprep.subr.mxu0 0.0
        %2123 = vmatpush1.msra.mxu0 0.0
        %2124 = vmatprep.subr.mxu0 0.0
        %2125 = vmatpush1.msra.mxu0 0.0
        %2126 = vmatprep.subr.mxu0 0.0
        %2127 = vmatpush1.msra.mxu0 0.0
        %2128 = vmatprep.subr.mxu0 0.0
        %2129 = vmatpush1.msra.mxu0 0.0
        %2130 = vmatprep.subr.mxu0 0.0
        %2131 = vmatpush1.msra.mxu0 0.0
        %2132 = vmatprep.subr.mxu0 0.0
        %2133 = vmatpush1.msra.mxu0 0.0
        %2134 = vmatprep.subr.mxu0 0.0
        %2135 = vmatpush1.msra.mxu0 0.0
        %2136 = vmatprep.subr.mxu0 0.0
        %2137 = vmatpush1.msra.mxu0 0.0
        %2138 = vmatprep.subr.mxu0 0.0
        %2139 = vmatpush1.msra.mxu0 0.0
        %2140 = vmatprep.subr.mxu0 0.0
        %2141 = vmatpush1.msra.mxu0 0.0
        %2142 = vmatprep.subr.mxu0 0.0
        %2143 = vmatpush1.msra.mxu0 0.0
        %2144 = vmatprep.subr.mxu0 %v2108
        %2145 = vmatpush1.msra.mxu0 %v2107
        %2146 = vmatprep.subr.mxu0 0.0
        %2147 = vmatpush2.msra.mxu0 0.0
        %2148 = vmatprep.subr.mxu0 0.0
        %2149 = vmatpush2.msra.mxu0 0.0
        %2150 = vmatprep.subr.mxu0 0.0
        %2151 = vmatpush2.msra.mxu0 0.0
        %2152 = vmatprep.subr.mxu0 0.0
        %2153 = vmatpush2.msra.mxu0 0.0
        %2154 = vmatprep.subr.mxu0 0.0
        %2155 = vmatpush2.msra.mxu0 0.0
        %2156 = vmatprep.subr.mxu0 0.0
        %2157 = vmatpush2.msra.mxu0 0.0
        %2158 = vmatprep.subr.mxu0 0.0
        %2159 = vmatpush2.msra.mxu0 0.0
        %2160 = vmatprep.subr.mxu0 0.0
        %2161 = vmatpush2.msra.mxu0 0.0
        %2162 = vmatprep.subr.mxu0 0.0
        %2163 = vmatpush2.msra.mxu0 0.0
        %2164 = vmatprep.subr.mxu0 0.0
        %2165 = vmatpush2.msra.mxu0 0.0
        %2166 = vmatprep.subr.mxu0 0.0
        %2167 = vmatpush2.msra.mxu0 0.0
        %2168 = vmatprep.subr.mxu0 0.0
        %2169 = vmatpush2.msra.mxu0 0.0
        %2170 = vmatprep.subr.mxu0 0.0
        %2171 = vmatpush2.msra.mxu0 0.0
        %2172 = vmatprep.subr.mxu0 0.0
        %2173 = vmatpush2.msra.mxu0 0.0
        %2174 = vmatprep.subr.mxu0 0.0
        %2175 = vmatpush2.msra.mxu0 0.0
        %2176 = vmatprep.subr.mxu0 0.0
        %2177 = vmatpush2.msra.mxu0 0.0
        %2178 = vmatprep.mubr.f32.mxu0 0.0
        %2179 = vmatmul.mubr.f32.gmra.mxu0 %v2112
        %v2180 = vpop.f32.mrf.mxu0
        %v2181 = vadd.f32 0.0, %v2180
        %v2182 = vpop.f32.mrf.mxu0
        %v2183 = vadd.f32 0.0, %v2182
        %2184 = vdwg.mxu0
        %s2185 = scalar_lea.vmem %s7, 4
        %v2186 = vld [vmem:[%s2185] sm:$0xf]
        %v2188 = vsel %vm2110, %v2186, 0
        %2190 = vmatprep.subr.mxu0 0.0
        %2191 = vmatpush1.msra.mxu0 0.0
        %2192 = vmatprep.subr.mxu0 0.0
        %2193 = vmatpush1.msra.mxu0 0.0
        %2194 = vmatprep.subr.mxu0 0.0
        %2195 = vmatpush1.msra.mxu0 0.0
        %2196 = vmatprep.subr.mxu0 0.0
        %2197 = vmatpush1.msra.mxu0 0.0
        %2198 = vmatprep.subr.mxu0 0.0
        %2199 = vmatpush1.msra.mxu0 0.0
        %2200 = vmatprep.subr.mxu0 0.0
        %2201 = vmatpush1.msra.mxu0 0.0
        %2202 = vmatprep.subr.mxu0 0.0
        %2203 = vmatpush1.msra.mxu0 0.0
        %2204 = vmatprep.subr.mxu0 0.0
        %2205 = vmatpush1.msra.mxu0 0.0
        %2206 = vmatprep.subr.mxu0 0.0
        %2207 = vmatpush1.msra.mxu0 0.0
        %2208 = vmatprep.subr.mxu0 0.0
        %2209 = vmatpush1.msra.mxu0 0.0
        %2210 = vmatprep.subr.mxu0 0.0
        %2211 = vmatpush1.msra.mxu0 0.0
        %2212 = vmatprep.subr.mxu0 0.0
        %2213 = vmatpush1.msra.mxu0 0.0
        %2214 = vmatprep.subr.mxu0 0.0
        %2215 = vmatpush1.msra.mxu0 0.0
        %2216 = vmatprep.subr.mxu0 0.0
        %2217 = vmatpush1.msra.mxu0 0.0
        %2218 = vmatprep.subr.mxu0 0.0
        %2219 = vmatpush1.msra.mxu0 0.0
        %2220 = vmatprep.subr.mxu0 %v2108
        %2221 = vmatpush1.msra.mxu0 %v2107
        %2222 = vmatprep.subr.mxu0 0.0
        %2223 = vmatpush2.msra.mxu0 0.0
        %2224 = vmatprep.subr.mxu0 0.0
        %2225 = vmatpush2.msra.mxu0 0.0
        %2226 = vmatprep.subr.mxu0 0.0
        %2227 = vmatpush2.msra.mxu0 0.0
        %2228 = vmatprep.subr.mxu0 0.0
        %2229 = vmatpush2.msra.mxu0 0.0
        %2230 = vmatprep.subr.mxu0 0.0
        %2231 = vmatpush2.msra.mxu0 0.0
        %2232 = vmatprep.subr.mxu0 0.0
        %2233 = vmatpush2.msra.mxu0 0.0
        %2234 = vmatprep.subr.mxu0 0.0
        %2235 = vmatpush2.msra.mxu0 0.0
        %2236 = vmatprep.subr.mxu0 0.0
        %2237 = vmatpush2.msra.mxu0 0.0
        %2238 = vmatprep.subr.mxu0 0.0
        %2239 = vmatpush2.msra.mxu0 0.0
        %2240 = vmatprep.subr.mxu0 0.0
        %2241 = vmatpush2.msra.mxu0 0.0
        %2242 = vmatprep.subr.mxu0 0.0
        %2243 = vmatpush2.msra.mxu0 0.0
        %2244 = vmatprep.subr.mxu0 0.0
        %2245 = vmatpush2.msra.mxu0 0.0
        %2246 = vmatprep.subr.mxu0 0.0
        %2247 = vmatpush2.msra.mxu0 0.0
        %2248 = vmatprep.subr.mxu0 0.0
        %2249 = vmatpush2.msra.mxu0 0.0
        %2250 = vmatprep.subr.mxu0 0.0
        %2251 = vmatpush2.msra.mxu0 0.0
        %2252 = vmatprep.subr.mxu0 0.0
        %2253 = vmatpush2.msra.mxu0 0.0
        %2254 = vmatprep.mubr.f32.mxu0 0.0
        %2255 = vmatmul.mubr.f32.gmra.mxu0 %v2188
        %v2256 = vpop.f32.mrf.mxu0
        %v2257 = vadd.f32 0.0, %v2256
        %v2258 = vpop.f32.mrf.mxu0
        %v2259 = vadd.f32 0.0, %v2258
        %2260 = vdwg.mxu0
        %v2261 = vld [vmem:[%s8] sm:$0xff]
        %v2262 = vld [vmem:[%s8 + $0x8] sm:$0xff]
        %v2263 = vld [vmem:[%s8 + $0x10] sm:$0xff]
        %v2264 = vld [vmem:[%s8 + $0x18] sm:$0xff]
        %v2265 = vld [vmem:[%s8 + $0x20] sm:$0xff]
        %v2266 = vld [vmem:[%s8 + $0x28] sm:$0xff]
        %v2267 = vld [vmem:[%s8 + $0x30] sm:$0xff]
        %v2268 = vld [vmem:[%s8 + $0x38] sm:$0xff]
        %v2269 = vld [vmem:[%s8 + $0x40] sm:$0xff]
        %v2270 = vld [vmem:[%s8 + $0x48] sm:$0xff]
        %v2271 = vld [vmem:[%s8 + $0x50] sm:$0xff]
        %v2272 = vld [vmem:[%s8 + $0x58] sm:$0xff]
        %v2273 = vld [vmem:[%s8 + $0x60] sm:$0xff]
        %v2274 = vld [vmem:[%s8 + $0x68] sm:$0xff]
        %v2275 = vld [vmem:[%s8 + $0x70] sm:$0xff]
        %v2276 = vld [vmem:[%s8 + $0x78] sm:$0xff]
        %v2277 = vld [vmem:[%s8 + $0x80] sm:$0xff]
        %v2278 = vld [vmem:[%s8 + $0x88] sm:$0xff]
        %v2279 = vld [vmem:[%s8 + $0x90] sm:$0xff]
        %v2280 = vld [vmem:[%s8 + $0x98] sm:$0xff]
        %vm2281 = vcmask 261120
        %v2283 = vsel %vm2281, %v2183, 0
        %2285 = vmatprep.subr.mxu0 0.0
        %2286 = vmatpush1.msra.mxu0 %v2276
        %2287 = vmatprep.subr.mxu0 0.0
        %2288 = vmatpush1.msra.mxu0 %v2275
        %2289 = vmatprep.subr.mxu0 0.0
        %2290 = vmatpush1.msra.mxu0 %v2274
        %2291 = vmatprep.subr.mxu0 0.0
        %2292 = vmatpush1.msra.mxu0 %v2273
        %2293 = vmatprep.subr.mxu0 0.0
        %2294 = vmatpush1.msra.mxu0 %v2272
        %2295 = vmatprep.subr.mxu0 0.0
        %2296 = vmatpush1.msra.mxu0 %v2271
        %2297 = vmatprep.subr.mxu0 0.0
        %2298 = vmatpush1.msra.mxu0 %v2270
        %2299 = vmatprep.subr.mxu0 0.0
        %2300 = vmatpush1.msra.mxu0 %v2269
        %2301 = vmatprep.subr.mxu0 0.0
        %2302 = vmatpush1.msra.mxu0 %v2268
        %2303 = vmatprep.subr.mxu0 0.0
        %2304 = vmatpush1.msra.mxu0 %v2267
        %2305 = vmatprep.subr.mxu0 0.0
        %2306 = vmatpush1.msra.mxu0 %v2266
        %2307 = vmatprep.subr.mxu0 0.0
        %2308 = vmatpush1.msra.mxu0 %v2265
        %2309 = vmatprep.subr.mxu0 0.0
        %2310 = vmatpush1.msra.mxu0 %v2264
        %2311 = vmatprep.subr.mxu0 0.0
        %2312 = vmatpush1.msra.mxu0 %v2263
        %2313 = vmatprep.subr.mxu0 0.0
        %2314 = vmatpush1.msra.mxu0 %v2262
        %2315 = vmatprep.subr.mxu0 0.0
        %2316 = vmatpush1.msra.mxu0 %v2261
        %2317 = vmatprep.subr.mxu0 0.0
        %2318 = vmatpush2.msra.mxu0 0.0
        %2319 = vmatprep.subr.mxu0 0.0
        %2320 = vmatpush2.msra.mxu0 0.0
        %2321 = vmatprep.subr.mxu0 0.0
        %2322 = vmatpush2.msra.mxu0 0.0
        %2323 = vmatprep.subr.mxu0 0.0
        %2324 = vmatpush2.msra.mxu0 0.0
        %2325 = vmatprep.subr.mxu0 0.0
        %2326 = vmatpush2.msra.mxu0 0.0
        %2327 = vmatprep.subr.mxu0 0.0
        %2328 = vmatpush2.msra.mxu0 0.0
        %2329 = vmatprep.subr.mxu0 0.0
        %2330 = vmatpush2.msra.mxu0 0.0
        %2331 = vmatprep.subr.mxu0 0.0
        %2332 = vmatpush2.msra.mxu0 0.0
        %2333 = vmatprep.subr.mxu0 0.0
        %2334 = vmatpush2.msra.mxu0 0.0
        %2335 = vmatprep.subr.mxu0 0.0
        %2336 = vmatpush2.msra.mxu0 0.0
        %2337 = vmatprep.subr.mxu0 0.0
        %2338 = vmatpush2.msra.mxu0 0.0
        %2339 = vmatprep.subr.mxu0 0.0
        %2340 = vmatpush2.msra.mxu0 0.0
        %2341 = vmatprep.subr.mxu0 0.0
        %2342 = vmatpush2.msra.mxu0 %v2280
        %2343 = vmatprep.subr.mxu0 0.0
        %2344 = vmatpush2.msra.mxu0 %v2279
        %2345 = vmatprep.subr.mxu0 0.0
        %2346 = vmatpush2.msra.mxu0 %v2278
        %2347 = vmatprep.subr.mxu0 0.0
        %2348 = vmatpush2.msra.mxu0 %v2277
        %2349 = vmatprep.mubr.f32.mxu0 %v2283
        %2350 = vmatmul.mubr.f32.gmra.mxu0 %v2181
        %v2351 = vpop.f32.mrf.mxu0
        %v2352 = vadd.f32 0.0, %v2351
        %v2353 = vpop.f32.mrf.mxu0
        %2354 = vdwg.mxu0
        %s2355 = scalar_lea.vmem %s8, 160
        %v2356 = vld [vmem:[%s2355] sm:$0xff]
        %v2357 = vld [vmem:[%s2355 + $0x8] sm:$0xff]
        %v2358 = vld [vmem:[%s2355 + $0x10] sm:$0xff]
        %v2359 = vld [vmem:[%s2355 + $0x18] sm:$0xff]
        %v2360 = vld [vmem:[%s2355 + $0x20] sm:$0xff]
        %v2361 = vld [vmem:[%s2355 + $0x28] sm:$0xff]
        %v2362 = vld [vmem:[%s2355 + $0x30] sm:$0xff]
        %v2363 = vld [vmem:[%s2355 + $0x38] sm:$0xff]
        %v2364 = vld [vmem:[%s2355 + $0x40] sm:$0xff]
        %v2365 = vld [vmem:[%s2355 + $0x48] sm:$0xff]
        %v2366 = vld [vmem:[%s2355 + $0x50] sm:$0xff]
        %v2367 = vld [vmem:[%s2355 + $0x58] sm:$0xff]
        %v2368 = vld [vmem:[%s2355 + $0x60] sm:$0xff]
        %v2369 = vld [vmem:[%s2355 + $0x68] sm:$0xff]
        %v2370 = vld [vmem:[%s2355 + $0x70] sm:$0xff]
        %v2371 = vld [vmem:[%s2355 + $0x78] sm:$0xff]
        %v2372 = vld [vmem:[%s2355 + $0x80] sm:$0xff]
        %v2373 = vld [vmem:[%s2355 + $0x88] sm:$0xff]
        %v2374 = vld [vmem:[%s2355 + $0x90] sm:$0xff]
        %v2375 = vld [vmem:[%s2355 + $0x98] sm:$0xff]
        %2376 = vmatprep.subr.mxu0 0.0
        %2377 = vmatpush1.msra.mxu0 %v2371
        %2378 = vmatprep.subr.mxu0 0.0
        %2379 = vmatpush1.msra.mxu0 %v2370
        %2380 = vmatprep.subr.mxu0 0.0
        %2381 = vmatpush1.msra.mxu0 %v2369
        %2382 = vmatprep.subr.mxu0 0.0
        %2383 = vmatpush1.msra.mxu0 %v2368
        %2384 = vmatprep.subr.mxu0 0.0
        %2385 = vmatpush1.msra.mxu0 %v2367
        %2386 = vmatprep.subr.mxu0 0.0
        %2387 = vmatpush1.msra.mxu0 %v2366
        %2388 = vmatprep.subr.mxu0 0.0
        %2389 = vmatpush1.msra.mxu0 %v2365
        %2390 = vmatprep.subr.mxu0 0.0
        %2391 = vmatpush1.msra.mxu0 %v2364
        %2392 = vmatprep.subr.mxu0 0.0
        %2393 = vmatpush1.msra.mxu0 %v2363
        %2394 = vmatprep.subr.mxu0 0.0
        %2395 = vmatpush1.msra.mxu0 %v2362
        %2396 = vmatprep.subr.mxu0 0.0
        %2397 = vmatpush1.msra.mxu0 %v2361
        %2398 = vmatprep.subr.mxu0 0.0
        %2399 = vmatpush1.msra.mxu0 %v2360
        %2400 = vmatprep.subr.mxu0 0.0
        %2401 = vmatpush1.msra.mxu0 %v2359
        %2402 = vmatprep.subr.mxu0 0.0
        %2403 = vmatpush1.msra.mxu0 %v2358
        %2404 = vmatprep.subr.mxu0 0.0
        %2405 = vmatpush1.msra.mxu0 %v2357
        %2406 = vmatprep.subr.mxu0 0.0
        %2407 = vmatpush1.msra.mxu0 %v2356
        %2408 = vmatprep.subr.mxu0 0.0
        %2409 = vmatpush2.msra.mxu0 0.0
        %2410 = vmatprep.subr.mxu0 0.0
        %2411 = vmatpush2.msra.mxu0 0.0
        %2412 = vmatprep.subr.mxu0 0.0
        %2413 = vmatpush2.msra.mxu0 0.0
        %2414 = vmatprep.subr.mxu0 0.0
        %2415 = vmatpush2.msra.mxu0 0.0
        %2416 = vmatprep.subr.mxu0 0.0
        %2417 = vmatpush2.msra.mxu0 0.0
        %2418 = vmatprep.subr.mxu0 0.0
        %2419 = vmatpush2.msra.mxu0 0.0
        %2420 = vmatprep.subr.mxu0 0.0
        %2421 = vmatpush2.msra.mxu0 0.0
        %2422 = vmatprep.subr.mxu0 0.0
        %2423 = vmatpush2.msra.mxu0 0.0
        %2424 = vmatprep.subr.mxu0 0.0
        %2425 = vmatpush2.msra.mxu0 0.0
        %2426 = vmatprep.subr.mxu0 0.0
        %2427 = vmatpush2.msra.mxu0 0.0
        %2428 = vmatprep.subr.mxu0 0.0
        %2429 = vmatpush2.msra.mxu0 0.0
        %2430 = vmatprep.subr.mxu0 0.0
        %2431 = vmatpush2.msra.mxu0 0.0
        %2432 = vmatprep.subr.mxu0 0.0
        %2433 = vmatpush2.msra.mxu0 %v2375
        %2434 = vmatprep.subr.mxu0 0.0
        %2435 = vmatpush2.msra.mxu0 %v2374
        %2436 = vmatprep.subr.mxu0 0.0
        %2437 = vmatpush2.msra.mxu0 %v2373
        %2438 = vmatprep.subr.mxu0 0.0
        %2439 = vmatpush2.msra.mxu0 %v2372
        %2440 = vmatprep.mubr.f32.mxu0 %v2283
        %2441 = vmatmul.mubr.f32.gmra.mxu0 %v2181
        %v2442 = vpop.f32.mrf.mxu0
        %v2443 = vadd.f32 0.0, %v2442
        %v2444 = vpop.f32.mrf.mxu0
        %2445 = vdwg.mxu0
        %v2446 = vmax.f32 %v2352, %v2443
        %v2448 = vsel %vm2281, %v2259, 0
        %2450 = vmatprep.subr.mxu0 0.0
        %2451 = vmatpush1.msra.mxu0 %v2276
        %2452 = vmatprep.subr.mxu0 0.0
        %2453 = vmatpush1.msra.mxu0 %v2275
        %2454 = vmatprep.subr.mxu0 0.0
        %2455 = vmatpush1.msra.mxu0 %v2274
        %2456 = vmatprep.subr.mxu0 0.0
        %2457 = vmatpush1.msra.mxu0 %v2273
        %2458 = vmatprep.subr.mxu0 0.0
        %2459 = vmatpush1.msra.mxu0 %v2272
        %2460 = vmatprep.subr.mxu0 0.0
        %2461 = vmatpush1.msra.mxu0 %v2271
        %2462 = vmatprep.subr.mxu0 0.0
        %2463 = vmatpush1.msra.mxu0 %v2270
        %2464 = vmatprep.subr.mxu0 0.0
        %2465 = vmatpush1.msra.mxu0 %v2269
        %2466 = vmatprep.subr.mxu0 0.0
        %2467 = vmatpush1.msra.mxu0 %v2268
        %2468 = vmatprep.subr.mxu0 0.0
        %2469 = vmatpush1.msra.mxu0 %v2267
        %2470 = vmatprep.subr.mxu0 0.0
        %2471 = vmatpush1.msra.mxu0 %v2266
        %2472 = vmatprep.subr.mxu0 0.0
        %2473 = vmatpush1.msra.mxu0 %v2265
        %2474 = vmatprep.subr.mxu0 0.0
        %2475 = vmatpush1.msra.mxu0 %v2264
        %2476 = vmatprep.subr.mxu0 0.0
        %2477 = vmatpush1.msra.mxu0 %v2263
        %2478 = vmatprep.subr.mxu0 0.0
        %2479 = vmatpush1.msra.mxu0 %v2262
        %2480 = vmatprep.subr.mxu0 0.0
        %2481 = vmatpush1.msra.mxu0 %v2261
        %2482 = vmatprep.subr.mxu0 0.0
        %2483 = vmatpush2.msra.mxu0 0.0
        %2484 = vmatprep.subr.mxu0 0.0
        %2485 = vmatpush2.msra.mxu0 0.0
        %2486 = vmatprep.subr.mxu0 0.0
        %2487 = vmatpush2.msra.mxu0 0.0
        %2488 = vmatprep.subr.mxu0 0.0
        %2489 = vmatpush2.msra.mxu0 0.0
        %2490 = vmatprep.subr.mxu0 0.0
        %2491 = vmatpush2.msra.mxu0 0.0
        %2492 = vmatprep.subr.mxu0 0.0
        %2493 = vmatpush2.msra.mxu0 0.0
        %2494 = vmatprep.subr.mxu0 0.0
        %2495 = vmatpush2.msra.mxu0 0.0
        %2496 = vmatprep.subr.mxu0 0.0
        %2497 = vmatpush2.msra.mxu0 0.0
        %2498 = vmatprep.subr.mxu0 0.0
        %2499 = vmatpush2.msra.mxu0 0.0
        %2500 = vmatprep.subr.mxu0 0.0
        %2501 = vmatpush2.msra.mxu0 0.0
        %2502 = vmatprep.subr.mxu0 0.0
        %2503 = vmatpush2.msra.mxu0 0.0
        %2504 = vmatprep.subr.mxu0 0.0
        %2505 = vmatpush2.msra.mxu0 0.0
        %2506 = vmatprep.subr.mxu0 0.0
        %2507 = vmatpush2.msra.mxu0 %v2280
        %2508 = vmatprep.subr.mxu0 0.0
        %2509 = vmatpush2.msra.mxu0 %v2279
        %2510 = vmatprep.subr.mxu0 0.0
        %2511 = vmatpush2.msra.mxu0 %v2278
        %2512 = vmatprep.subr.mxu0 0.0
        %2513 = vmatpush2.msra.mxu0 %v2277
        %2514 = vmatprep.mubr.f32.mxu0 %v2448
        %2515 = vmatmul.mubr.f32.gmra.mxu0 %v2257
        %v2516 = vpop.f32.mrf.mxu0
        %v2517 = vadd.f32 0.0, %v2516
        %v2518 = vpop.f32.mrf.mxu0
        %2519 = vdwg.mxu0
        %2520 = vmatprep.subr.mxu0 0.0
        %2521 = vmatpush1.msra.mxu0 %v2371
        %2522 = vmatprep.subr.mxu0 0.0
        %2523 = vmatpush1.msra.mxu0 %v2370
        %2524 = vmatprep.subr.mxu0 0.0
        %2525 = vmatpush1.msra.mxu0 %v2369
        %2526 = vmatprep.subr.mxu0 0.0
        %2527 = vmatpush1.msra.mxu0 %v2368
        %2528 = vmatprep.subr.mxu0 0.0
        %2529 = vmatpush1.msra.mxu0 %v2367
        %2530 = vmatprep.subr.mxu0 0.0
        %2531 = vmatpush1.msra.mxu0 %v2366
        %2532 = vmatprep.subr.mxu0 0.0
        %2533 = vmatpush1.msra.mxu0 %v2365
        %2534 = vmatprep.subr.mxu0 0.0
        %2535 = vmatpush1.msra.mxu0 %v2364
        %2536 = vmatprep.subr.mxu0 0.0
        %2537 = vmatpush1.msra.mxu0 %v2363
        %2538 = vmatprep.subr.mxu0 0.0
        %2539 = vmatpush1.msra.mxu0 %v2362
        %2540 = vmatprep.subr.mxu0 0.0
        %2541 = vmatpush1.msra.mxu0 %v2361
        %2542 = vmatprep.subr.mxu0 0.0
        %2543 = vmatpush1.msra.mxu0 %v2360
        %2544 = vmatprep.subr.mxu0 0.0
        %2545 = vmatpush1.msra.mxu0 %v2359
        %2546 = vmatprep.subr.mxu0 0.0
        %2547 = vmatpush1.msra.mxu0 %v2358
        %2548 = vmatprep.subr.mxu0 0.0
        %2549 = vmatpush1.msra.mxu0 %v2357
        %2550 = vmatprep.subr.mxu0 0.0
        %2551 = vmatpush1.msra.mxu0 %v2356
        %2552 = vmatprep.subr.mxu0 0.0
        %2553 = vmatpush2.msra.mxu0 0.0
        %2554 = vmatprep.subr.mxu0 0.0
        %2555 = vmatpush2.msra.mxu0 0.0
        %2556 = vmatprep.subr.mxu0 0.0
        %2557 = vmatpush2.msra.mxu0 0.0
        %2558 = vmatprep.subr.mxu0 0.0
        %2559 = vmatpush2.msra.mxu0 0.0
        %2560 = vmatprep.subr.mxu0 0.0
        %2561 = vmatpush2.msra.mxu0 0.0
        %2562 = vmatprep.subr.mxu0 0.0
        %2563 = vmatpush2.msra.mxu0 0.0
        %2564 = vmatprep.subr.mxu0 0.0
        %2565 = vmatpush2.msra.mxu0 0.0
        %2566 = vmatprep.subr.mxu0 0.0
        %2567 = vmatpush2.msra.mxu0 0.0
        %2568 = vmatprep.subr.mxu0 0.0
        %2569 = vmatpush2.msra.mxu0 0.0
        %2570 = vmatprep.subr.mxu0 0.0
        %2571 = vmatpush2.msra.mxu0 0.0
        %2572 = vmatprep.subr.mxu0 0.0
        %2573 = vmatpush2.msra.mxu0 0.0
        %2574 = vmatprep.subr.mxu0 0.0
        %2575 = vmatpush2.msra.mxu0 0.0
        %2576 = vmatprep.subr.mxu0 0.0
        %2577 = vmatpush2.msra.mxu0 %v2375
        %2578 = vmatprep.subr.mxu0 0.0
        %2579 = vmatpush2.msra.mxu0 %v2374
        %2580 = vmatprep.subr.mxu0 0.0
        %2581 = vmatpush2.msra.mxu0 %v2373
        %2582 = vmatprep.subr.mxu0 0.0
        %2583 = vmatpush2.msra.mxu0 %v2372
        %2584 = vmatprep.mubr.f32.mxu0 %v2448
        %2585 = vmatmul.mubr.f32.gmra.mxu0 %v2257
        %v2586 = vpop.f32.mrf.mxu0
        %v2587 = vadd.f32 0.0, %v2586
        %v2588 = vpop.f32.mrf.mxu0
        %2589 = vdwg.mxu0
        %v2590 = vmax.f32 %v2517, %v2587
        %v2591 = vmax.f32 %v2446, %v2590
        %v2592 = vld [vmem:[%s4] sm:$0x1]
        %v2594 = vlaneseq
        %v2595 = vshrl.u32 %v2594, 7
        %v2596 = vsub.s32 0, %v2595
        %v2597 = vrot.slane %v2592, %v2596
        %v2599 = vadd.f32 %v2591, %v2597
        %v2600 = vmax.f32 %v2599, 0.0
        %vm2601 = vcmask 650240
        %2602 = vst.msk [vmem:[#allocation3] sm:$0xf] %vm2601, %v2600
        %v2603 = vld [vmem:[#allocation3] sm:$0x1]
        %v2604 = vlaneseq
        %vm2605 = vcmp.ge.s32.totalorder %v2604, 0
        %vm2606 = vcmp.lt.s32.totalorder %v2604, 80
        %vm2607 = vmand %vm2605, %vm2606
        %2608 = vst.msk [vmem:[#allocation4] sm:$0x1] %vm2607, %v2603
        %v2609 = vld [vmem:[#allocation3 + $0x1] sm:$0x1]
        %v2612 = vunpack.c.l.s4 1966171168
        %v2613 = vunpack.c.0.s8 %v2612
        %v2614 = vlaneseq
        %v2615 = vshrl.u32 %v2614, 7
        %v2616 = vsub.s32 %v2613, %v2615
        %v2617 = vrot.slane %v2609, %v2616
        %v2619 = vunpack.c.l.s4 1966171168
        %v2620 = vunpack.c.0.s8 %v2619
        %v2621 = vlaneseq
        %v2622 = vshrl.u32 %v2621, 7
        %v2623 = vsub.s32 %v2620, %v2622
        %v2624 = vrot.slane %v2617, %v2623
        %2625 = vrot.lane.b32.xlu0 %v2624, 80
        %v2626 = vpop.permute.xlu0 %2625
        %v2627 = vrot.slane %v2626, 7
        %vm2628 = vcmask 654336
        %v2629 = vsel %vm2628, %v2627, %v2626
        %vm2631 = vcmp.ge.s32.totalorder %v2604, 80
        %vm2632 = vcmp.lt.s32.totalorder %v2604, 160
        %vm2633 = vmand %vm2631, %vm2632
        %2634 = vst.msk [vmem:[#allocation4] sm:$0x3] %vm2633, %v2629
        %v2635 = vld [vmem:[#allocation3 + $0x2] sm:$0x1]
        %v2638 = vunpack.c.l.s4 1966171168
        %v2639 = vunpack.c.0.s8 %v2638
        %v2640 = vlaneseq
        %v2641 = vshrl.u32 %v2640, 7
        %v2642 = vsub.s32 %v2639, %v2641
        %v2643 = vrot.slane %v2635, %v2642
        %v2645 = vunpack.c.l.s4 1966171168
        %v2646 = vunpack.c.0.s8 %v2645
        %v2647 = vlaneseq
        %v2648 = vshrl.u32 %v2647, 7
        %v2649 = vsub.s32 %v2646, %v2648
        %v2650 = vrot.slane %v2643, %v2649
        %2651 = vrot.lane.b32.xlu0 %v2650, 32
        %v2652 = vpop.permute.xlu0 %2651
        %vm2654 = vcmp.ge.s32.totalorder %v2604, 32
        %vm2655 = vcmp.lt.s32.totalorder %v2604, 112
        %vm2656 = vmand %vm2654, %vm2655
        %2657 = vst.msk [vmem:[#allocation4 + $0x1] sm:$0x1] %vm2656, %v2652
        %v2658 = vld [vmem:[#allocation3 + $0x3] sm:$0x1]
        %v2661 = vunpack.c.l.s4 1966171168
        %v2662 = vunpack.c.0.s8 %v2661
        %v2663 = vlaneseq
        %v2664 = vshrl.u32 %v2663, 7
        %v2665 = vsub.s32 %v2662, %v2664
        %v2666 = vrot.slane %v2658, %v2665
        %v2668 = vunpack.c.l.s4 1966171168
        %v2669 = vunpack.c.0.s8 %v2668
        %v2670 = vlaneseq
        %v2671 = vshrl.u32 %v2670, 7
        %v2672 = vsub.s32 %v2669, %v2671
        %v2673 = vrot.slane %v2666, %v2672
        %2674 = vrot.lane.b32.xlu0 %v2673, 112
        %v2675 = vpop.permute.xlu0 %2674
        %v2676 = vrot.slane %v2675, 7
        %v2677 = vsel %vm1209, %v2676, %v2675
        %vm2679 = vcmp.ge.s32.totalorder %v2604, 112
        %vm2680 = vcmp.lt.s32.totalorder %v2604, 192
        %vm2681 = vmand %vm2679, %vm2680
        %2682 = vst.msk [vmem:[#allocation4 + $0x1] sm:$0x3] %vm2681, %v2677
        %v2683 = vld [vmem:[#allocation4] sm:$0x7]
        %v2684 = vld [vmem:[%s9] sm:$0xff]
        %v2685 = vld [vmem:[%s9 + $0x8] sm:$0xff]
        %v2686 = vld [vmem:[%s9 + $0x10] sm:$0xff]
        %v2687 = vld [vmem:[%s9 + $0x18] sm:$0xff]
        %v2688 = vld [vmem:[%s9 + $0x20] sm:$0xff]
        %v2689 = vld [vmem:[%s9 + $0x28] sm:$0xff]
        %v2690 = vld [vmem:[%s9 + $0x30] sm:$0xff]
        %v2691 = vld [vmem:[%s9 + $0x38] sm:$0xff]
        %v2692 = vld [vmem:[%s9 + $0x40] sm:$0xff]
        %v2693 = vld [vmem:[%s9 + $0x48] sm:$0xff]
        %v2694 = vld [vmem:[%s9 + $0x50] sm:$0xff]
        %v2695 = vld [vmem:[%s9 + $0x58] sm:$0xff]
        %v2696 = vld [vmem:[%s9 + $0x60] sm:$0xff]
        %v2697 = vld [vmem:[%s9 + $0x68] sm:$0xff]
        %v2698 = vld [vmem:[%s9 + $0x70] sm:$0xff]
        %v2699 = vld [vmem:[%s9 + $0x78] sm:$0xff]
        %v2700 = vld [vmem:[%s9 + $0x80] sm:$0xff]
        %v2701 = vld [vmem:[%s9 + $0x88] sm:$0xff]
        %v2702 = vld [vmem:[%s9 + $0x90] sm:$0xff]
        %v2703 = vld [vmem:[%s9 + $0x98] sm:$0xff]
        %v2704 = vld [vmem:[%s9 + $0xa0] sm:$0xff]
        %v2705 = vld [vmem:[%s9 + $0xa8] sm:$0xff]
        %v2706 = vld [vmem:[%s9 + $0xb0] sm:$0xff]
        %v2707 = vld [vmem:[%s9 + $0xb8] sm:$0xff]
        %v2708 = vld [vmem:[%s9 + $0xc0] sm:$0xff]
        %v2709 = vld [vmem:[%s9 + $0xc8] sm:$0xff]
        %v2710 = vld [vmem:[%s9 + $0xd0] sm:$0xff]
        %v2711 = vld [vmem:[%s9 + $0xd8] sm:$0xff]
        %v2712 = vld [vmem:[%s9 + $0xe0] sm:$0xff]
        %v2713 = vld [vmem:[%s9 + $0xe8] sm:$0xff]
        %v2714 = vld [vmem:[%s9 + $0xf0] sm:$0xff]
        %v2715 = vld [vmem:[%s9 + $0xf8] sm:$0xff]
        %v2716 = vld [vmem:[%s9 + $0x100] sm:$0xff]
        %v2717 = vld [vmem:[%s9 + $0x108] sm:$0xff]
        %v2718 = vld [vmem:[%s9 + $0x110] sm:$0xff]
        %v2719 = vld [vmem:[%s9 + $0x118] sm:$0xff]
        %v2720 = vld [vmem:[%s9 + $0x120] sm:$0xff]
        %v2721 = vld [vmem:[%s9 + $0x128] sm:$0xff]
        %v2722 = vld [vmem:[%s9 + $0x130] sm:$0xff]
        %v2723 = vld [vmem:[%s9 + $0x138] sm:$0xff]
        %v2724 = vld [vmem:[%s10] sm:$0x1]
        %v2726 = vlaneseq
        %v2727 = vshrl.u32 %v2726, 7
        %v2728 = vsub.s32 0, %v2727
        %v2729 = vrot.slane %v2683, %v2728
        %v2730 = vlaneseq
        %v2731 = vshrl.u32 %v2730, 7
        %v2732 = vsub.s32 1, %v2731
        %v2733 = vrot.slane %v2683, %v2732
        %v2734 = vlaneseq
        %v2735 = vshrl.u32 %v2734, 7
        %v2736 = vsub.s32 2, %v2735
        %v2737 = vrot.slane %v2683, %v2736
        %vm2740 = vcmask 523264
        %v2741 = vsel %vm2740, %v2737, 0
        %2743 = vmatprep.subr.mxu0 0.0
        %2744 = vmatpush1.msra.mxu0 %v2699
        %2745 = vmatprep.subr.mxu0 0.0
        %2746 = vmatpush1.msra.mxu0 %v2698
        %2747 = vmatprep.subr.mxu0 0.0
        %2748 = vmatpush1.msra.mxu0 %v2697
        %2749 = vmatprep.subr.mxu0 0.0
        %2750 = vmatpush1.msra.mxu0 %v2696
        %2751 = vmatprep.subr.mxu0 0.0
        %2752 = vmatpush1.msra.mxu0 %v2695
        %2753 = vmatprep.subr.mxu0 0.0
        %2754 = vmatpush1.msra.mxu0 %v2694
        %2755 = vmatprep.subr.mxu0 0.0
        %2756 = vmatpush1.msra.mxu0 %v2693
        %2757 = vmatprep.subr.mxu0 0.0
        %2758 = vmatpush1.msra.mxu0 %v2692
        %2759 = vmatprep.subr.mxu0 0.0
        %2760 = vmatpush1.msra.mxu0 %v2691
        %2761 = vmatprep.subr.mxu0 0.0
        %2762 = vmatpush1.msra.mxu0 %v2690
        %2763 = vmatprep.subr.mxu0 0.0
        %2764 = vmatpush1.msra.mxu0 %v2689
        %2765 = vmatprep.subr.mxu0 0.0
        %2766 = vmatpush1.msra.mxu0 %v2688
        %2767 = vmatprep.subr.mxu0 0.0
        %2768 = vmatpush1.msra.mxu0 %v2687
        %2769 = vmatprep.subr.mxu0 0.0
        %2770 = vmatpush1.msra.mxu0 %v2686
        %2771 = vmatprep.subr.mxu0 0.0
        %2772 = vmatpush1.msra.mxu0 %v2685
        %2773 = vmatprep.subr.mxu0 0.0
        %2774 = vmatpush1.msra.mxu0 %v2684
        %2775 = vmatprep.subr.mxu0 0.0
        %2776 = vmatpush2.msra.mxu0 %v2715
        %2777 = vmatprep.subr.mxu0 0.0
        %2778 = vmatpush2.msra.mxu0 %v2714
        %2779 = vmatprep.subr.mxu0 0.0
        %2780 = vmatpush2.msra.mxu0 %v2713
        %2781 = vmatprep.subr.mxu0 0.0
        %2782 = vmatpush2.msra.mxu0 %v2712
        %2783 = vmatprep.subr.mxu0 0.0
        %2784 = vmatpush2.msra.mxu0 %v2711
        %2785 = vmatprep.subr.mxu0 0.0
        %2786 = vmatpush2.msra.mxu0 %v2710
        %2787 = vmatprep.subr.mxu0 0.0
        %2788 = vmatpush2.msra.mxu0 %v2709
        %2789 = vmatprep.subr.mxu0 0.0
        %2790 = vmatpush2.msra.mxu0 %v2708
        %2791 = vmatprep.subr.mxu0 0.0
        %2792 = vmatpush2.msra.mxu0 %v2707
        %2793 = vmatprep.subr.mxu0 0.0
        %2794 = vmatpush2.msra.mxu0 %v2706
        %2795 = vmatprep.subr.mxu0 0.0
        %2796 = vmatpush2.msra.mxu0 %v2705
        %2797 = vmatprep.subr.mxu0 0.0
        %2798 = vmatpush2.msra.mxu0 %v2704
        %2799 = vmatprep.subr.mxu0 0.0
        %2800 = vmatpush2.msra.mxu0 %v2703
        %2801 = vmatprep.subr.mxu0 0.0
        %2802 = vmatpush2.msra.mxu0 %v2702
        %2803 = vmatprep.subr.mxu0 0.0
        %2804 = vmatpush2.msra.mxu0 %v2701
        %2805 = vmatprep.subr.mxu0 0.0
        %2806 = vmatpush2.msra.mxu0 %v2700
        %2807 = vmatprep.mubr.f32.mxu0 %v2733
        %2808 = vmatmul.mubr.f32.gmra.mxu0 %v2729
        %v2809 = vpop.f32.mrf.mxu0
        %v2810 = vadd.f32 %v2724, %v2809
        %v2811 = vpop.f32.mrf.mxu0
        %2812 = vdwg.mxu0
        %2813 = vmatprep.subr.mxu0 0.0
        %2814 = vmatpush1.msra.mxu0 0.0
        %2815 = vmatprep.subr.mxu0 0.0
        %2816 = vmatpush1.msra.mxu0 0.0
        %2817 = vmatprep.subr.mxu0 0.0
        %2818 = vmatpush1.msra.mxu0 0.0
        %2819 = vmatprep.subr.mxu0 0.0
        %2820 = vmatpush1.msra.mxu0 0.0
        %2821 = vmatprep.subr.mxu0 0.0
        %2822 = vmatpush1.msra.mxu0 0.0
        %2823 = vmatprep.subr.mxu0 0.0
        %2824 = vmatpush1.msra.mxu0 0.0
        %2825 = vmatprep.subr.mxu0 0.0
        %2826 = vmatpush1.msra.mxu0 0.0
        %2827 = vmatprep.subr.mxu0 0.0
        %2828 = vmatpush1.msra.mxu0 0.0
        %2829 = vmatprep.subr.mxu0 0.0
        %2830 = vmatpush1.msra.mxu0 %v2723
        %2831 = vmatprep.subr.mxu0 0.0
        %2832 = vmatpush1.msra.mxu0 %v2722
        %2833 = vmatprep.subr.mxu0 0.0
        %2834 = vmatpush1.msra.mxu0 %v2721
        %2835 = vmatprep.subr.mxu0 0.0
        %2836 = vmatpush1.msra.mxu0 %v2720
        %2837 = vmatprep.subr.mxu0 0.0
        %2838 = vmatpush1.msra.mxu0 %v2719
        %2839 = vmatprep.subr.mxu0 0.0
        %2840 = vmatpush1.msra.mxu0 %v2718
        %2841 = vmatprep.subr.mxu0 0.0
        %2842 = vmatpush1.msra.mxu0 %v2717
        %2843 = vmatprep.subr.mxu0 0.0
        %2844 = vmatpush1.msra.mxu0 %v2716
        %2845 = vmatprep.subr.mxu0 0.0
        %2846 = vmatpush2.msra.mxu0 0.0
        %2847 = vmatprep.subr.mxu0 0.0
        %2848 = vmatpush2.msra.mxu0 0.0
        %2849 = vmatprep.subr.mxu0 0.0
        %2850 = vmatpush2.msra.mxu0 0.0
        %2851 = vmatprep.subr.mxu0 0.0
        %2852 = vmatpush2.msra.mxu0 0.0
        %2853 = vmatprep.subr.mxu0 0.0
        %2854 = vmatpush2.msra.mxu0 0.0
        %2855 = vmatprep.subr.mxu0 0.0
        %2856 = vmatpush2.msra.mxu0 0.0
        %2857 = vmatprep.subr.mxu0 0.0
        %2858 = vmatpush2.msra.mxu0 0.0
        %2859 = vmatprep.subr.mxu0 0.0
        %2860 = vmatpush2.msra.mxu0 0.0
        %2861 = vmatprep.subr.mxu0 0.0
        %2862 = vmatpush2.msra.mxu0 0.0
        %2863 = vmatprep.subr.mxu0 0.0
        %2864 = vmatpush2.msra.mxu0 0.0
        %2865 = vmatprep.subr.mxu0 0.0
        %2866 = vmatpush2.msra.mxu0 0.0
        %2867 = vmatprep.subr.mxu0 0.0
        %2868 = vmatpush2.msra.mxu0 0.0
        %2869 = vmatprep.subr.mxu0 0.0
        %2870 = vmatpush2.msra.mxu0 0.0
        %2871 = vmatprep.subr.mxu0 0.0
        %2872 = vmatpush2.msra.mxu0 0.0
        %2873 = vmatprep.subr.mxu0 0.0
        %2874 = vmatpush2.msra.mxu0 0.0
        %2875 = vmatprep.subr.mxu0 0.0
        %2876 = vmatpush2.msra.mxu0 0.0
        %2877 = vmatprep.mubr.f32.mxu0 0.0
        %2878 = vmatmul.mubr.f32.gmra.mxu0 %v2741
        %v2879 = vpop.f32.mrf.mxu0
        %v2880 = vadd.f32 %v2810, %v2879
        %v2881 = vpop.f32.mrf.mxu0
        %2882 = vdwg.mxu0
        %v2883 = vmax.f32 %v2880, 0.0
        %v2884 = vld [vmem:[%s11] sm:$0xff]
        %v2885 = vld [vmem:[%s11 + $0x8] sm:$0xff]
        %v2886 = vld [vmem:[%s11 + $0x10] sm:$0xff]
        %v2887 = vld [vmem:[%s11 + $0x18] sm:$0xff]
        %v2888 = vld [vmem:[%s11 + $0x20] sm:$0xff]
        %v2889 = vld [vmem:[%s11 + $0x28] sm:$0xff]
        %v2890 = vld [vmem:[%s11 + $0x30] sm:$0xff]
        %v2891 = vld [vmem:[%s11 + $0x38] sm:$0xff]
        %v2892 = vld [vmem:[%s11 + $0x40] sm:$0xff]
        %v2893 = vld [vmem:[%s11 + $0x48] sm:$0xff]
        %v2894 = vld [vmem:[%s11 + $0x50] sm:$0xff]
        %v2895 = vld [vmem:[%s11 + $0x58] sm:$0xff]
        %v2896 = vld [vmem:[%s11 + $0x60] sm:$0xff]
        %v2897 = vld [vmem:[%s11 + $0x68] sm:$0xff]
        %v2898 = vld [vmem:[%s11 + $0x70] sm:$0xff]
        %v2899 = vld [vmem:[%s11 + $0x78] sm:$0xff]
        %v2900 = vld [vmem:[%s12] sm:$0x1]
        %2901 = vmatprep.subr.mxu0 0.0
        %2902 = vmatpush1.msra.mxu0 %v2899
        %2903 = vmatprep.subr.mxu0 0.0
        %2904 = vmatpush1.msra.mxu0 %v2898
        %2905 = vmatprep.subr.mxu0 0.0
        %2906 = vmatpush1.msra.mxu0 %v2897
        %2907 = vmatprep.subr.mxu0 0.0
        %2908 = vmatpush1.msra.mxu0 %v2896
        %2909 = vmatprep.subr.mxu0 0.0
        %2910 = vmatpush1.msra.mxu0 %v2895
        %2911 = vmatprep.subr.mxu0 0.0
        %2912 = vmatpush1.msra.mxu0 %v2894
        %2913 = vmatprep.subr.mxu0 0.0
        %2914 = vmatpush1.msra.mxu0 %v2893
        %2915 = vmatprep.subr.mxu0 0.0
        %2916 = vmatpush1.msra.mxu0 %v2892
        %2917 = vmatprep.subr.mxu0 0.0
        %2918 = vmatpush1.msra.mxu0 %v2891
        %2919 = vmatprep.subr.mxu0 0.0
        %2920 = vmatpush1.msra.mxu0 %v2890
        %2921 = vmatprep.subr.mxu0 0.0
        %2922 = vmatpush1.msra.mxu0 %v2889
        %2923 = vmatprep.subr.mxu0 0.0
        %2924 = vmatpush1.msra.mxu0 %v2888
        %2925 = vmatprep.subr.mxu0 0.0
        %2926 = vmatpush1.msra.mxu0 %v2887
        %2927 = vmatprep.subr.mxu0 0.0
        %2928 = vmatpush1.msra.mxu0 %v2886
        %2929 = vmatprep.subr.mxu0 0.0
        %2930 = vmatpush1.msra.mxu0 %v2885
        %2931 = vmatprep.subr.mxu0 0.0
        %2932 = vmatpush1.msra.mxu0 %v2884
        %2933 = vmatprep.subr.mxu0 0.0
        %2934 = vmatpush2.msra.mxu0 0.0
        %2935 = vmatprep.subr.mxu0 0.0
        %2936 = vmatpush2.msra.mxu0 0.0
        %2937 = vmatprep.subr.mxu0 0.0
        %2938 = vmatpush2.msra.mxu0 0.0
        %2939 = vmatprep.subr.mxu0 0.0
        %2940 = vmatpush2.msra.mxu0 0.0
        %2941 = vmatprep.subr.mxu0 0.0
        %2942 = vmatpush2.msra.mxu0 0.0
        %2943 = vmatprep.subr.mxu0 0.0
        %2944 = vmatpush2.msra.mxu0 0.0
        %2945 = vmatprep.subr.mxu0 0.0
        %2946 = vmatpush2.msra.mxu0 0.0
        %2947 = vmatprep.subr.mxu0 0.0
        %2948 = vmatpush2.msra.mxu0 0.0
        %2949 = vmatprep.subr.mxu0 0.0
        %2950 = vmatpush2.msra.mxu0 0.0
        %2951 = vmatprep.subr.mxu0 0.0
        %2952 = vmatpush2.msra.mxu0 0.0
        %2953 = vmatprep.subr.mxu0 0.0
        %2954 = vmatpush2.msra.mxu0 0.0
        %2955 = vmatprep.subr.mxu0 0.0
        %2956 = vmatpush2.msra.mxu0 0.0
        %2957 = vmatprep.subr.mxu0 0.0
        %2958 = vmatpush2.msra.mxu0 0.0
        %2959 = vmatprep.subr.mxu0 0.0
        %2960 = vmatpush2.msra.mxu0 0.0
        %2961 = vmatprep.subr.mxu0 0.0
        %2962 = vmatpush2.msra.mxu0 0.0
        %2963 = vmatprep.subr.mxu0 0.0
        %2964 = vmatpush2.msra.mxu0 0.0
        %2965 = vmatprep.mubr.f32.mxu0 0.0
        %2966 = vmatmul.mubr.f32.gmra.mxu0 %v2883
        %v2967 = vpop.f32.mrf.mxu0
        %v2968 = vadd.f32 %v2900, %v2967
        %v2969 = vpop.f32.mrf.mxu0
        %2970 = vdwg.mxu0
        %vm2971 = vcmask 1040384
        %v2972 = vsel %vm2971, %v2968, -inf
        %2973 = vmax.xlane.f32.xlu0 %v2972
        %v2974 = vpop.xlane.xlu0 %2973
        %v2975 = vsub.f32 %v2968, %v2974
        %v2976 = vmul.f32 %v2975, 1.442695
        %v2977 = vpow.pop %v2976
        %v2978 = vsel %vm2971, %v2977, 0.0
        %2979 = vadd.xlane.f32.xlu0 %v2978
        %v2980 = vpop.xlane.xlu0 %2979
        %v2981 = vlog2.pop %v2980
        %v2982 = vmul.f32 %v2981, 0.6931472
        %v2983 = vsub.f32 %v2975, %v2982
        %2984 = vst [vmem:[%s432] sm:$0x1] %v2983
        %s2985 = sand.u32 %s313, 1
        %s2986 = scalar_lea.sflag [#allocation6], %s2985
        %s2987 = sand.u32 %s313, 1
        %s2988 = scalar_lea.vmem [#allocation5], %s2987
        // Predicated region
        $region73: #{convnet_forward.1} parent=71 // pred_check
          %p2989 = pneg %p323
        $region74: #{convnet_forward.1} parent=71 // pred_check_branch
          %2991 = sbr.rel (%p2989) target = $region76
        $region75: #{convnet_forward.1} parent=71 // pred_region
          %s2993 = ssub.s32 16, 16
          %2994 = vsyncadd %s2986, %s2993
          %s2995 = smul.addr %s27, 16
          %s2996 = scalar_lea.hbm %s13, %s2995
          %s2998 = sshll.u32 %s2988, 4
          %s2999 = int_to_ptr.vmem [resolvable:$true] %s2998
          %3001 = dma.vmem_to_hbm [thread:$0]  %s2999, 16, %s2996, %s2986
        $region76: #{convnet_forward.1} parent=71 // pred_fallthru
          _
      $region72: #{convnet_forward.1} parent=5 // pred_fallthru
        _
      %p3002 = scmp.le.s32.totalorder 2, %s22
      // Predicated region
      $region77: #{convnet_forward.1} parent=5 // pred_check
        %p3003 = pneg %p3002
      $region78: #{convnet_forward.1} parent=5 // pred_check_branch
        %3005 = sbr.rel (%p3003) target = $region80
      $region79: #{convnet_forward.1} parent=5 // pred_region
        %s3006 = ssub.s32 %s22, 2
        // Predicated region
        $region81: #{convnet_forward.1} parent=79 // pred_check
          %p3007 = pneg %p329
        $region82: #{convnet_forward.1} parent=79 // pred_check_branch
          %3009 = sbr.rel (%p3007) target = $region84
        $region83: #{convnet_forward.1} parent=79 // pred_region
          %s3010 = sand.u32 %s314, 1
          %s3011 = scalar_lea.sflag [#allocation6], %s3010
          %s3012 = sand.u32 %s314, 1
          %s3013 = scalar_lea.vmem [#allocation5], %s3012
          %3014 = dma.done %s3011, 16
        $region84: #{convnet_forward.1} parent=79 // pred_fallthru
          _
      $region80: #{convnet_forward.1} parent=5 // pred_fallthru
        _
    $region6: #{convnet_forward.1} parent=1 // loop_footer
      %s26 = sadd.s32 1, %s22
    $region7: #{convnet_forward.1} parent=1 // loop_footer_branch
      %21 = sbr.rel target = $region3
    $region8: #{convnet_forward.1} parent=1 // loop_exit
      _
    %3015 = vsyncpa [#allocation6], 1
    %s3016 = scalar_lea.sflag [#allocation6], 1
    %3017 = vsyncpa %s3016, 1

</llo_original>
